<compile_context>
chip_gen: v7x
topology: tpu7x:2x2x1
jax: 0.10.0
libtpu: 0.0.40
codegen_flags: <defaults>
</compile_context>

<pallas_src>
import functools

import jax
import jax.numpy as jnp
from jax import lax
from jax.experimental import pallas as pl
from jax.experimental.pallas import tpu as pltpu


# ---------------------------------------------------------------------------
# Pallas kernel: per-frequency complex channel mixing, batch on the lane axis.
#   out[o, f, b] = sum_i x[i, f, b] * w[i, f, o]      (complex)
# where w already includes the lam splitter blend of common/env weights.
# ---------------------------------------------------------------------------
def _spectral_mix_kernel(x_ref, w_ref, o_ref):
    # x_ref: (2, 1, Cin, RF, TB)   [re, im], TB % 128 == 0 (lane-dense)
    # w_ref: (2, 1, Cin, RF, Cout) [re, im], lam-blended per-env weights
    # o_ref: (2, 1, Cout, RF, TB)  [re, im]
    cin = x_ref.shape[2]
    rf = x_ref.shape[3]
    tb = x_ref.shape[4]
    cout = w_ref.shape[4]

    def body(i, acc):
        # Accumulating reduction over Cin -- no (TB, Cin, Cout, F) intermediate.
        xr = x_ref[0, 0, i]                      # (RF, TB)
        xi = x_ref[1, 0, i]                      # (RF, TB)
        new = []
        for o in range(cout):                    # Cout is small & static
            wr = w_ref[0, 0, i, :, o:o + 1]      # (RF, 1) -> lane-broadcast
            wi = w_ref[1, 0, i, :, o:o + 1]      # over the TB batch lanes
            new.append(acc[2 * o] + (xr * wr - xi * wi))
            new.append(acc[2 * o + 1] + (xr * wi + xi * wr))
        return tuple(new)

    init = tuple(jnp.zeros((rf, tb), jnp.float32) for _ in range(2 * cout))
    acc = lax.fori_loop(0, cin, body, init, unroll=True)

    for o in range(cout):
        # Full-lane, unmasked stores (TB is a multiple of 128).
        o_ref[0, 0, o] = acc[2 * o]
        o_ref[1, 0, o] = acc[2 * o + 1]


# ---------------------------------------------------------------------------
# Tile / VMEM sizing (per TPU generation).
# ---------------------------------------------------------------------------
def _round_up(x, m):
    return ((x + m - 1) // m) * m


def _vmem_budget_bytes():
    # ~25% headroom below physical VMEM for compiler-internal scratch and the
    # double buffers: ~48 MiB usable on v7x (64 MiB parts), ~96 MiB on
    # v5e/v6e (128 MiB parts).
    try:
        cap = int(pltpu.get_tpu_info().vmem_capacity_bytes)
    except Exception:  # unknown target / interpret mode -> conservative
        cap = 64 * 1024 * 1024
    return (cap * 3) // 4


def _choose_batch_tile(B, Cin, Cout, RF, budget):
    # Bytes per batch row: double-buffered x and o blocks plus live f32
    # accumulators (one extra o-sized plane).
    row_bytes = 4 * RF * (2 * 2 * Cin + 2 * 2 * Cout + 2 * Cout)
    tb = (budget // 2) // max(row_bytes, 1)
    # Also target ~2 MiB x blocks (tile-sweep data: >=85% of HBM roofline).
    tb = min(tb, (2 * 1024 * 1024) // max(4 * 2 * Cin * RF, 1))
    tb = max(128, (tb // 128) * 128)          # lane-dense stores need %128
    return min(tb, _round_up(B, 128))         # never bigger than padded batch


def _spectral_mix(x_pk, w_pk, *, batch_tile=None):
    """pallas_call wrapper.

    x_pk: (2, E, Cin, RF, B)    float32  (re/im packed, batch on the lane axis)
    w_pk: (2, E, Cin, RF, Cout) float32  (lam-blended per-env weights)
    returns (2, E, Cout, RF, B) float32
    """
    _, E, Cin, RF, B = x_pk.shape
    Cout = w_pk.shape[4]

    budget = _vmem_budget_bytes()
    tb = batch_tile if batch_tile is not None else _choose_batch_tile(
        B, Cin, Cout, RF, budget)
    nb = pl.cdiv(B, tb)
    Bp = nb * tb
    if Bp != B:
        x_pk = jnp.pad(x_pk, ((0, 0),) * 4 + ((0, Bp - B),))

    # Batch is the minor grid axis; the weight block index is constant across
    # it, so each env's weights are DMA'd once and stay VMEM-resident.
    x_spec = pl.BlockSpec((2, 1, Cin, RF, tb), lambda e, b: (0, e, 0, 0, b))
    w_spec = pl.BlockSpec((2, 1, Cin, RF, Cout), lambda e, b: (0, e, 0, 0, 0))
    o_spec = pl.BlockSpec((2, 1, Cout, RF, tb), lambda e, b: (0, e, 0, 0, b))

    out = pl.pallas_call(
        _spectral_mix_kernel,
        out_shape=jax.ShapeDtypeStruct((2, E, Cout, RF, Bp), jnp.float32),
        grid=(E, nb),
        in_specs=[x_spec, w_spec],
        out_specs=o_spec,
        compiler_params=pltpu.CompilerParams(
            # All output blocks are independent -> both axes parallel
            # (lets a multi-TensorCore chip shard over env and batch tiles).
            dimension_semantics=("parallel", "parallel"),
            vmem_limit_bytes=int(budget)),
    )(x_pk, w_pk)

    if Bp != B:
        out = out[..., :B]
    return out


# ---------------------------------------------------------------------------
# Host-side packing (plain JAX; per-env / per-region precompute, no batch dep
# for the weights).
# ---------------------------------------------------------------------------
def _hardsigmoid(x):
    # matches torch.nn.functional.hardsigmoid: clamp(x/6 + 0.5, 0, 1)
    return jnp.clip(x / 6.0 + 0.5, 0.0, 1.0)


def _blend_weights(com_w, code_w, codes, lam):
    """lam-blend of common / per-env weights (hoisted out of the kernel).

    com_w:  (Cin, Cout, m1, m2, 2)
    code_w: (code_ch*Cin, Cout, m1, m2, 2)
    codes:  (E, code_ch)
    lam:    (m1, m2)
    returns (2, E, Cin, Cout, m1, m2) float32  [re, im]
    """
    Cin, Cout, m1, m2, _ = com_w.shape
    code_ch = codes.shape[1]
    cw = code_w.reshape(code_ch, Cin, Cout, m1, m2, 2)
    env_w = jnp.einsum("ec,cioxyz->eioxyz", codes, cw)   # (E, Cin, Cout, m1, m2, 2)
    w_re = lam * com_w[None, ..., 0] + (1.0 - lam) * env_w[..., 0]
    w_im = lam * com_w[None, ..., 1] + (1.0 - lam) * env_w[..., 1]
    return jnp.stack([w_re, w_im], axis=0).astype(jnp.float32)


def _pack_weights(params, codes, lam1, lam2, m1, m2):
    """-> (2, E, Cin, RF, Cout) float32, RF = 2*m1*m2 (region folded into freq)."""
    w1 = _blend_weights(params["com_weights1"], params["code_weights1"], codes, lam1)
    w2 = _blend_weights(params["com_weights2"], params["code_weights2"], codes, lam2)
    w = jnp.stack([w1, w2], axis=4)                   # (2, E, Cin, Cout, R, m1, m2)
    P, E, Cin, Cout = w.shape[:4]
    w = w.reshape(P, E, Cin, Cout, 2 * m1 * m2)       # (2, E, Cin, Cout, RF)
    # Cout on the lane axis so the kernel can take (RF, 1) lane-slices per
    # output channel and broadcast over the batch lanes without any relayout.
    return jnp.swapaxes(w, 3, 4)                      # (2, E, Cin, RF, Cout)


def _pack_inputs(x_ft, H, m1, m2):
    """(B, E, Cin, H, Wf) complex64 -> (2, E, Cin, RF, B) float32, batch on lanes."""
    s1 = x_ft[:, :, :, :m1, :m2]
    s2 = x_ft[:, :, :, H - m1:, :m2]
    xs = jnp.stack([s1, s2], axis=3)                        # (B, E, Cin, R, m1, m2)
    B, E, Cin = xs.shape[:3]
    xs = xs.reshape(B, E, Cin, 2 * m1 * m2)                 # (B, E, Cin, RF)
    xs = jnp.stack([jnp.real(xs), jnp.imag(xs)], axis=0)    # (2, B, E, Cin, RF)
    return xs.astype(jnp.float32).transpose(0, 2, 3, 4, 1)  # (2, E, Cin, RF, B)


# ---------------------------------------------------------------------------
# Full forward pass (FFT glue in plain JAX, channel mixing in Pallas).
# ---------------------------------------------------------------------------
def group_spectral_conv2d(x, codes, params, *, n_env, modes1, modes2):
    BE, Cin, H, W = x.shape
    B = BE // n_env
    Wf = W // 2 + 1
    Cout = params["com_weights1"].shape[1]

    x_ft = jnp.fft.rfft2(x)                             # (BE, Cin, H, Wf) c64
    x_ft = x_ft.reshape(B, n_env, Cin, H, Wf)

    # Splitter lambdas: the original module uses filter_weights1 for BOTH
    # regions (filter_weights2 is unused) -- mirrored intentionally.
    lam1 = _hardsigmoid(params["filter_weights1"])
    lam2 = _hardsigmoid(params["filter_weights1"])

    w_pk = _pack_weights(params, codes, lam1, lam2, modes1, modes2)
    x_pk = _pack_inputs(x_ft, H, modes1, modes2)

    o_pk = _spectral_mix(x_pk, w_pk)                    # (2, E, Cout, RF, B)

    o_c = o_pk[0] + 1j * o_pk[1]                        # (E, Cout, RF, B) c64
    o_c = o_c.reshape(n_env, Cout, 2, modes1, modes2, B)
    o_c = jnp.transpose(o_c, (2, 5, 0, 1, 3, 4))        # (R, B, E, Cout, m1, m2)

    out_ft = jnp.zeros((B, n_env, Cout, H, Wf), dtype=jnp.complex64)
    out_ft = out_ft.at[:, :, :, :modes1, :modes2].set(o_c[0])
    out_ft = out_ft.at[:, :, :, H - modes1:, :modes2].set(o_c[1])
    out_ft = out_ft.reshape(BE, Cout, H, Wf)

    return jnp.fft.irfft2(out_ft, s=(H, W))             # (BE, Cout, H, W) f32


# ---------------------------------------------------------------------------
# Pure-JAX reference (mirrors the PyTorch forward) for correctness check.
# ---------------------------------------------------------------------------
def reference_forward(x, codes, params, *, n_env, modes1, modes2):
    BE, Cin, H, W = x.shape
    B = BE // n_env
    Wf = W // 2 + 1
    Cout = params["com_weights1"].shape[1]
    code_ch = codes.shape[1]

    x_ft = jnp.fft.rfft2(x).reshape(B, n_env, Cin, H, Wf)
    lam1 = _hardsigmoid(params["filter_weights1"])
    lam2 = _hardsigmoid(params["filter_weights1"])

    def as_c(w):
        return w[..., 0] + 1j * w[..., 1]

    def env_weights(code_w):
        cw = code_w.reshape(code_ch, Cin, Cout, modes1, modes2, 2)
        return jnp.einsum("ec,cioxyz->eioxyz", codes, cw)

    def compl_mul(inp, com_w, env_w, lam):
        return (lam * jnp.einsum("beixy,ioxy->beoxy", inp, as_c(com_w))
                + (1.0 - lam) * jnp.einsum("beixy,eioxy->beoxy", inp, as_c(env_w)))

    out_ft = jnp.zeros((B, n_env, Cout, H, Wf), dtype=jnp.complex64)
    out_ft = out_ft.at[:, :, :, :modes1, :modes2].set(
        compl_mul(x_ft[:, :, :, :modes1, :modes2],
                  params["com_weights1"], env_weights(params["code_weights1"]), lam1))
    out_ft = out_ft.at[:, :, :, H - modes1:, :modes2].set(
        compl_mul(x_ft[:, :, :, H - modes1:, :modes2],
                  params["com_weights2"], env_weights(params["code_weights2"]), lam2))
    out_ft = out_ft.reshape(BE, Cout, H, Wf)
    return jnp.fft.irfft2(out_ft, s=(H, W))


# ---------------------------------------------------------------------------
if __name__ == "__main__":
    # small, deterministic config
    in_channels = 4
    out_channels = 4
    code_channels = 3
    n_env = 2
    modes1 = 4
    modes2 = 4
    batchsize = 2           # per-env batch
    H = W = 16

    key = jax.random.PRNGKey(0)
    k_x, k_codes, k_cw1, k_cw2, k_code1, k_code2 = jax.random.split(key, 6)

    scale = 1.0 / (in_channels * out_channels)
    params = {
        "com_weights1": scale * jax.random.uniform(
            k_cw1, (in_channels, out_channels, modes1, modes2, 2), jnp.float32),
        "com_weights2": scale * jax.random.uniform(
            k_cw2, (in_channels, out_channels, modes1, modes2, 2), jnp.float32),
        "code_weights1": scale * jax.random.uniform(
            k_code1, (code_channels * in_channels, out_channels, modes1, modes2, 2),
            jnp.float32),
        "code_weights2": scale * jax.random.uniform(
            k_code2, (code_channels * in_channels, out_channels, modes1, modes2, 2),
            jnp.float32),
        "filter_weights1": -3.0 * jnp.ones((modes1, modes2), jnp.float32),
        "filter_weights2": -3.0 * jnp.ones((modes1, modes2), jnp.float32),  # unused (as in the module)
    }

    x = jax.random.normal(k_x, (batchsize * n_env, in_channels, H, W), jnp.float32)
    codes = jax.random.normal(k_codes, (n_env, code_channels), jnp.float32)

    fwd = jax.jit(functools.partial(
        group_spectral_conv2d, n_env=n_env, modes1=modes1, modes2=modes2))
    y = fwd(x, codes, params)
    jax.block_until_ready(y)

    y_ref = reference_forward(x, codes, params,
                              n_env=n_env, modes1=modes1, modes2=modes2)
    assert y.shape == (batchsize * n_env, out_channels, H, W)
    assert jnp.allclose(y, y_ref, atol=1e-4, rtol=1e-4), "mismatch vs reference"

    print("KERNEL_OK")
</pallas_src>

<mosaic_0001>
module attributes {stable_mosaic.version = 11 : i64} {
  func.func @_spectral_mix_kernel(%arg0: i32, %arg1: i32, %arg2: memref<2x1x4x32x128xf32, #tpu.memory_space<vmem>>, %arg3: memref<2x1x4x32x4xf32, #tpu.memory_space<vmem>>, %arg4: memref<2x1x4x32x128xf32, #tpu.memory_space<vmem>>) attributes {dimension_semantics = [#tpu.dimension_semantics<parallel>, #tpu.dimension_semantics<parallel>], iteration_bounds = array<i64: 2, 1>, scalar_prefetch = 0 : i64, scratch_operands = 0 : i64, tpu.core_type = #tpu.core_type<tc>, window_params = [{transform_indices = @transform_0, window_bounds = array<i64: 2, 1, 4, 32, 128>}, {transform_indices = @transform_1, window_bounds = array<i64: 2, 1, 4, 32, 4>}, {transform_indices = @transform_2, window_bounds = array<i64: 2, 1, 4, 32, 128>}]} {
    %cst = arith.constant 0.000000e+00 : f32
    %0 = vector.broadcast %cst : f32 to vector<32x128xf32>
    %cst_0 = arith.constant 0.000000e+00 : f32
    %1 = vector.broadcast %cst_0 : f32 to vector<32x128xf32>
    %cst_1 = arith.constant 0.000000e+00 : f32
    %2 = vector.broadcast %cst_1 : f32 to vector<32x128xf32>
    %cst_2 = arith.constant 0.000000e+00 : f32
    %3 = vector.broadcast %cst_2 : f32 to vector<32x128xf32>
    %cst_3 = arith.constant 0.000000e+00 : f32
    %4 = vector.broadcast %cst_3 : f32 to vector<32x128xf32>
    %cst_4 = arith.constant 0.000000e+00 : f32
    %5 = vector.broadcast %cst_4 : f32 to vector<32x128xf32>
    %cst_5 = arith.constant 0.000000e+00 : f32
    %6 = vector.broadcast %cst_5 : f32 to vector<32x128xf32>
    %cst_6 = arith.constant 0.000000e+00 : f32
    %7 = vector.broadcast %cst_6 : f32 to vector<32x128xf32>
    %c0_i32 = arith.constant 0 : i32
    %c0 = arith.constant 0 : index
    %c0_7 = arith.constant 0 : index
    %8 = arith.index_cast %c0_i32 : i32 to index
    %c0_8 = arith.constant 0 : index
    %c0_9 = arith.constant 0 : index
    %9 = vector.load %arg2[%c0, %c0_7, %8, %c0_8, %c0_9] : memref<2x1x4x32x128xf32, #tpu.memory_space<vmem>>, vector<1x1x1x32x128xf32>
    %10 = vector.shape_cast %9 : vector<1x1x1x32x128xf32> to vector<32x128xf32>
    %c1 = arith.constant 1 : index
    %c0_10 = arith.constant 0 : index
    %11 = arith.index_cast %c0_i32 : i32 to index
    %c0_11 = arith.constant 0 : index
    %c0_12 = arith.constant 0 : index
    %12 = vector.load %arg2[%c1, %c0_10, %11, %c0_11, %c0_12] : memref<2x1x4x32x128xf32, #tpu.memory_space<vmem>>, vector<1x1x1x32x128xf32>
    %13 = vector.shape_cast %12 : vector<1x1x1x32x128xf32> to vector<32x128xf32>
    %c0_13 = arith.constant 0 : index
    %c0_14 = arith.constant 0 : index
    %14 = arith.index_cast %c0_i32 : i32 to index
    %c0_15 = arith.constant 0 : index
    %c0_16 = arith.constant 0 : index
    %15 = vector.load %arg3[%c0_13, %c0_14, %14, %c0_15, %c0_16] : memref<2x1x4x32x4xf32, #tpu.memory_space<vmem>>, vector<1x1x1x32x1xf32>
    %16 = vector.shape_cast %15 : vector<1x1x1x32x1xf32> to vector<32x1xf32>
    %c1_17 = arith.constant 1 : index
    %c0_18 = arith.constant 0 : index
    %17 = arith.index_cast %c0_i32 : i32 to index
    %c0_19 = arith.constant 0 : index
    %c0_20 = arith.constant 0 : index
    %18 = vector.load %arg3[%c1_17, %c0_18, %17, %c0_19, %c0_20] : memref<2x1x4x32x4xf32, #tpu.memory_space<vmem>>, vector<1x1x1x32x1xf32>
    %19 = vector.shape_cast %18 : vector<1x1x1x32x1xf32> to vector<32x1xf32>
    %20 = vector.broadcast %16 : vector<32x1xf32> to vector<32x128xf32>
    %21 = arith.mulf %10, %20 : vector<32x128xf32>
    %22 = vector.broadcast %19 : vector<32x1xf32> to vector<32x128xf32>
    %23 = arith.mulf %13, %22 : vector<32x128xf32>
    %24 = arith.subf %21, %23 : vector<32x128xf32>
    %25 = arith.addf %0, %24 : vector<32x128xf32>
    %26 = vector.broadcast %19 : vector<32x1xf32> to vector<32x128xf32>
    %27 = arith.mulf %10, %26 : vector<32x128xf32>
    %28 = vector.broadcast %16 : vector<32x1xf32> to vector<32x128xf32>
    %29 = arith.mulf %13, %28 : vector<32x128xf32>
    %30 = arith.addf %27, %29 : vector<32x128xf32>
    %31 = arith.addf %1, %30 : vector<32x128xf32>
    %c0_21 = arith.constant 0 : index
    %c0_22 = arith.constant 0 : index
    %32 = arith.index_cast %c0_i32 : i32 to index
    %c0_23 = arith.constant 0 : index
    %c1_24 = arith.constant 1 : index
    %33 = vector.load %arg3[%c0_21, %c0_22, %32, %c0_23, %c1_24] : memref<2x1x4x32x4xf32, #tpu.memory_space<vmem>>, vector<1x1x1x32x1xf32>
    %34 = vector.shape_cast %33 : vector<1x1x1x32x1xf32> to vector<32x1xf32>
    %c1_25 = arith.constant 1 : index
    %c0_26 = arith.constant 0 : index
    %35 = arith.index_cast %c0_i32 : i32 to index
    %c0_27 = arith.constant 0 : index
    %c1_28 = arith.constant 1 : index
    %36 = vector.load %arg3[%c1_25, %c0_26, %35, %c0_27, %c1_28] : memref<2x1x4x32x4xf32, #tpu.memory_space<vmem>>, vector<1x1x1x32x1xf32>
    %37 = vector.shape_cast %36 : vector<1x1x1x32x1xf32> to vector<32x1xf32>
    %38 = vector.broadcast %34 : vector<32x1xf32> to vector<32x128xf32>
    %39 = arith.mulf %10, %38 : vector<32x128xf32>
    %40 = vector.broadcast %37 : vector<32x1xf32> to vector<32x128xf32>
    %41 = arith.mulf %13, %40 : vector<32x128xf32>
    %42 = arith.subf %39, %41 : vector<32x128xf32>
    %43 = arith.addf %2, %42 : vector<32x128xf32>
    %44 = vector.broadcast %37 : vector<32x1xf32> to vector<32x128xf32>
    %45 = arith.mulf %10, %44 : vector<32x128xf32>
    %46 = vector.broadcast %34 : vector<32x1xf32> to vector<32x128xf32>
    %47 = arith.mulf %13, %46 : vector<32x128xf32>
    %48 = arith.addf %45, %47 : vector<32x128xf32>
    %49 = arith.addf %3, %48 : vector<32x128xf32>
    %c0_29 = arith.constant 0 : index
    %c0_30 = arith.constant 0 : index
    %50 = arith.index_cast %c0_i32 : i32 to index
    %c0_31 = arith.constant 0 : index
    %c2 = arith.constant 2 : index
    %51 = vector.load %arg3[%c0_29, %c0_30, %50, %c0_31, %c2] : memref<2x1x4x32x4xf32, #tpu.memory_space<vmem>>, vector<1x1x1x32x1xf32>
    %52 = vector.shape_cast %51 : vector<1x1x1x32x1xf32> to vector<32x1xf32>
    %c1_32 = arith.constant 1 : index
    %c0_33 = arith.constant 0 : index
    %53 = arith.index_cast %c0_i32 : i32 to index
    %c0_34 = arith.constant 0 : index
    %c2_35 = arith.constant 2 : index
    %54 = vector.load %arg3[%c1_32, %c0_33, %53, %c0_34, %c2_35] : memref<2x1x4x32x4xf32, #tpu.memory_space<vmem>>, vector<1x1x1x32x1xf32>
    %55 = vector.shape_cast %54 : vector<1x1x1x32x1xf32> to vector<32x1xf32>
    %56 = vector.broadcast %52 : vector<32x1xf32> to vector<32x128xf32>
    %57 = arith.mulf %10, %56 : vector<32x128xf32>
    %58 = vector.broadcast %55 : vector<32x1xf32> to vector<32x128xf32>
    %59 = arith.mulf %13, %58 : vector<32x128xf32>
    %60 = arith.subf %57, %59 : vector<32x128xf32>
    %61 = arith.addf %4, %60 : vector<32x128xf32>
    %62 = vector.broadcast %55 : vector<32x1xf32> to vector<32x128xf32>
    %63 = arith.mulf %10, %62 : vector<32x128xf32>
    %64 = vector.broadcast %52 : vector<32x1xf32> to vector<32x128xf32>
    %65 = arith.mulf %13, %64 : vector<32x128xf32>
    %66 = arith.addf %63, %65 : vector<32x128xf32>
    %67 = arith.addf %5, %66 : vector<32x128xf32>
    %c0_36 = arith.constant 0 : index
    %c0_37 = arith.constant 0 : index
    %68 = arith.index_cast %c0_i32 : i32 to index
    %c0_38 = arith.constant 0 : index
    %c3 = arith.constant 3 : index
    %69 = vector.load %arg3[%c0_36, %c0_37, %68, %c0_38, %c3] : memref<2x1x4x32x4xf32, #tpu.memory_space<vmem>>, vector<1x1x1x32x1xf32>
    %70 = vector.shape_cast %69 : vector<1x1x1x32x1xf32> to vector<32x1xf32>
    %c1_39 = arith.constant 1 : index
    %c0_40 = arith.constant 0 : index
    %71 = arith.index_cast %c0_i32 : i32 to index
    %c0_41 = arith.constant 0 : index
    %c3_42 = arith.constant 3 : index
    %72 = vector.load %arg3[%c1_39, %c0_40, %71, %c0_41, %c3_42] : memref<2x1x4x32x4xf32, #tpu.memory_space<vmem>>, vector<1x1x1x32x1xf32>
    %73 = vector.shape_cast %72 : vector<1x1x1x32x1xf32> to vector<32x1xf32>
    %74 = vector.broadcast %70 : vector<32x1xf32> to vector<32x128xf32>
    %75 = arith.mulf %10, %74 : vector<32x128xf32>
    %76 = vector.broadcast %73 : vector<32x1xf32> to vector<32x128xf32>
    %77 = arith.mulf %13, %76 : vector<32x128xf32>
    %78 = arith.subf %75, %77 : vector<32x128xf32>
    %79 = arith.addf %6, %78 : vector<32x128xf32>
    %80 = vector.broadcast %73 : vector<32x1xf32> to vector<32x128xf32>
    %81 = arith.mulf %10, %80 : vector<32x128xf32>
    %82 = vector.broadcast %70 : vector<32x1xf32> to vector<32x128xf32>
    %83 = arith.mulf %13, %82 : vector<32x128xf32>
    %84 = arith.addf %81, %83 : vector<32x128xf32>
    %85 = arith.addf %7, %84 : vector<32x128xf32>
    %c1_i32 = arith.constant 1 : i32
    %c0_43 = arith.constant 0 : index
    %c0_44 = arith.constant 0 : index
    %86 = arith.index_cast %c1_i32 : i32 to index
    %c0_45 = arith.constant 0 : index
    %c0_46 = arith.constant 0 : index
    %87 = vector.load %arg2[%c0_43, %c0_44, %86, %c0_45, %c0_46] : memref<2x1x4x32x128xf32, #tpu.memory_space<vmem>>, vector<1x1x1x32x128xf32>
    %88 = vector.shape_cast %87 : vector<1x1x1x32x128xf32> to vector<32x128xf32>
    %c1_47 = arith.constant 1 : index
    %c0_48 = arith.constant 0 : index
    %89 = arith.index_cast %c1_i32 : i32 to index
    %c0_49 = arith.constant 0 : index
    %c0_50 = arith.constant 0 : index
    %90 = vector.load %arg2[%c1_47, %c0_48, %89, %c0_49, %c0_50] : memref<2x1x4x32x128xf32, #tpu.memory_space<vmem>>, vector<1x1x1x32x128xf32>
    %91 = vector.shape_cast %90 : vector<1x1x1x32x128xf32> to vector<32x128xf32>
    %c0_51 = arith.constant 0 : index
    %c0_52 = arith.constant 0 : index
    %92 = arith.index_cast %c1_i32 : i32 to index
    %c0_53 = arith.constant 0 : index
    %c0_54 = arith.constant 0 : index
    %93 = vector.load %arg3[%c0_51, %c0_52, %92, %c0_53, %c0_54] : memref<2x1x4x32x4xf32, #tpu.memory_space<vmem>>, vector<1x1x1x32x1xf32>
    %94 = vector.shape_cast %93 : vector<1x1x1x32x1xf32> to vector<32x1xf32>
    %c1_55 = arith.constant 1 : index
    %c0_56 = arith.constant 0 : index
    %95 = arith.index_cast %c1_i32 : i32 to index
    %c0_57 = arith.constant 0 : index
    %c0_58 = arith.constant 0 : index
    %96 = vector.load %arg3[%c1_55, %c0_56, %95, %c0_57, %c0_58] : memref<2x1x4x32x4xf32, #tpu.memory_space<vmem>>, vector<1x1x1x32x1xf32>
    %97 = vector.shape_cast %96 : vector<1x1x1x32x1xf32> to vector<32x1xf32>
    %98 = vector.broadcast %94 : vector<32x1xf32> to vector<32x128xf32>
    %99 = arith.mulf %88, %98 : vector<32x128xf32>
    %100 = vector.broadcast %97 : vector<32x1xf32> to vector<32x128xf32>
    %101 = arith.mulf %91, %100 : vector<32x128xf32>
    %102 = arith.subf %99, %101 : vector<32x128xf32>
    %103 = arith.addf %25, %102 : vector<32x128xf32>
    %104 = vector.broadcast %97 : vector<32x1xf32> to vector<32x128xf32>
    %105 = arith.mulf %88, %104 : vector<32x128xf32>
    %106 = vector.broadcast %94 : vector<32x1xf32> to vector<32x128xf32>
    %107 = arith.mulf %91, %106 : vector<32x128xf32>
    %108 = arith.addf %105, %107 : vector<32x128xf32>
    %109 = arith.addf %31, %108 : vector<32x128xf32>
    %c0_59 = arith.constant 0 : index
    %c0_60 = arith.constant 0 : index
    %110 = arith.index_cast %c1_i32 : i32 to index
    %c0_61 = arith.constant 0 : index
    %c1_62 = arith.constant 1 : index
    %111 = vector.load %arg3[%c0_59, %c0_60, %110, %c0_61, %c1_62] : memref<2x1x4x32x4xf32, #tpu.memory_space<vmem>>, vector<1x1x1x32x1xf32>
    %112 = vector.shape_cast %111 : vector<1x1x1x32x1xf32> to vector<32x1xf32>
    %c1_63 = arith.constant 1 : index
    %c0_64 = arith.constant 0 : index
    %113 = arith.index_cast %c1_i32 : i32 to index
    %c0_65 = arith.constant 0 : index
    %c1_66 = arith.constant 1 : index
    %114 = vector.load %arg3[%c1_63, %c0_64, %113, %c0_65, %c1_66] : memref<2x1x4x32x4xf32, #tpu.memory_space<vmem>>, vector<1x1x1x32x1xf32>
    %115 = vector.shape_cast %114 : vector<1x1x1x32x1xf32> to vector<32x1xf32>
    %116 = vector.broadcast %112 : vector<32x1xf32> to vector<32x128xf32>
    %117 = arith.mulf %88, %116 : vector<32x128xf32>
    %118 = vector.broadcast %115 : vector<32x1xf32> to vector<32x128xf32>
    %119 = arith.mulf %91, %118 : vector<32x128xf32>
    %120 = arith.subf %117, %119 : vector<32x128xf32>
    %121 = arith.addf %43, %120 : vector<32x128xf32>
    %122 = vector.broadcast %115 : vector<32x1xf32> to vector<32x128xf32>
    %123 = arith.mulf %88, %122 : vector<32x128xf32>
    %124 = vector.broadcast %112 : vector<32x1xf32> to vector<32x128xf32>
    %125 = arith.mulf %91, %124 : vector<32x128xf32>
    %126 = arith.addf %123, %125 : vector<32x128xf32>
    %127 = arith.addf %49, %126 : vector<32x128xf32>
    %c0_67 = arith.constant 0 : index
    %c0_68 = arith.constant 0 : index
    %128 = arith.index_cast %c1_i32 : i32 to index
    %c0_69 = arith.constant 0 : index
    %c2_70 = arith.constant 2 : index
    %129 = vector.load %arg3[%c0_67, %c0_68, %128, %c0_69, %c2_70] : memref<2x1x4x32x4xf32, #tpu.memory_space<vmem>>, vector<1x1x1x32x1xf32>
    %130 = vector.shape_cast %129 : vector<1x1x1x32x1xf32> to vector<32x1xf32>
    %c1_71 = arith.constant 1 : index
    %c0_72 = arith.constant 0 : index
    %131 = arith.index_cast %c1_i32 : i32 to index
    %c0_73 = arith.constant 0 : index
    %c2_74 = arith.constant 2 : index
    %132 = vector.load %arg3[%c1_71, %c0_72, %131, %c0_73, %c2_74] : memref<2x1x4x32x4xf32, #tpu.memory_space<vmem>>, vector<1x1x1x32x1xf32>
    %133 = vector.shape_cast %132 : vector<1x1x1x32x1xf32> to vector<32x1xf32>
    %134 = vector.broadcast %130 : vector<32x1xf32> to vector<32x128xf32>
    %135 = arith.mulf %88, %134 : vector<32x128xf32>
    %136 = vector.broadcast %133 : vector<32x1xf32> to vector<32x128xf32>
    %137 = arith.mulf %91, %136 : vector<32x128xf32>
    %138 = arith.subf %135, %137 : vector<32x128xf32>
    %139 = arith.addf %61, %138 : vector<32x128xf32>
    %140 = vector.broadcast %133 : vector<32x1xf32> to vector<32x128xf32>
    %141 = arith.mulf %88, %140 : vector<32x128xf32>
    %142 = vector.broadcast %130 : vector<32x1xf32> to vector<32x128xf32>
    %143 = arith.mulf %91, %142 : vector<32x128xf32>
    %144 = arith.addf %141, %143 : vector<32x128xf32>
    %145 = arith.addf %67, %144 : vector<32x128xf32>
    %c0_75 = arith.constant 0 : index
    %c0_76 = arith.constant 0 : index
    %146 = arith.index_cast %c1_i32 : i32 to index
    %c0_77 = arith.constant 0 : index
    %c3_78 = arith.constant 3 : index
    %147 = vector.load %arg3[%c0_75, %c0_76, %146, %c0_77, %c3_78] : memref<2x1x4x32x4xf32, #tpu.memory_space<vmem>>, vector<1x1x1x32x1xf32>
    %148 = vector.shape_cast %147 : vector<1x1x1x32x1xf32> to vector<32x1xf32>
    %c1_79 = arith.constant 1 : index
    %c0_80 = arith.constant 0 : index
    %149 = arith.index_cast %c1_i32 : i32 to index
    %c0_81 = arith.constant 0 : index
    %c3_82 = arith.constant 3 : index
    %150 = vector.load %arg3[%c1_79, %c0_80, %149, %c0_81, %c3_82] : memref<2x1x4x32x4xf32, #tpu.memory_space<vmem>>, vector<1x1x1x32x1xf32>
    %151 = vector.shape_cast %150 : vector<1x1x1x32x1xf32> to vector<32x1xf32>
    %152 = vector.broadcast %148 : vector<32x1xf32> to vector<32x128xf32>
    %153 = arith.mulf %88, %152 : vector<32x128xf32>
    %154 = vector.broadcast %151 : vector<32x1xf32> to vector<32x128xf32>
    %155 = arith.mulf %91, %154 : vector<32x128xf32>
    %156 = arith.subf %153, %155 : vector<32x128xf32>
    %157 = arith.addf %79, %156 : vector<32x128xf32>
    %158 = vector.broadcast %151 : vector<32x1xf32> to vector<32x128xf32>
    %159 = arith.mulf %88, %158 : vector<32x128xf32>
    %160 = vector.broadcast %148 : vector<32x1xf32> to vector<32x128xf32>
    %161 = arith.mulf %91, %160 : vector<32x128xf32>
    %162 = arith.addf %159, %161 : vector<32x128xf32>
    %163 = arith.addf %85, %162 : vector<32x128xf32>
    %c2_i32 = arith.constant 2 : i32
    %c0_83 = arith.constant 0 : index
    %c0_84 = arith.constant 0 : index
    %164 = arith.index_cast %c2_i32 : i32 to index
    %c0_85 = arith.constant 0 : index
    %c0_86 = arith.constant 0 : index
    %165 = vector.load %arg2[%c0_83, %c0_84, %164, %c0_85, %c0_86] : memref<2x1x4x32x128xf32, #tpu.memory_space<vmem>>, vector<1x1x1x32x128xf32>
    %166 = vector.shape_cast %165 : vector<1x1x1x32x128xf32> to vector<32x128xf32>
    %c1_87 = arith.constant 1 : index
    %c0_88 = arith.constant 0 : index
    %167 = arith.index_cast %c2_i32 : i32 to index
    %c0_89 = arith.constant 0 : index
    %c0_90 = arith.constant 0 : index
    %168 = vector.load %arg2[%c1_87, %c0_88, %167, %c0_89, %c0_90] : memref<2x1x4x32x128xf32, #tpu.memory_space<vmem>>, vector<1x1x1x32x128xf32>
    %169 = vector.shape_cast %168 : vector<1x1x1x32x128xf32> to vector<32x128xf32>
    %c0_91 = arith.constant 0 : index
    %c0_92 = arith.constant 0 : index
    %170 = arith.index_cast %c2_i32 : i32 to index
    %c0_93 = arith.constant 0 : index
    %c0_94 = arith.constant 0 : index
    %171 = vector.load %arg3[%c0_91, %c0_92, %170, %c0_93, %c0_94] : memref<2x1x4x32x4xf32, #tpu.memory_space<vmem>>, vector<1x1x1x32x1xf32>
    %172 = vector.shape_cast %171 : vector<1x1x1x32x1xf32> to vector<32x1xf32>
    %c1_95 = arith.constant 1 : index
    %c0_96 = arith.constant 0 : index
    %173 = arith.index_cast %c2_i32 : i32 to index
    %c0_97 = arith.constant 0 : index
    %c0_98 = arith.constant 0 : index
    %174 = vector.load %arg3[%c1_95, %c0_96, %173, %c0_97, %c0_98] : memref<2x1x4x32x4xf32, #tpu.memory_space<vmem>>, vector<1x1x1x32x1xf32>
    %175 = vector.shape_cast %174 : vector<1x1x1x32x1xf32> to vector<32x1xf32>
    %176 = vector.broadcast %172 : vector<32x1xf32> to vector<32x128xf32>
    %177 = arith.mulf %166, %176 : vector<32x128xf32>
    %178 = vector.broadcast %175 : vector<32x1xf32> to vector<32x128xf32>
    %179 = arith.mulf %169, %178 : vector<32x128xf32>
    %180 = arith.subf %177, %179 : vector<32x128xf32>
    %181 = arith.addf %103, %180 : vector<32x128xf32>
    %182 = vector.broadcast %175 : vector<32x1xf32> to vector<32x128xf32>
    %183 = arith.mulf %166, %182 : vector<32x128xf32>
    %184 = vector.broadcast %172 : vector<32x1xf32> to vector<32x128xf32>
    %185 = arith.mulf %169, %184 : vector<32x128xf32>
    %186 = arith.addf %183, %185 : vector<32x128xf32>
    %187 = arith.addf %109, %186 : vector<32x128xf32>
    %c0_99 = arith.constant 0 : index
    %c0_100 = arith.constant 0 : index
    %188 = arith.index_cast %c2_i32 : i32 to index
    %c0_101 = arith.constant 0 : index
    %c1_102 = arith.constant 1 : index
    %189 = vector.load %arg3[%c0_99, %c0_100, %188, %c0_101, %c1_102] : memref<2x1x4x32x4xf32, #tpu.memory_space<vmem>>, vector<1x1x1x32x1xf32>
    %190 = vector.shape_cast %189 : vector<1x1x1x32x1xf32> to vector<32x1xf32>
    %c1_103 = arith.constant 1 : index
    %c0_104 = arith.constant 0 : index
    %191 = arith.index_cast %c2_i32 : i32 to index
    %c0_105 = arith.constant 0 : index
    %c1_106 = arith.constant 1 : index
    %192 = vector.load %arg3[%c1_103, %c0_104, %191, %c0_105, %c1_106] : memref<2x1x4x32x4xf32, #tpu.memory_space<vmem>>, vector<1x1x1x32x1xf32>
    %193 = vector.shape_cast %192 : vector<1x1x1x32x1xf32> to vector<32x1xf32>
    %194 = vector.broadcast %190 : vector<32x1xf32> to vector<32x128xf32>
    %195 = arith.mulf %166, %194 : vector<32x128xf32>
    %196 = vector.broadcast %193 : vector<32x1xf32> to vector<32x128xf32>
    %197 = arith.mulf %169, %196 : vector<32x128xf32>
    %198 = arith.subf %195, %197 : vector<32x128xf32>
    %199 = arith.addf %121, %198 : vector<32x128xf32>
    %200 = vector.broadcast %193 : vector<32x1xf32> to vector<32x128xf32>
    %201 = arith.mulf %166, %200 : vector<32x128xf32>
    %202 = vector.broadcast %190 : vector<32x1xf32> to vector<32x128xf32>
    %203 = arith.mulf %169, %202 : vector<32x128xf32>
    %204 = arith.addf %201, %203 : vector<32x128xf32>
    %205 = arith.addf %127, %204 : vector<32x128xf32>
    %c0_107 = arith.constant 0 : index
    %c0_108 = arith.constant 0 : index
    %206 = arith.index_cast %c2_i32 : i32 to index
    %c0_109 = arith.constant 0 : index
    %c2_110 = arith.constant 2 : index
    %207 = vector.load %arg3[%c0_107, %c0_108, %206, %c0_109, %c2_110] : memref<2x1x4x32x4xf32, #tpu.memory_space<vmem>>, vector<1x1x1x32x1xf32>
    %208 = vector.shape_cast %207 : vector<1x1x1x32x1xf32> to vector<32x1xf32>
    %c1_111 = arith.constant 1 : index
    %c0_112 = arith.constant 0 : index
    %209 = arith.index_cast %c2_i32 : i32 to index
    %c0_113 = arith.constant 0 : index
    %c2_114 = arith.constant 2 : index
    %210 = vector.load %arg3[%c1_111, %c0_112, %209, %c0_113, %c2_114] : memref<2x1x4x32x4xf32, #tpu.memory_space<vmem>>, vector<1x1x1x32x1xf32>
    %211 = vector.shape_cast %210 : vector<1x1x1x32x1xf32> to vector<32x1xf32>
    %212 = vector.broadcast %208 : vector<32x1xf32> to vector<32x128xf32>
    %213 = arith.mulf %166, %212 : vector<32x128xf32>
    %214 = vector.broadcast %211 : vector<32x1xf32> to vector<32x128xf32>
    %215 = arith.mulf %169, %214 : vector<32x128xf32>
    %216 = arith.subf %213, %215 : vector<32x128xf32>
    %217 = arith.addf %139, %216 : vector<32x128xf32>
    %218 = vector.broadcast %211 : vector<32x1xf32> to vector<32x128xf32>
    %219 = arith.mulf %166, %218 : vector<32x128xf32>
    %220 = vector.broadcast %208 : vector<32x1xf32> to vector<32x128xf32>
    %221 = arith.mulf %169, %220 : vector<32x128xf32>
    %222 = arith.addf %219, %221 : vector<32x128xf32>
    %223 = arith.addf %145, %222 : vector<32x128xf32>
    %c0_115 = arith.constant 0 : index
    %c0_116 = arith.constant 0 : index
    %224 = arith.index_cast %c2_i32 : i32 to index
    %c0_117 = arith.constant 0 : index
    %c3_118 = arith.constant 3 : index
    %225 = vector.load %arg3[%c0_115, %c0_116, %224, %c0_117, %c3_118] : memref<2x1x4x32x4xf32, #tpu.memory_space<vmem>>, vector<1x1x1x32x1xf32>
    %226 = vector.shape_cast %225 : vector<1x1x1x32x1xf32> to vector<32x1xf32>
    %c1_119 = arith.constant 1 : index
    %c0_120 = arith.constant 0 : index
    %227 = arith.index_cast %c2_i32 : i32 to index
    %c0_121 = arith.constant 0 : index
    %c3_122 = arith.constant 3 : index
    %228 = vector.load %arg3[%c1_119, %c0_120, %227, %c0_121, %c3_122] : memref<2x1x4x32x4xf32, #tpu.memory_space<vmem>>, vector<1x1x1x32x1xf32>
    %229 = vector.shape_cast %228 : vector<1x1x1x32x1xf32> to vector<32x1xf32>
    %230 = vector.broadcast %226 : vector<32x1xf32> to vector<32x128xf32>
    %231 = arith.mulf %166, %230 : vector<32x128xf32>
    %232 = vector.broadcast %229 : vector<32x1xf32> to vector<32x128xf32>
    %233 = arith.mulf %169, %232 : vector<32x128xf32>
    %234 = arith.subf %231, %233 : vector<32x128xf32>
    %235 = arith.addf %157, %234 : vector<32x128xf32>
    %236 = vector.broadcast %229 : vector<32x1xf32> to vector<32x128xf32>
    %237 = arith.mulf %166, %236 : vector<32x128xf32>
    %238 = vector.broadcast %226 : vector<32x1xf32> to vector<32x128xf32>
    %239 = arith.mulf %169, %238 : vector<32x128xf32>
    %240 = arith.addf %237, %239 : vector<32x128xf32>
    %241 = arith.addf %163, %240 : vector<32x128xf32>
    %c3_i32 = arith.constant 3 : i32
    %c0_123 = arith.constant 0 : index
    %c0_124 = arith.constant 0 : index
    %242 = arith.index_cast %c3_i32 : i32 to index
    %c0_125 = arith.constant 0 : index
    %c0_126 = arith.constant 0 : index
    %243 = vector.load %arg2[%c0_123, %c0_124, %242, %c0_125, %c0_126] : memref<2x1x4x32x128xf32, #tpu.memory_space<vmem>>, vector<1x1x1x32x128xf32>
    %244 = vector.shape_cast %243 : vector<1x1x1x32x128xf32> to vector<32x128xf32>
    %c1_127 = arith.constant 1 : index
    %c0_128 = arith.constant 0 : index
    %245 = arith.index_cast %c3_i32 : i32 to index
    %c0_129 = arith.constant 0 : index
    %c0_130 = arith.constant 0 : index
    %246 = vector.load %arg2[%c1_127, %c0_128, %245, %c0_129, %c0_130] : memref<2x1x4x32x128xf32, #tpu.memory_space<vmem>>, vector<1x1x1x32x128xf32>
    %247 = vector.shape_cast %246 : vector<1x1x1x32x128xf32> to vector<32x128xf32>
    %c0_131 = arith.constant 0 : index
    %c0_132 = arith.constant 0 : index
    %248 = arith.index_cast %c3_i32 : i32 to index
    %c0_133 = arith.constant 0 : index
    %c0_134 = arith.constant 0 : index
    %249 = vector.load %arg3[%c0_131, %c0_132, %248, %c0_133, %c0_134] : memref<2x1x4x32x4xf32, #tpu.memory_space<vmem>>, vector<1x1x1x32x1xf32>
    %250 = vector.shape_cast %249 : vector<1x1x1x32x1xf32> to vector<32x1xf32>
    %c1_135 = arith.constant 1 : index
    %c0_136 = arith.constant 0 : index
    %251 = arith.index_cast %c3_i32 : i32 to index
    %c0_137 = arith.constant 0 : index
    %c0_138 = arith.constant 0 : index
    %252 = vector.load %arg3[%c1_135, %c0_136, %251, %c0_137, %c0_138] : memref<2x1x4x32x4xf32, #tpu.memory_space<vmem>>, vector<1x1x1x32x1xf32>
    %253 = vector.shape_cast %252 : vector<1x1x1x32x1xf32> to vector<32x1xf32>
    %254 = vector.broadcast %250 : vector<32x1xf32> to vector<32x128xf32>
    %255 = arith.mulf %244, %254 : vector<32x128xf32>
    %256 = vector.broadcast %253 : vector<32x1xf32> to vector<32x128xf32>
    %257 = arith.mulf %247, %256 : vector<32x128xf32>
    %258 = arith.subf %255, %257 : vector<32x128xf32>
    %259 = arith.addf %181, %258 : vector<32x128xf32>
    %260 = vector.broadcast %253 : vector<32x1xf32> to vector<32x128xf32>
    %261 = arith.mulf %244, %260 : vector<32x128xf32>
    %262 = vector.broadcast %250 : vector<32x1xf32> to vector<32x128xf32>
    %263 = arith.mulf %247, %262 : vector<32x128xf32>
    %264 = arith.addf %261, %263 : vector<32x128xf32>
    %265 = arith.addf %187, %264 : vector<32x128xf32>
    %c0_139 = arith.constant 0 : index
    %c0_140 = arith.constant 0 : index
    %266 = arith.index_cast %c3_i32 : i32 to index
    %c0_141 = arith.constant 0 : index
    %c1_142 = arith.constant 1 : index
    %267 = vector.load %arg3[%c0_139, %c0_140, %266, %c0_141, %c1_142] : memref<2x1x4x32x4xf32, #tpu.memory_space<vmem>>, vector<1x1x1x32x1xf32>
    %268 = vector.shape_cast %267 : vector<1x1x1x32x1xf32> to vector<32x1xf32>
    %c1_143 = arith.constant 1 : index
    %c0_144 = arith.constant 0 : index
    %269 = arith.index_cast %c3_i32 : i32 to index
    %c0_145 = arith.constant 0 : index
    %c1_146 = arith.constant 1 : index
    %270 = vector.load %arg3[%c1_143, %c0_144, %269, %c0_145, %c1_146] : memref<2x1x4x32x4xf32, #tpu.memory_space<vmem>>, vector<1x1x1x32x1xf32>
    %271 = vector.shape_cast %270 : vector<1x1x1x32x1xf32> to vector<32x1xf32>
    %272 = vector.broadcast %268 : vector<32x1xf32> to vector<32x128xf32>
    %273 = arith.mulf %244, %272 : vector<32x128xf32>
    %274 = vector.broadcast %271 : vector<32x1xf32> to vector<32x128xf32>
    %275 = arith.mulf %247, %274 : vector<32x128xf32>
    %276 = arith.subf %273, %275 : vector<32x128xf32>
    %277 = arith.addf %199, %276 : vector<32x128xf32>
    %278 = vector.broadcast %271 : vector<32x1xf32> to vector<32x128xf32>
    %279 = arith.mulf %244, %278 : vector<32x128xf32>
    %280 = vector.broadcast %268 : vector<32x1xf32> to vector<32x128xf32>
    %281 = arith.mulf %247, %280 : vector<32x128xf32>
    %282 = arith.addf %279, %281 : vector<32x128xf32>
    %283 = arith.addf %205, %282 : vector<32x128xf32>
    %c0_147 = arith.constant 0 : index
    %c0_148 = arith.constant 0 : index
    %284 = arith.index_cast %c3_i32 : i32 to index
    %c0_149 = arith.constant 0 : index
    %c2_150 = arith.constant 2 : index
    %285 = vector.load %arg3[%c0_147, %c0_148, %284, %c0_149, %c2_150] : memref<2x1x4x32x4xf32, #tpu.memory_space<vmem>>, vector<1x1x1x32x1xf32>
    %286 = vector.shape_cast %285 : vector<1x1x1x32x1xf32> to vector<32x1xf32>
    %c1_151 = arith.constant 1 : index
    %c0_152 = arith.constant 0 : index
    %287 = arith.index_cast %c3_i32 : i32 to index
    %c0_153 = arith.constant 0 : index
    %c2_154 = arith.constant 2 : index
    %288 = vector.load %arg3[%c1_151, %c0_152, %287, %c0_153, %c2_154] : memref<2x1x4x32x4xf32, #tpu.memory_space<vmem>>, vector<1x1x1x32x1xf32>
    %289 = vector.shape_cast %288 : vector<1x1x1x32x1xf32> to vector<32x1xf32>
    %290 = vector.broadcast %286 : vector<32x1xf32> to vector<32x128xf32>
    %291 = arith.mulf %244, %290 : vector<32x128xf32>
    %292 = vector.broadcast %289 : vector<32x1xf32> to vector<32x128xf32>
    %293 = arith.mulf %247, %292 : vector<32x128xf32>
    %294 = arith.subf %291, %293 : vector<32x128xf32>
    %295 = arith.addf %217, %294 : vector<32x128xf32>
    %296 = vector.broadcast %289 : vector<32x1xf32> to vector<32x128xf32>
    %297 = arith.mulf %244, %296 : vector<32x128xf32>
    %298 = vector.broadcast %286 : vector<32x1xf32> to vector<32x128xf32>
    %299 = arith.mulf %247, %298 : vector<32x128xf32>
    %300 = arith.addf %297, %299 : vector<32x128xf32>
    %301 = arith.addf %223, %300 : vector<32x128xf32>
    %c0_155 = arith.constant 0 : index
    %c0_156 = arith.constant 0 : index
    %302 = arith.index_cast %c3_i32 : i32 to index
    %c0_157 = arith.constant 0 : index
    %c3_158 = arith.constant 3 : index
    %303 = vector.load %arg3[%c0_155, %c0_156, %302, %c0_157, %c3_158] : memref<2x1x4x32x4xf32, #tpu.memory_space<vmem>>, vector<1x1x1x32x1xf32>
    %304 = vector.shape_cast %303 : vector<1x1x1x32x1xf32> to vector<32x1xf32>
    %c1_159 = arith.constant 1 : index
    %c0_160 = arith.constant 0 : index
    %305 = arith.index_cast %c3_i32 : i32 to index
    %c0_161 = arith.constant 0 : index
    %c3_162 = arith.constant 3 : index
    %306 = vector.load %arg3[%c1_159, %c0_160, %305, %c0_161, %c3_162] : memref<2x1x4x32x4xf32, #tpu.memory_space<vmem>>, vector<1x1x1x32x1xf32>
    %307 = vector.shape_cast %306 : vector<1x1x1x32x1xf32> to vector<32x1xf32>
    %308 = vector.broadcast %304 : vector<32x1xf32> to vector<32x128xf32>
    %309 = arith.mulf %244, %308 : vector<32x128xf32>
    %310 = vector.broadcast %307 : vector<32x1xf32> to vector<32x128xf32>
    %311 = arith.mulf %247, %310 : vector<32x128xf32>
    %312 = arith.subf %309, %311 : vector<32x128xf32>
    %313 = arith.addf %235, %312 : vector<32x128xf32>
    %314 = vector.broadcast %307 : vector<32x1xf32> to vector<32x128xf32>
    %315 = arith.mulf %244, %314 : vector<32x128xf32>
    %316 = vector.broadcast %304 : vector<32x1xf32> to vector<32x128xf32>
    %317 = arith.mulf %247, %316 : vector<32x128xf32>
    %318 = arith.addf %315, %317 : vector<32x128xf32>
    %319 = arith.addf %241, %318 : vector<32x128xf32>
    %c4_i32 = arith.constant 4 : i32
    %c0_163 = arith.constant 0 : index
    %c0_164 = arith.constant 0 : index
    %c0_165 = arith.constant 0 : index
    %c0_166 = arith.constant 0 : index
    %c0_167 = arith.constant 0 : index
    %320 = vector.load %arg4[%c0_163, %c0_164, %c0_165, %c0_166, %c0_167] : memref<2x1x4x32x128xf32, #tpu.memory_space<vmem>>, vector<1x1x1x32x128xf32>
    %321 = vector.shape_cast %320 : vector<1x1x1x32x128xf32> to vector<32x128xf32>
    %322 = vector.shape_cast %259 : vector<32x128xf32> to vector<1x1x1x32x128xf32>
    tpu.vector_store %arg4[%c0_163, %c0_164, %c0_165, %c0_166, %c0_167], %322 {strides = array<i32>} : memref<2x1x4x32x128xf32, #tpu.memory_space<vmem>>, vector<1x1x1x32x128xf32>,
    %c1_168 = arith.constant 1 : index
    %c0_169 = arith.constant 0 : index
    %c0_170 = arith.constant 0 : index
    %c0_171 = arith.constant 0 : index
    %c0_172 = arith.constant 0 : index
    %323 = vector.load %arg4[%c1_168, %c0_169, %c0_170, %c0_171, %c0_172] : memref<2x1x4x32x128xf32, #tpu.memory_space<vmem>>, vector<1x1x1x32x128xf32>
    %324 = vector.shape_cast %323 : vector<1x1x1x32x128xf32> to vector<32x128xf32>
    %325 = vector.shape_cast %265 : vector<32x128xf32> to vector<1x1x1x32x128xf32>
    tpu.vector_store %arg4[%c1_168, %c0_169, %c0_170, %c0_171, %c0_172], %325 {strides = array<i32>} : memref<2x1x4x32x128xf32, #tpu.memory_space<vmem>>, vector<1x1x1x32x128xf32>,
    %c0_173 = arith.constant 0 : index
    %c0_174 = arith.constant 0 : index
    %c1_175 = arith.constant 1 : index
    %c0_176 = arith.constant 0 : index
    %c0_177 = arith.constant 0 : index
    %326 = vector.load %arg4[%c0_173, %c0_174, %c1_175, %c0_176, %c0_177] : memref<2x1x4x32x128xf32, #tpu.memory_space<vmem>>, vector<1x1x1x32x128xf32>
    %327 = vector.shape_cast %326 : vector<1x1x1x32x128xf32> to vector<32x128xf32>
    %328 = vector.shape_cast %277 : vector<32x128xf32> to vector<1x1x1x32x128xf32>
    tpu.vector_store %arg4[%c0_173, %c0_174, %c1_175, %c0_176, %c0_177], %328 {strides = array<i32>} : memref<2x1x4x32x128xf32, #tpu.memory_space<vmem>>, vector<1x1x1x32x128xf32>,
    %c1_178 = arith.constant 1 : index
    %c0_179 = arith.constant 0 : index
    %c1_180 = arith.constant 1 : index
    %c0_181 = arith.constant 0 : index
    %c0_182 = arith.constant 0 : index
    %329 = vector.load %arg4[%c1_178, %c0_179, %c1_180, %c0_181, %c0_182] : memref<2x1x4x32x128xf32, #tpu.memory_space<vmem>>, vector<1x1x1x32x128xf32>
    %330 = vector.shape_cast %329 : vector<1x1x1x32x128xf32> to vector<32x128xf32>
    %331 = vector.shape_cast %283 : vector<32x128xf32> to vector<1x1x1x32x128xf32>
    tpu.vector_store %arg4[%c1_178, %c0_179, %c1_180, %c0_181, %c0_182], %331 {strides = array<i32>} : memref<2x1x4x32x128xf32, #tpu.memory_space<vmem>>, vector<1x1x1x32x128xf32>,
    %c0_183 = arith.constant 0 : index
    %c0_184 = arith.constant 0 : index
    %c2_185 = arith.constant 2 : index
    %c0_186 = arith.constant 0 : index
    %c0_187 = arith.constant 0 : index
    %332 = vector.load %arg4[%c0_183, %c0_184, %c2_185, %c0_186, %c0_187] : memref<2x1x4x32x128xf32, #tpu.memory_space<vmem>>, vector<1x1x1x32x128xf32>
    %333 = vector.shape_cast %332 : vector<1x1x1x32x128xf32> to vector<32x128xf32>
    %334 = vector.shape_cast %295 : vector<32x128xf32> to vector<1x1x1x32x128xf32>
    tpu.vector_store %arg4[%c0_183, %c0_184, %c2_185, %c0_186, %c0_187], %334 {strides = array<i32>} : memref<2x1x4x32x128xf32, #tpu.memory_space<vmem>>, vector<1x1x1x32x128xf32>,
    %c1_188 = arith.constant 1 : index
    %c0_189 = arith.constant 0 : index
    %c2_190 = arith.constant 2 : index
    %c0_191 = arith.constant 0 : index
    %c0_192 = arith.constant 0 : index
    %335 = vector.load %arg4[%c1_188, %c0_189, %c2_190, %c0_191, %c0_192] : memref<2x1x4x32x128xf32, #tpu.memory_space<vmem>>, vector<1x1x1x32x128xf32>
    %336 = vector.shape_cast %335 : vector<1x1x1x32x128xf32> to vector<32x128xf32>
    %337 = vector.shape_cast %301 : vector<32x128xf32> to vector<1x1x1x32x128xf32>
    tpu.vector_store %arg4[%c1_188, %c0_189, %c2_190, %c0_191, %c0_192], %337 {strides = array<i32>} : memref<2x1x4x32x128xf32, #tpu.memory_space<vmem>>, vector<1x1x1x32x128xf32>,
    %c0_193 = arith.constant 0 : index
    %c0_194 = arith.constant 0 : index
    %c3_195 = arith.constant 3 : index
    %c0_196 = arith.constant 0 : index
    %c0_197 = arith.constant 0 : index
    %338 = vector.load %arg4[%c0_193, %c0_194, %c3_195, %c0_196, %c0_197] : memref<2x1x4x32x128xf32, #tpu.memory_space<vmem>>, vector<1x1x1x32x128xf32>
    %339 = vector.shape_cast %338 : vector<1x1x1x32x128xf32> to vector<32x128xf32>
    %340 = vector.shape_cast %313 : vector<32x128xf32> to vector<1x1x1x32x128xf32>
    tpu.vector_store %arg4[%c0_193, %c0_194, %c3_195, %c0_196, %c0_197], %340 {strides = array<i32>} : memref<2x1x4x32x128xf32, #tpu.memory_space<vmem>>, vector<1x1x1x32x128xf32>,
    %c1_198 = arith.constant 1 : index
    %c0_199 = arith.constant 0 : index
    %c3_200 = arith.constant 3 : index
    %c0_201 = arith.constant 0 : index
    %c0_202 = arith.constant 0 : index
    %341 = vector.load %arg4[%c1_198, %c0_199, %c3_200, %c0_201, %c0_202] : memref<2x1x4x32x128xf32, #tpu.memory_space<vmem>>, vector<1x1x1x32x128xf32>
    %342 = vector.shape_cast %341 : vector<1x1x1x32x128xf32> to vector<32x128xf32>
    %343 = vector.shape_cast %319 : vector<32x128xf32> to vector<1x1x1x32x128xf32>
    tpu.vector_store %arg4[%c1_198, %c0_199, %c3_200, %c0_201, %c0_202], %343 {strides = array<i32>} : memref<2x1x4x32x128xf32, #tpu.memory_space<vmem>>, vector<1x1x1x32x128xf32>,
    return
  }
  func.func @transform_0(%arg0: i32, %arg1: i32) -> (i32, i32, i32, i32, i32) {
    %c0_i32 = arith.constant 0 : i32
    %c0_i32_0 = arith.constant 0 : i32
    %c0_i32_1 = arith.constant 0 : i32
    %c0_i32_2 = arith.constant 0 : i32
    return %c0_i32, %arg0, %c0_i32_0, %c0_i32_1, %arg1 : i32, i32, i32, i32, i32
  }
  func.func @transform_1(%arg0: i32, %arg1: i32) -> (i32, i32, i32, i32, i32) {
    %c0_i32 = arith.constant 0 : i32
    %c0_i32_0 = arith.constant 0 : i32
    %c0_i32_1 = arith.constant 0 : i32
    %c0_i32_2 = arith.constant 0 : i32
    %c0_i32_3 = arith.constant 0 : i32
    return %c0_i32, %arg0, %c0_i32_0, %c0_i32_1, %c0_i32_2 : i32, i32, i32, i32, i32
  }
  func.func @transform_2(%arg0: i32, %arg1: i32) -> (i32, i32, i32, i32, i32) {
    %c0_i32 = arith.constant 0 : i32
    %c0_i32_0 = arith.constant 0 : i32
    %c0_i32_1 = arith.constant 0 : i32
    %c0_i32_2 = arith.constant 0 : i32
    return %c0_i32, %arg0, %c0_i32_0, %c0_i32_1, %arg1 : i32, i32, i32, i32, i32
  }
}

</mosaic_0001>

<llo_original>
// kernel: reverse.1
$region0: #{reverse.1}
  %s0 = inlined_call_operand.vmem [shape: f32[4,4,16,7], index: 0, kind: input, shape index: {}]
  %s1 = inlined_call_operand.vmem [shape: f32[4,4,16,7], index: 1, kind: output, shape index: {}]
  $region1: #{reverse.1} parent=0
    #allocation0 [shape = 'u8[131072]{0}', space=vmem, size = 0x20000, scoped, tag = 'operand span for operand 0']
    #allocation1 [shape = 'u8[65536]{0}', space=vmem, size = 0x10000, scoped, tag = 'operand span for operand 1']
    %s2 = scalar_lea.vmem [#allocation0], 8
    // Predicated region
    $region2: #{reverse.1} parent=1 // pred_check
      _
    $region3: #{reverse.1} parent=1 // pred_check_branch
      %4 = sbr.rel (0) target = $region5
    $region4: #{reverse.1} parent=1 // pred_region
      // Predicated region
      $region6: #{reverse.1} parent=4 // pred_check
        _
      $region7: #{reverse.1} parent=4 // pred_check_branch
        %6 = sbr.rel (0) target = $region9
      $region8: #{reverse.1} parent=4 // pred_region
        // Predicated region
        $region21: #{reverse.1} parent=8 // pred_check
          _
        $region22: #{reverse.1} parent=8 // pred_check_branch
          %51 = sbr.rel (0) target = $region24
        $region23: #{reverse.1} parent=8 // pred_region
          loop: start=0, step=1, limit=1
          $region25: #{reverse.1} parent=23 // loop_pre_header
            _
          $region26: #{reverse.1} parent=23 // loop_header
            %s53 = sphi 0, %s57
            %p54 = scmp.ge.s32.totalorder %s53, 1
            %s58 = sphi %s0, %s0
            %s59 = sphi %s2, %s2
          $region27: #{reverse.1} parent=23 // loop_header_branch
            %56 = sbr.rel (%p54) target = $region31
          $region28: #{reverse.1} parent=23 // loop_body
            %v60 = vld [vmem:[%s58] sm:$0xff]
            %61 = vst [vmem:[%s59] sm:$0xff] %v60
            %v62 = vld [vmem:[%s58 + $0x8] sm:$0xff]
            %63 = vst [vmem:[%s59 + $0x10] sm:$0xff] %v62
            %v64 = vld [vmem:[%s58 + $0x10] sm:$0xff]
            %65 = vst [vmem:[%s59 + $0x20] sm:$0xff] %v64
            %v66 = vld [vmem:[%s58 + $0x18] sm:$0xff]
            %67 = vst [vmem:[%s59 + $0x30] sm:$0xff] %v66
            %v68 = vld [vmem:[%s58 + $0x20] sm:$0xff]
            %69 = vst [vmem:[%s59 + $0x40] sm:$0xff] %v68
            %v70 = vld [vmem:[%s58 + $0x28] sm:$0xff]
            %71 = vst [vmem:[%s59 + $0x50] sm:$0xff] %v70
            %v72 = vld [vmem:[%s58 + $0x30] sm:$0xff]
            %73 = vst [vmem:[%s59 + $0x60] sm:$0xff] %v72
            %v74 = vld [vmem:[%s58 + $0x38] sm:$0xff]
            %75 = vst [vmem:[%s59 + $0x70] sm:$0xff] %v74
            %v76 = vld [vmem:[%s58 + $0x40] sm:$0xff]
            %77 = vst [vmem:[%s59 + $0x80] sm:$0xff] %v76
            %v78 = vld [vmem:[%s58 + $0x48] sm:$0xff]
            %79 = vst [vmem:[%s59 + $0x90] sm:$0xff] %v78
            %v80 = vld [vmem:[%s58 + $0x50] sm:$0xff]
            %81 = vst [vmem:[%s59 + $0xa0] sm:$0xff] %v80
            %v82 = vld [vmem:[%s58 + $0x58] sm:$0xff]
            %83 = vst [vmem:[%s59 + $0xb0] sm:$0xff] %v82
            %v84 = vld [vmem:[%s58 + $0x60] sm:$0xff]
            %85 = vst [vmem:[%s59 + $0xc0] sm:$0xff] %v84
            %v86 = vld [vmem:[%s58 + $0x68] sm:$0xff]
            %87 = vst [vmem:[%s59 + $0xd0] sm:$0xff] %v86
            %v88 = vld [vmem:[%s58 + $0x70] sm:$0xff]
            %89 = vst [vmem:[%s59 + $0xe0] sm:$0xff] %v88
            %v90 = vld [vmem:[%s58 + $0x78] sm:$0xff]
            %91 = vst [vmem:[%s59 + $0xf0] sm:$0xff] %v90
          $region29: #{reverse.1} parent=23 // loop_footer
            %s57 = sadd.s32 1, %s53
          $region30: #{reverse.1} parent=23 // loop_footer_branch
            %52 = sbr.rel target = $region26
          $region31: #{reverse.1} parent=23 // loop_exit
            _
        $region24: #{reverse.1} parent=8 // pred_fallthru
          _
        // Predicated region
        $region32: #{reverse.1} parent=8 // pred_check
          _
        $region33: #{reverse.1} parent=8 // pred_check_branch
          %93 = sbr.rel target = $region35
        $region34: #{reverse.1} parent=8 // pred_region
          _
        $region35: #{reverse.1} parent=8 // pred_fallthru
          _
      $region9: #{reverse.1} parent=4 // pred_fallthru
        _
      // Predicated region
      $region10: #{reverse.1} parent=4 // pred_check
        _
      $region11: #{reverse.1} parent=4 // pred_check_branch
        %8 = sbr.rel target = $region13
      $region12: #{reverse.1} parent=4 // pred_region
        loop: start=0, step=1, limit=1
        $region14: #{reverse.1} parent=12 // loop_pre_header
          _
        $region15: #{reverse.1} parent=12 // loop_header
          %s11 = sphi 0, %s15
          %p12 = scmp.ge.s32.totalorder %s11, 1
          %s16 = sphi %s0, %s0
          %s17 = sphi %s2, %s2
        $region16: #{reverse.1} parent=12 // loop_header_branch
          %14 = sbr.rel (%p12) target = $region20
        $region17: #{reverse.1} parent=12 // loop_body
          %v18 = vld [vmem:[%s16] sm:$0xff]
          %19 = vst [vmem:[%s17] sm:$0xff] %v18
          %v20 = vld [vmem:[%s16 + $0x8] sm:$0xff]
          %21 = vst [vmem:[%s17 + $0x10] sm:$0xff] %v20
          %v22 = vld [vmem:[%s16 + $0x10] sm:$0xff]
          %23 = vst [vmem:[%s17 + $0x20] sm:$0xff] %v22
          %v24 = vld [vmem:[%s16 + $0x18] sm:$0xff]
          %25 = vst [vmem:[%s17 + $0x30] sm:$0xff] %v24
          %v26 = vld [vmem:[%s16 + $0x20] sm:$0xff]
          %27 = vst [vmem:[%s17 + $0x40] sm:$0xff] %v26
          %v28 = vld [vmem:[%s16 + $0x28] sm:$0xff]
          %29 = vst [vmem:[%s17 + $0x50] sm:$0xff] %v28
          %v30 = vld [vmem:[%s16 + $0x30] sm:$0xff]
          %31 = vst [vmem:[%s17 + $0x60] sm:$0xff] %v30
          %v32 = vld [vmem:[%s16 + $0x38] sm:$0xff]
          %33 = vst [vmem:[%s17 + $0x70] sm:$0xff] %v32
          %v34 = vld [vmem:[%s16 + $0x40] sm:$0xff]
          %35 = vst [vmem:[%s17 + $0x80] sm:$0xff] %v34
          %v36 = vld [vmem:[%s16 + $0x48] sm:$0xff]
          %37 = vst [vmem:[%s17 + $0x90] sm:$0xff] %v36
          %v38 = vld [vmem:[%s16 + $0x50] sm:$0xff]
          %39 = vst [vmem:[%s17 + $0xa0] sm:$0xff] %v38
          %v40 = vld [vmem:[%s16 + $0x58] sm:$0xff]
          %41 = vst [vmem:[%s17 + $0xb0] sm:$0xff] %v40
          %v42 = vld [vmem:[%s16 + $0x60] sm:$0xff]
          %43 = vst [vmem:[%s17 + $0xc0] sm:$0xff] %v42
          %v44 = vld [vmem:[%s16 + $0x68] sm:$0xff]
          %45 = vst [vmem:[%s17 + $0xd0] sm:$0xff] %v44
          %v46 = vld [vmem:[%s16 + $0x70] sm:$0xff]
          %47 = vst [vmem:[%s17 + $0xe0] sm:$0xff] %v46
          %v48 = vld [vmem:[%s16 + $0x78] sm:$0xff]
          %49 = vst [vmem:[%s17 + $0xf0] sm:$0xff] %v48
        $region18: #{reverse.1} parent=12 // loop_footer
          %s15 = sadd.s32 1, %s11
        $region19: #{reverse.1} parent=12 // loop_footer_branch
          %10 = sbr.rel target = $region15
        $region20: #{reverse.1} parent=12 // loop_exit
          _
      $region13: #{reverse.1} parent=4 // pred_fallthru
        _
    $region5: #{reverse.1} parent=1 // pred_fallthru
      _
    %94 = vnop
    %s95 = scalar_lea.vmem [#allocation0], 7
    %v96 = vld [vmem:[%s95] ss:$-1 sm:$0xff]
    %v97 = vrot.slane %v96, 1
    %98 = vst [vmem:[#allocation1] sm:$0xff] %v97
    %s99 = scalar_lea.vmem [#allocation0], 8
    %s100 = scalar_lea.vmem %s99, 7 [#allocation0]
    %v101 = vld [vmem:[%s100] ss:$-1 sm:$0xff]
    %v102 = vrot.slane %v101, 1
    %v103 = vlaneseq
    %v104 = vshrl.u32 %v103, 7
    %vm105 = vcmp.lt.s32.totalorder %v104, 7
    %106 = vst.msk [vmem:[#allocation1] sm:$0xff] %vm105, %v102
    %s107 = scalar_lea.vmem [#allocation1], 8
    %s108 = scalar_lea.vmem [#allocation0], 16
    %s109 = scalar_lea.vmem %s108, 7 [#allocation0]
    %v110 = vld [vmem:[%s109] ss:$-1 sm:$0xff]
    %v111 = vrot.slane %v110, 1
    %112 = vst [vmem:[%s107] sm:$0xff] %v111
    %s113 = scalar_lea.vmem %s108, 8 [#allocation0]
    %s114 = scalar_lea.vmem %s113, 7 [#allocation0]
    %v115 = vld [vmem:[%s114] ss:$-1 sm:$0xff]
    %v116 = vrot.slane %v115, 1
    %v117 = vlaneseq
    %v118 = vshrl.u32 %v117, 7
    %vm119 = vcmp.lt.s32.totalorder %v118, 7
    %120 = vst.msk [vmem:[%s107] sm:$0xff] %vm119, %v116
    %s121 = scalar_lea.vmem [#allocation1], 16
    %s122 = scalar_lea.vmem [#allocation0], 32
    %s123 = scalar_lea.vmem %s122, 7 [#allocation0]
    %v124 = vld [vmem:[%s123] ss:$-1 sm:$0xff]
    %v125 = vrot.slane %v124, 1
    %126 = vst [vmem:[%s121] sm:$0xff] %v125
    %s127 = scalar_lea.vmem %s122, 8 [#allocation0]
    %s128 = scalar_lea.vmem %s127, 7 [#allocation0]
    %v129 = vld [vmem:[%s128] ss:$-1 sm:$0xff]
    %v130 = vrot.slane %v129, 1
    %v131 = vlaneseq
    %v132 = vshrl.u32 %v131, 7
    %vm133 = vcmp.lt.s32.totalorder %v132, 7
    %134 = vst.msk [vmem:[%s121] sm:$0xff] %vm133, %v130
    %s135 = scalar_lea.vmem [#allocation1], 24
    %s136 = scalar_lea.vmem [#allocation0], 48
    %s137 = scalar_lea.vmem %s136, 7 [#allocation0]
    %v138 = vld [vmem:[%s137] ss:$-1 sm:$0xff]
    %v139 = vrot.slane %v138, 1
    %140 = vst [vmem:[%s135] sm:$0xff] %v139
    %s141 = scalar_lea.vmem %s136, 8 [#allocation0]
    %s142 = scalar_lea.vmem %s141, 7 [#allocation0]
    %v143 = vld [vmem:[%s142] ss:$-1 sm:$0xff]
    %v144 = vrot.slane %v143, 1
    %v145 = vlaneseq
    %v146 = vshrl.u32 %v145, 7
    %vm147 = vcmp.lt.s32.totalorder %v146, 7
    %148 = vst.msk [vmem:[%s135] sm:$0xff] %vm147, %v144
    %s149 = scalar_lea.vmem [#allocation1], 32
    %s150 = scalar_lea.vmem [#allocation0], 64
    %s151 = scalar_lea.vmem %s150, 7 [#allocation0]
    %v152 = vld [vmem:[%s151] ss:$-1 sm:$0xff]
    %v153 = vrot.slane %v152, 1
    %154 = vst [vmem:[%s149] sm:$0xff] %v153
    %s155 = scalar_lea.vmem %s150, 8 [#allocation0]
    %s156 = scalar_lea.vmem %s155, 7 [#allocation0]
    %v157 = vld [vmem:[%s156] ss:$-1 sm:$0xff]
    %v158 = vrot.slane %v157, 1
    %v159 = vlaneseq
    %v160 = vshrl.u32 %v159, 7
    %vm161 = vcmp.lt.s32.totalorder %v160, 7
    %162 = vst.msk [vmem:[%s149] sm:$0xff] %vm161, %v158
    %s163 = scalar_lea.vmem [#allocation1], 40
    %s164 = scalar_lea.vmem [#allocation0], 80
    %s165 = scalar_lea.vmem %s164, 7 [#allocation0]
    %v166 = vld [vmem:[%s165] ss:$-1 sm:$0xff]
    %v167 = vrot.slane %v166, 1
    %168 = vst [vmem:[%s163] sm:$0xff] %v167
    %s169 = scalar_lea.vmem %s164, 8 [#allocation0]
    %s170 = scalar_lea.vmem %s169, 7 [#allocation0]
    %v171 = vld [vmem:[%s170] ss:$-1 sm:$0xff]
    %v172 = vrot.slane %v171, 1
    %v173 = vlaneseq
    %v174 = vshrl.u32 %v173, 7
    %vm175 = vcmp.lt.s32.totalorder %v174, 7
    %176 = vst.msk [vmem:[%s163] sm:$0xff] %vm175, %v172
    %s177 = scalar_lea.vmem [#allocation1], 48
    %s178 = scalar_lea.vmem [#allocation0], 96
    %s179 = scalar_lea.vmem %s178, 7 [#allocation0]
    %v180 = vld [vmem:[%s179] ss:$-1 sm:$0xff]
    %v181 = vrot.slane %v180, 1
    %182 = vst [vmem:[%s177] sm:$0xff] %v181
    %s183 = scalar_lea.vmem %s178, 8 [#allocation0]
    %s184 = scalar_lea.vmem %s183, 7 [#allocation0]
    %v185 = vld [vmem:[%s184] ss:$-1 sm:$0xff]
    %v186 = vrot.slane %v185, 1
    %v187 = vlaneseq
    %v188 = vshrl.u32 %v187, 7
    %vm189 = vcmp.lt.s32.totalorder %v188, 7
    %190 = vst.msk [vmem:[%s177] sm:$0xff] %vm189, %v186
    %s191 = scalar_lea.vmem [#allocation1], 56
    %s192 = scalar_lea.vmem [#allocation0], 112
    %s193 = scalar_lea.vmem %s192, 7 [#allocation0]
    %v194 = vld [vmem:[%s193] ss:$-1 sm:$0xff]
    %v195 = vrot.slane %v194, 1
    %196 = vst [vmem:[%s191] sm:$0xff] %v195
    %s197 = scalar_lea.vmem %s192, 8 [#allocation0]
    %s198 = scalar_lea.vmem %s197, 7 [#allocation0]
    %v199 = vld [vmem:[%s198] ss:$-1 sm:$0xff]
    %v200 = vrot.slane %v199, 1
    %v201 = vlaneseq
    %v202 = vshrl.u32 %v201, 7
    %vm203 = vcmp.lt.s32.totalorder %v202, 7
    %204 = vst.msk [vmem:[%s191] sm:$0xff] %vm203, %v200
    %s205 = scalar_lea.vmem [#allocation1], 64
    %s206 = scalar_lea.vmem [#allocation0], 128
    %s207 = scalar_lea.vmem %s206, 7 [#allocation0]
    %v208 = vld [vmem:[%s207] ss:$-1 sm:$0xff]
    %v209 = vrot.slane %v208, 1
    %210 = vst [vmem:[%s205] sm:$0xff] %v209
    %s211 = scalar_lea.vmem %s206, 8 [#allocation0]
    %s212 = scalar_lea.vmem %s211, 7 [#allocation0]
    %v213 = vld [vmem:[%s212] ss:$-1 sm:$0xff]
    %v214 = vrot.slane %v213, 1
    %v215 = vlaneseq
    %v216 = vshrl.u32 %v215, 7
    %vm217 = vcmp.lt.s32.totalorder %v216, 7
    %218 = vst.msk [vmem:[%s205] sm:$0xff] %vm217, %v214
    %s219 = scalar_lea.vmem [#allocation1], 72
    %s220 = scalar_lea.vmem [#allocation0], 144
    %s221 = scalar_lea.vmem %s220, 7 [#allocation0]
    %v222 = vld [vmem:[%s221] ss:$-1 sm:$0xff]
    %v223 = vrot.slane %v222, 1
    %224 = vst [vmem:[%s219] sm:$0xff] %v223
    %s225 = scalar_lea.vmem %s220, 8 [#allocation0]
    %s226 = scalar_lea.vmem %s225, 7 [#allocation0]
    %v227 = vld [vmem:[%s226] ss:$-1 sm:$0xff]
    %v228 = vrot.slane %v227, 1
    %v229 = vlaneseq
    %v230 = vshrl.u32 %v229, 7
    %vm231 = vcmp.lt.s32.totalorder %v230, 7
    %232 = vst.msk [vmem:[%s219] sm:$0xff] %vm231, %v228
    %s233 = scalar_lea.vmem [#allocation1], 80
    %s234 = scalar_lea.vmem [#allocation0], 160
    %s235 = scalar_lea.vmem %s234, 7 [#allocation0]
    %v236 = vld [vmem:[%s235] ss:$-1 sm:$0xff]
    %v237 = vrot.slane %v236, 1
    %238 = vst [vmem:[%s233] sm:$0xff] %v237
    %s239 = scalar_lea.vmem %s234, 8 [#allocation0]
    %s240 = scalar_lea.vmem %s239, 7 [#allocation0]
    %v241 = vld [vmem:[%s240] ss:$-1 sm:$0xff]
    %v242 = vrot.slane %v241, 1
    %v243 = vlaneseq
    %v244 = vshrl.u32 %v243, 7
    %vm245 = vcmp.lt.s32.totalorder %v244, 7
    %246 = vst.msk [vmem:[%s233] sm:$0xff] %vm245, %v242
    %s247 = scalar_lea.vmem [#allocation1], 88
    %s248 = scalar_lea.vmem [#allocation0], 176
    %s249 = scalar_lea.vmem %s248, 7 [#allocation0]
    %v250 = vld [vmem:[%s249] ss:$-1 sm:$0xff]
    %v251 = vrot.slane %v250, 1
    %252 = vst [vmem:[%s247] sm:$0xff] %v251
    %s253 = scalar_lea.vmem %s248, 8 [#allocation0]
    %s254 = scalar_lea.vmem %s253, 7 [#allocation0]
    %v255 = vld [vmem:[%s254] ss:$-1 sm:$0xff]
    %v256 = vrot.slane %v255, 1
    %v257 = vlaneseq
    %v258 = vshrl.u32 %v257, 7
    %vm259 = vcmp.lt.s32.totalorder %v258, 7
    %260 = vst.msk [vmem:[%s247] sm:$0xff] %vm259, %v256
    %s261 = scalar_lea.vmem [#allocation1], 96
    %s262 = scalar_lea.vmem [#allocation0], 192
    %s263 = scalar_lea.vmem %s262, 7 [#allocation0]
    %v264 = vld [vmem:[%s263] ss:$-1 sm:$0xff]
    %v265 = vrot.slane %v264, 1
    %266 = vst [vmem:[%s261] sm:$0xff] %v265
    %s267 = scalar_lea.vmem %s262, 8 [#allocation0]
    %s268 = scalar_lea.vmem %s267, 7 [#allocation0]
    %v269 = vld [vmem:[%s268] ss:$-1 sm:$0xff]
    %v270 = vrot.slane %v269, 1
    %v271 = vlaneseq
    %v272 = vshrl.u32 %v271, 7
    %vm273 = vcmp.lt.s32.totalorder %v272, 7
    %274 = vst.msk [vmem:[%s261] sm:$0xff] %vm273, %v270
    %s275 = scalar_lea.vmem [#allocation1], 104
    %s276 = scalar_lea.vmem [#allocation0], 208
    %s277 = scalar_lea.vmem %s276, 7 [#allocation0]
    %v278 = vld [vmem:[%s277] ss:$-1 sm:$0xff]
    %v279 = vrot.slane %v278, 1
    %280 = vst [vmem:[%s275] sm:$0xff] %v279
    %s281 = scalar_lea.vmem %s276, 8 [#allocation0]
    %s282 = scalar_lea.vmem %s281, 7 [#allocation0]
    %v283 = vld [vmem:[%s282] ss:$-1 sm:$0xff]
    %v284 = vrot.slane %v283, 1
    %v285 = vlaneseq
    %v286 = vshrl.u32 %v285, 7
    %vm287 = vcmp.lt.s32.totalorder %v286, 7
    %288 = vst.msk [vmem:[%s275] sm:$0xff] %vm287, %v284
    %s289 = scalar_lea.vmem [#allocation1], 112
    %s290 = scalar_lea.vmem [#allocation0], 224
    %s291 = scalar_lea.vmem %s290, 7 [#allocation0]
    %v292 = vld [vmem:[%s291] ss:$-1 sm:$0xff]
    %v293 = vrot.slane %v292, 1
    %294 = vst [vmem:[%s289] sm:$0xff] %v293
    %s295 = scalar_lea.vmem %s290, 8 [#allocation0]
    %s296 = scalar_lea.vmem %s295, 7 [#allocation0]
    %v297 = vld [vmem:[%s296] ss:$-1 sm:$0xff]
    %v298 = vrot.slane %v297, 1
    %v299 = vlaneseq
    %v300 = vshrl.u32 %v299, 7
    %vm301 = vcmp.lt.s32.totalorder %v300, 7
    %302 = vst.msk [vmem:[%s289] sm:$0xff] %vm301, %v298
    %s303 = scalar_lea.vmem [#allocation1], 120
    %s304 = scalar_lea.vmem [#allocation0], 240
    %s305 = scalar_lea.vmem %s304, 7 [#allocation0]
    %v306 = vld [vmem:[%s305] ss:$-1 sm:$0xff]
    %v307 = vrot.slane %v306, 1
    %308 = vst [vmem:[%s303] sm:$0xff] %v307
    %s309 = scalar_lea.vmem %s304, 8 [#allocation0]
    %s310 = scalar_lea.vmem %s309, 7 [#allocation0]
    %v311 = vld [vmem:[%s310] ss:$-1 sm:$0xff]
    %v312 = vrot.slane %v311, 1
    %v313 = vlaneseq
    %v314 = vshrl.u32 %v313, 7
    %vm315 = vcmp.lt.s32.totalorder %v314, 7
    %316 = vst.msk [vmem:[%s303] sm:$0xff] %vm315, %v312
    // Predicated region
    $region36: #{reverse.1} parent=1 // pred_check
      _
    $region37: #{reverse.1} parent=1 // pred_check_branch
      %318 = sbr.rel (0) target = $region39
    $region38: #{reverse.1} parent=1 // pred_region
      // Predicated region
      $region40: #{reverse.1} parent=38 // pred_check
        _
      $region41: #{reverse.1} parent=38 // pred_check_branch
        %320 = sbr.rel (0) target = $region43
      $region42: #{reverse.1} parent=38 // pred_region
        // Predicated region
        $region55: #{reverse.1} parent=42 // pred_check
          _
        $region56: #{reverse.1} parent=42 // pred_check_branch
          %365 = sbr.rel (0) target = $region58
        $region57: #{reverse.1} parent=42 // pred_region
          loop: start=0, step=1, limit=1
          $region59: #{reverse.1} parent=57 // loop_pre_header
            _
          $region60: #{reverse.1} parent=57 // loop_header
            %s367 = sphi 0, %s371
            %p368 = scmp.ge.s32.totalorder %s367, 1
            %s372 = sphi [#allocation1], [#allocation1]
            %s373 = sphi %s1, %s1
          $region61: #{reverse.1} parent=57 // loop_header_branch
            %370 = sbr.rel (%p368) target = $region65
          $region62: #{reverse.1} parent=57 // loop_body
            %v374 = vld [vmem:[%s372] sm:$0xff]
            %375 = vst [vmem:[%s373] sm:$0xff] %v374
            %v376 = vld [vmem:[%s372 + $0x8] sm:$0xff]
            %377 = vst [vmem:[%s373 + $0x8] sm:$0xff] %v376
            %v378 = vld [vmem:[%s372 + $0x10] sm:$0xff]
            %379 = vst [vmem:[%s373 + $0x10] sm:$0xff] %v378
            %v380 = vld [vmem:[%s372 + $0x18] sm:$0xff]
            %381 = vst [vmem:[%s373 + $0x18] sm:$0xff] %v380
            %v382 = vld [vmem:[%s372 + $0x20] sm:$0xff]
            %383 = vst [vmem:[%s373 + $0x20] sm:$0xff] %v382
            %v384 = vld [vmem:[%s372 + $0x28] sm:$0xff]
            %385 = vst [vmem:[%s373 + $0x28] sm:$0xff] %v384
            %v386 = vld [vmem:[%s372 + $0x30] sm:$0xff]
            %387 = vst [vmem:[%s373 + $0x30] sm:$0xff] %v386
            %v388 = vld [vmem:[%s372 + $0x38] sm:$0xff]
            %389 = vst [vmem:[%s373 + $0x38] sm:$0xff] %v388
            %v390 = vld [vmem:[%s372 + $0x40] sm:$0xff]
            %391 = vst [vmem:[%s373 + $0x40] sm:$0xff] %v390
            %v392 = vld [vmem:[%s372 + $0x48] sm:$0xff]
            %393 = vst [vmem:[%s373 + $0x48] sm:$0xff] %v392
            %v394 = vld [vmem:[%s372 + $0x50] sm:$0xff]
            %395 = vst [vmem:[%s373 + $0x50] sm:$0xff] %v394
            %v396 = vld [vmem:[%s372 + $0x58] sm:$0xff]
            %397 = vst [vmem:[%s373 + $0x58] sm:$0xff] %v396
            %v398 = vld [vmem:[%s372 + $0x60] sm:$0xff]
            %399 = vst [vmem:[%s373 + $0x60] sm:$0xff] %v398
            %v400 = vld [vmem:[%s372 + $0x68] sm:$0xff]
            %401 = vst [vmem:[%s373 + $0x68] sm:$0xff] %v400
            %v402 = vld [vmem:[%s372 + $0x70] sm:$0xff]
            %403 = vst [vmem:[%s373 + $0x70] sm:$0xff] %v402
            %v404 = vld [vmem:[%s372 + $0x78] sm:$0xff]
            %405 = vst [vmem:[%s373 + $0x78] sm:$0xff] %v404
          $region63: #{reverse.1} parent=57 // loop_footer
            %s371 = sadd.s32 1, %s367
          $region64: #{reverse.1} parent=57 // loop_footer_branch
            %366 = sbr.rel target = $region60
          $region65: #{reverse.1} parent=57 // loop_exit
            _
        $region58: #{reverse.1} parent=42 // pred_fallthru
          _
        // Predicated region
        $region66: #{reverse.1} parent=42 // pred_check
          _
        $region67: #{reverse.1} parent=42 // pred_check_branch
          %407 = sbr.rel target = $region69
        $region68: #{reverse.1} parent=42 // pred_region
          _
        $region69: #{reverse.1} parent=42 // pred_fallthru
          _
      $region43: #{reverse.1} parent=38 // pred_fallthru
        _
      // Predicated region
      $region44: #{reverse.1} parent=38 // pred_check
        _
      $region45: #{reverse.1} parent=38 // pred_check_branch
        %322 = sbr.rel target = $region47
      $region46: #{reverse.1} parent=38 // pred_region
        loop: start=0, step=1, limit=1
        $region48: #{reverse.1} parent=46 // loop_pre_header
          _
        $region49: #{reverse.1} parent=46 // loop_header
          %s325 = sphi 0, %s329
          %p326 = scmp.ge.s32.totalorder %s325, 1
          %s330 = sphi [#allocation1], [#allocation1]
          %s331 = sphi %s1, %s1
        $region50: #{reverse.1} parent=46 // loop_header_branch
          %328 = sbr.rel (%p326) target = $region54
        $region51: #{reverse.1} parent=46 // loop_body
          %v332 = vld [vmem:[%s330] sm:$0xff]
          %333 = vst [vmem:[%s331] sm:$0xff] %v332
          %v334 = vld [vmem:[%s330 + $0x8] sm:$0xff]
          %335 = vst [vmem:[%s331 + $0x8] sm:$0xff] %v334
          %v336 = vld [vmem:[%s330 + $0x10] sm:$0xff]
          %337 = vst [vmem:[%s331 + $0x10] sm:$0xff] %v336
          %v338 = vld [vmem:[%s330 + $0x18] sm:$0xff]
          %339 = vst [vmem:[%s331 + $0x18] sm:$0xff] %v338
          %v340 = vld [vmem:[%s330 + $0x20] sm:$0xff]
          %341 = vst [vmem:[%s331 + $0x20] sm:$0xff] %v340
          %v342 = vld [vmem:[%s330 + $0x28] sm:$0xff]
          %343 = vst [vmem:[%s331 + $0x28] sm:$0xff] %v342
          %v344 = vld [vmem:[%s330 + $0x30] sm:$0xff]
          %345 = vst [vmem:[%s331 + $0x30] sm:$0xff] %v344
          %v346 = vld [vmem:[%s330 + $0x38] sm:$0xff]
          %347 = vst [vmem:[%s331 + $0x38] sm:$0xff] %v346
          %v348 = vld [vmem:[%s330 + $0x40] sm:$0xff]
          %349 = vst [vmem:[%s331 + $0x40] sm:$0xff] %v348
          %v350 = vld [vmem:[%s330 + $0x48] sm:$0xff]
          %351 = vst [vmem:[%s331 + $0x48] sm:$0xff] %v350
          %v352 = vld [vmem:[%s330 + $0x50] sm:$0xff]
          %353 = vst [vmem:[%s331 + $0x50] sm:$0xff] %v352
          %v354 = vld [vmem:[%s330 + $0x58] sm:$0xff]
          %355 = vst [vmem:[%s331 + $0x58] sm:$0xff] %v354
          %v356 = vld [vmem:[%s330 + $0x60] sm:$0xff]
          %357 = vst [vmem:[%s331 + $0x60] sm:$0xff] %v356
          %v358 = vld [vmem:[%s330 + $0x68] sm:$0xff]
          %359 = vst [vmem:[%s331 + $0x68] sm:$0xff] %v358
          %v360 = vld [vmem:[%s330 + $0x70] sm:$0xff]
          %361 = vst [vmem:[%s331 + $0x70] sm:$0xff] %v360
          %v362 = vld [vmem:[%s330 + $0x78] sm:$0xff]
          %363 = vst [vmem:[%s331 + $0x78] sm:$0xff] %v362
        $region52: #{reverse.1} parent=46 // loop_footer
          %s329 = sadd.s32 1, %s325
        $region53: #{reverse.1} parent=46 // loop_footer_branch
          %324 = sbr.rel target = $region49
        $region54: #{reverse.1} parent=46 // loop_exit
          _
      $region47: #{reverse.1} parent=38 // pred_fallthru
        _
    $region39: #{reverse.1} parent=1 // pred_fallthru
      _
    %408 = vnop

// kernel: group_spectral_conv2d.1
$region0: #{group_spectral_conv2d.1}
  #allocation0 [shape = 'u32[]', space=smem, size = 0x4, offset = 0x4, fixed_abs, tag = 'smem constant byte address 0x4 - core index']
  #allocation1 [shape = 'u32[144,128]{1,0:T(1,128)}', space=vmem, size = 0x12000, scoped, tag = 'internal scratch']
  %s0 = inlined_call_operand.vmem [shape: f32[2,2,4,32,128], index: 0, kind: input, shape index: {}]
  %s1 = inlined_call_operand.vmem [shape: f32[2,2,4,32,4], index: 1, kind: input, shape index: {}]
  %s2 = inlined_call_operand.vmem [shape: f32[2,2,4,32,128], index: 2, kind: output, shape index: {}]
  %s3 = sld [smem:[#allocation0]]
  $region151: #{group_spectral_conv2d.1} parent=0
    _
  %s5 = ssub.s32 1, %s3
  %s6 = scalar_select 0, %s5, %s3
  $region1: #{group_spectral_conv2d.1} parent=0
    #allocation2 [shape = 'u8[262144]{0}', space=vmem, size = 0x40000, scoped, tag = 'input window, operand 0']
    #allocation3 [shape = 'u8[262144]{0}', space=vmem, size = 0x40000, scoped, tag = 'input window, operand 1']
    #allocation4 [shape = 'u8[262144]{0}', space=vmem, size = 0x40000, scoped, tag = 'output window, operand 0']
    loop: start=0, step=1, limit=4
    $region2: #{group_spectral_conv2d.1} parent=1 // loop_pre_header
      _
    $region3: #{group_spectral_conv2d.1} parent=1 // loop_header
      %s8 = sphi 0, %s12
      %p9 = scmp.ge.s32.totalorder %s8, 4
      %s15 = sphi 0, %s27
      %s16 = sphi 0, %s23
      %s17 = sphi 0, %s15
      %s18 = sphi 0, %s16
      %s19 = sphi 0, %s17
      %s20 = sphi 0, %s18
      %s32 = sphi 0, %s34
      %s35 = sphi 0, %s32
      %s36 = sphi 0, %s35
      %s52 = sphi 0, %s36
      %s58 = sphi 0, %s60
      %s61 = sphi 0, %s58
      %s62 = sphi 0, %s61
      %s78 = sphi 0, %s62
      %s86 = sphi 0, %s88
      %s89 = sphi 0, %s86
      %s90 = sphi 0, %s89
      %s106 = sphi 0, %s90
    $region4: #{group_spectral_conv2d.1} parent=1 // loop_header_branch
      %11 = sbr.rel (%p9) target = $region8
    $region5: #{group_spectral_conv2d.1} parent=1 // loop_body
      %s13 = ssub.s32 %s8, 1
      %s14 = ssub.s32 %s8, 2
      %s21 = sadd.s32 1, %s16
      %p22 = scmp.ge.s32.totalorder %s21, 1
      %s23 = scalar_select %p22, 0, %s21
      %s24 = sadd.s32 1, %s15
      %s25 = scalar_select %p22, %s24, %s15
      %p26 = scmp.ge.s32.totalorder %s25, 2
      %s27 = scalar_select %p26, 0, %s25
      %s28 = ssub.s32 %s15, %s27
      %s29 = ssub.s32 %s16, %s23
      %s30 = sor.u32 %s28, %s29
      %p31 = scmp.eq.s32.totalorder %s30, 0
      %s33 = sadd.s32 %s32, 1
      %s34 = scalar_select %p31, %s32, %s33
      %p37 = pneg %p31
      %p38 = scmp.eq.s32.totalorder %s8, 1
      %p39 = por %p37, %p38
      %p40 = scmp.ne.s32.totalorder %s32, %s35
      %p41 = scmp.eq.s32.totalorder %s8, 0
      %p42 = por %p40, %p41
      %p43 = scmp.ne.s32.totalorder %s32, %s35
      %p44 = scmp.eq.s32.totalorder %s13, 1
      %p45 = por %p43, %p44
      %p46 = scmp.ne.s32.totalorder %s35, %s36
      %p47 = scmp.eq.s32.totalorder %s13, 0
      %p48 = por %p46, %p47
      %p49 = scmp.ne.s32.totalorder %s35, %s36
      %p50 = scmp.eq.s32.totalorder %s14, 1
      %p51 = por %p49, %p50
      %p53 = scmp.ne.s32.totalorder %s36, %s52
      %p54 = scmp.eq.s32.totalorder %s14, 0
      %p55 = por %p53, %p54
      %s56 = ssub.s32 %s15, %s27
      %p57 = scmp.eq.s32.totalorder %s56, 0
      %s59 = sadd.s32 %s58, 1
      %s60 = scalar_select %p57, %s58, %s59
      %p63 = pneg %p57
      %p64 = scmp.eq.s32.totalorder %s8, 1
      %p65 = por %p63, %p64
      %p66 = scmp.ne.s32.totalorder %s58, %s61
      %p67 = scmp.eq.s32.totalorder %s8, 0
      %p68 = por %p66, %p67
      %p69 = scmp.ne.s32.totalorder %s58, %s61
      %p70 = scmp.eq.s32.totalorder %s13, 1
      %p71 = por %p69, %p70
      %p72 = scmp.ne.s32.totalorder %s61, %s62
      %p73 = scmp.eq.s32.totalorder %s13, 0
      %p74 = por %p72, %p73
      %p75 = scmp.ne.s32.totalorder %s61, %s62
      %p76 = scmp.eq.s32.totalorder %s14, 1
      %p77 = por %p75, %p76
      %p79 = scmp.ne.s32.totalorder %s62, %s78
      %p80 = scmp.eq.s32.totalorder %s14, 0
      %p81 = por %p79, %p80
      %s82 = ssub.s32 %s15, %s27
      %s83 = ssub.s32 %s16, %s23
      %s84 = sor.u32 %s82, %s83
      %p85 = scmp.eq.s32.totalorder %s84, 0
      %s87 = sadd.s32 %s86, 1
      %s88 = scalar_select %p85, %s86, %s87
      %p91 = pneg %p85
      %p92 = scmp.eq.s32.totalorder %s8, 1
      %p93 = por %p91, %p92
      %p94 = scmp.ne.s32.totalorder %s86, %s89
      %p95 = scmp.eq.s32.totalorder %s8, 0
      %p96 = por %p94, %p95
      %p97 = scmp.ne.s32.totalorder %s86, %s89
      %p98 = scmp.eq.s32.totalorder %s13, 1
      %p99 = por %p97, %p98
      %p100 = scmp.ne.s32.totalorder %s89, %s90
      %p101 = scmp.eq.s32.totalorder %s13, 0
      %p102 = por %p100, %p101
      %p103 = scmp.ne.s32.totalorder %s89, %s90
      %p104 = scmp.eq.s32.totalorder %s14, 1
      %p105 = por %p103, %p104
      %p107 = scmp.ne.s32.totalorder %s90, %s106
      %p108 = scmp.eq.s32.totalorder %s14, 0
      %p109 = por %p107, %p108
      %p110 = scmp.le.s32.totalorder 1, %s8
      %p111 = scmp.lt.s32.totalorder %s8, 3
      %p112 = pnand %p110, %p111
      %p113 = pneg %p112
      // Predicated region
      $region9: #{group_spectral_conv2d.1} parent=5 // pred_check
        _
      $region10: #{group_spectral_conv2d.1} parent=5 // pred_check_branch
        %115 = sbr.rel (%p112) target = $region12
      $region11: #{group_spectral_conv2d.1} parent=5 // pred_region
        %s116 = ssub.s32 %s8, 1
      $region12: #{group_spectral_conv2d.1} parent=5 // pred_fallthru
        _
      %p117 = scmp.lt.s32.totalorder %s8, 2
      // Predicated region
      $region13: #{group_spectral_conv2d.1} parent=5 // pred_check
        %p118 = pneg %p117
      $region14: #{group_spectral_conv2d.1} parent=5 // pred_check_branch
        %120 = sbr.rel (%p118) target = $region16
      $region15: #{group_spectral_conv2d.1} parent=5 // pred_region
        // Predicated region
        $region17: #{group_spectral_conv2d.1} parent=15 // pred_check
          %p121 = pneg %p42
        $region18: #{group_spectral_conv2d.1} parent=15 // pred_check_branch
          %123 = sbr.rel (%p121) target = $region20
        $region19: #{group_spectral_conv2d.1} parent=15 // pred_region
          %s124 = sand.u32 %s32, 1
          %s125 = sand.u32 %s32, 1
          %s126 = smul.addr %s125, 256
          %s127 = scalar_lea.vmem [#allocation2], %s126
          %s128 = smul.addr %s15, 16
          %s129 = sadd.s32 %s16, %s128
          %s130 = smul.addr %s129, 8
          %s131 = scalar_lea.vmem %s0, %s130
          // Predicated region
          $region21: #{group_spectral_conv2d.1} parent=19 // pred_check
            _
          $region22: #{group_spectral_conv2d.1} parent=19 // pred_check_branch
            %133 = sbr.rel (0) target = $region24
          $region23: #{group_spectral_conv2d.1} parent=19 // pred_region
            // Predicated region
            $region25: #{group_spectral_conv2d.1} parent=23 // pred_check
              _
            $region26: #{group_spectral_conv2d.1} parent=23 // pred_check_branch
              %135 = sbr.rel (0) target = $region28
            $region27: #{group_spectral_conv2d.1} parent=23 // pred_region
              // Predicated region
              $region40: #{group_spectral_conv2d.1} parent=27 // pred_check
                _
              $region41: #{group_spectral_conv2d.1} parent=27 // pred_check_branch
                %212 = sbr.rel (0) target = $region43
              $region42: #{group_spectral_conv2d.1} parent=27 // pred_region
                loop: start=0, step=1, limit=1
                $region44: #{group_spectral_conv2d.1} parent=42 // loop_pre_header
                  _
                $region45: #{group_spectral_conv2d.1} parent=42 // loop_header
                  %s214 = sphi 0, %s218
                  %p215 = scmp.ge.s32.totalorder %s214, 1
                  %s219 = sphi %s131, %s131
                  %s220 = sphi %s127, %s127
                $region46: #{group_spectral_conv2d.1} parent=42 // loop_header_branch
                  %217 = sbr.rel (%p215) target = $region50
                $region47: #{group_spectral_conv2d.1} parent=42 // loop_body
                  %v221 = vld [vmem:[%s219] sm:$0xff]
                  %222 = vst [vmem:[%s220] sm:$0xff] %v221
                  %v223 = vld [vmem:[%s219 + $0x8] sm:$0xff]
                  %224 = vst [vmem:[%s220 + $0x8] sm:$0xff] %v223
                  %v225 = vld [vmem:[%s219 + $0x10] sm:$0xff]
                  %226 = vst [vmem:[%s220 + $0x10] sm:$0xff] %v225
                  %v227 = vld [vmem:[%s219 + $0x18] sm:$0xff]
                  %228 = vst [vmem:[%s220 + $0x18] sm:$0xff] %v227
                  %v229 = vld [vmem:[%s219 + $0x20] sm:$0xff]
                  %230 = vst [vmem:[%s220 + $0x20] sm:$0xff] %v229
                  %v231 = vld [vmem:[%s219 + $0x28] sm:$0xff]
                  %232 = vst [vmem:[%s220 + $0x28] sm:$0xff] %v231
                  %v233 = vld [vmem:[%s219 + $0x30] sm:$0xff]
                  %234 = vst [vmem:[%s220 + $0x30] sm:$0xff] %v233
                  %v235 = vld [vmem:[%s219 + $0x38] sm:$0xff]
                  %236 = vst [vmem:[%s220 + $0x38] sm:$0xff] %v235
                  %v237 = vld [vmem:[%s219 + $0x40] sm:$0xff]
                  %238 = vst [vmem:[%s220 + $0x40] sm:$0xff] %v237
                  %v239 = vld [vmem:[%s219 + $0x48] sm:$0xff]
                  %240 = vst [vmem:[%s220 + $0x48] sm:$0xff] %v239
                  %v241 = vld [vmem:[%s219 + $0x50] sm:$0xff]
                  %242 = vst [vmem:[%s220 + $0x50] sm:$0xff] %v241
                  %v243 = vld [vmem:[%s219 + $0x58] sm:$0xff]
                  %244 = vst [vmem:[%s220 + $0x58] sm:$0xff] %v243
                  %v245 = vld [vmem:[%s219 + $0x60] sm:$0xff]
                  %246 = vst [vmem:[%s220 + $0x60] sm:$0xff] %v245
                  %v247 = vld [vmem:[%s219 + $0x68] sm:$0xff]
                  %248 = vst [vmem:[%s220 + $0x68] sm:$0xff] %v247
                  %v249 = vld [vmem:[%s219 + $0x70] sm:$0xff]
                  %250 = vst [vmem:[%s220 + $0x70] sm:$0xff] %v249
                  %v251 = vld [vmem:[%s219 + $0x78] sm:$0xff]
                  %252 = vst [vmem:[%s220 + $0x78] sm:$0xff] %v251
                  %v253 = vld [vmem:[%s219 + $0x100] sm:$0xff]
                  %254 = vst [vmem:[%s220 + $0x80] sm:$0xff] %v253
                  %v255 = vld [vmem:[%s219 + $0x108] sm:$0xff]
                  %256 = vst [vmem:[%s220 + $0x88] sm:$0xff] %v255
                  %v257 = vld [vmem:[%s219 + $0x110] sm:$0xff]
                  %258 = vst [vmem:[%s220 + $0x90] sm:$0xff] %v257
                  %v259 = vld [vmem:[%s219 + $0x118] sm:$0xff]
                  %260 = vst [vmem:[%s220 + $0x98] sm:$0xff] %v259
                  %v261 = vld [vmem:[%s219 + $0x120] sm:$0xff]
                  %262 = vst [vmem:[%s220 + $0xa0] sm:$0xff] %v261
                  %v263 = vld [vmem:[%s219 + $0x128] sm:$0xff]
                  %264 = vst [vmem:[%s220 + $0xa8] sm:$0xff] %v263
                  %v265 = vld [vmem:[%s219 + $0x130] sm:$0xff]
                  %266 = vst [vmem:[%s220 + $0xb0] sm:$0xff] %v265
                  %v267 = vld [vmem:[%s219 + $0x138] sm:$0xff]
                  %268 = vst [vmem:[%s220 + $0xb8] sm:$0xff] %v267
                  %v269 = vld [vmem:[%s219 + $0x140] sm:$0xff]
                  %270 = vst [vmem:[%s220 + $0xc0] sm:$0xff] %v269
                  %v271 = vld [vmem:[%s219 + $0x148] sm:$0xff]
                  %272 = vst [vmem:[%s220 + $0xc8] sm:$0xff] %v271
                  %v273 = vld [vmem:[%s219 + $0x150] sm:$0xff]
                  %274 = vst [vmem:[%s220 + $0xd0] sm:$0xff] %v273
                  %v275 = vld [vmem:[%s219 + $0x158] sm:$0xff]
                  %276 = vst [vmem:[%s220 + $0xd8] sm:$0xff] %v275
                  %v277 = vld [vmem:[%s219 + $0x160] sm:$0xff]
                  %278 = vst [vmem:[%s220 + $0xe0] sm:$0xff] %v277
                  %v279 = vld [vmem:[%s219 + $0x168] sm:$0xff]
                  %280 = vst [vmem:[%s220 + $0xe8] sm:$0xff] %v279
                  %v281 = vld [vmem:[%s219 + $0x170] sm:$0xff]
                  %282 = vst [vmem:[%s220 + $0xf0] sm:$0xff] %v281
                  %v283 = vld [vmem:[%s219 + $0x178] sm:$0xff]
                  %284 = vst [vmem:[%s220 + $0xf8] sm:$0xff] %v283
                $region48: #{group_spectral_conv2d.1} parent=42 // loop_footer
                  %s218 = sadd.s32 1, %s214
                $region49: #{group_spectral_conv2d.1} parent=42 // loop_footer_branch
                  %213 = sbr.rel target = $region45
                $region50: #{group_spectral_conv2d.1} parent=42 // loop_exit
                  _
              $region43: #{group_spectral_conv2d.1} parent=27 // pred_fallthru
                _
              // Predicated region
              $region51: #{group_spectral_conv2d.1} parent=27 // pred_check
                _
              $region52: #{group_spectral_conv2d.1} parent=27 // pred_check_branch
                %286 = sbr.rel target = $region54
              $region53: #{group_spectral_conv2d.1} parent=27 // pred_region
                _
              $region54: #{group_spectral_conv2d.1} parent=27 // pred_fallthru
                _
            $region28: #{group_spectral_conv2d.1} parent=23 // pred_fallthru
              _
            // Predicated region
            $region29: #{group_spectral_conv2d.1} parent=23 // pred_check
              _
            $region30: #{group_spectral_conv2d.1} parent=23 // pred_check_branch
              %137 = sbr.rel target = $region32
            $region31: #{group_spectral_conv2d.1} parent=23 // pred_region
              loop: start=0, step=1, limit=1
              $region33: #{group_spectral_conv2d.1} parent=31 // loop_pre_header
                _
              $region34: #{group_spectral_conv2d.1} parent=31 // loop_header
                %s140 = sphi 0, %s144
                %p141 = scmp.ge.s32.totalorder %s140, 1
                %s145 = sphi %s131, %s131
                %s146 = sphi %s127, %s127
              $region35: #{group_spectral_conv2d.1} parent=31 // loop_header_branch
                %143 = sbr.rel (%p141) target = $region39
              $region36: #{group_spectral_conv2d.1} parent=31 // loop_body
                %v147 = vld [vmem:[%s145] sm:$0xff]
                %148 = vst [vmem:[%s146] sm:$0xff] %v147
                %v149 = vld [vmem:[%s145 + $0x8] sm:$0xff]
                %150 = vst [vmem:[%s146 + $0x8] sm:$0xff] %v149
                %v151 = vld [vmem:[%s145 + $0x10] sm:$0xff]
                %152 = vst [vmem:[%s146 + $0x10] sm:$0xff] %v151
                %v153 = vld [vmem:[%s145 + $0x18] sm:$0xff]
                %154 = vst [vmem:[%s146 + $0x18] sm:$0xff] %v153
                %v155 = vld [vmem:[%s145 + $0x20] sm:$0xff]
                %156 = vst [vmem:[%s146 + $0x20] sm:$0xff] %v155
                %v157 = vld [vmem:[%s145 + $0x28] sm:$0xff]
                %158 = vst [vmem:[%s146 + $0x28] sm:$0xff] %v157
                %v159 = vld [vmem:[%s145 + $0x30] sm:$0xff]
                %160 = vst [vmem:[%s146 + $0x30] sm:$0xff] %v159
                %v161 = vld [vmem:[%s145 + $0x38] sm:$0xff]
                %162 = vst [vmem:[%s146 + $0x38] sm:$0xff] %v161
                %v163 = vld [vmem:[%s145 + $0x40] sm:$0xff]
                %164 = vst [vmem:[%s146 + $0x40] sm:$0xff] %v163
                %v165 = vld [vmem:[%s145 + $0x48] sm:$0xff]
                %166 = vst [vmem:[%s146 + $0x48] sm:$0xff] %v165
                %v167 = vld [vmem:[%s145 + $0x50] sm:$0xff]
                %168 = vst [vmem:[%s146 + $0x50] sm:$0xff] %v167
                %v169 = vld [vmem:[%s145 + $0x58] sm:$0xff]
                %170 = vst [vmem:[%s146 + $0x58] sm:$0xff] %v169
                %v171 = vld [vmem:[%s145 + $0x60] sm:$0xff]
                %172 = vst [vmem:[%s146 + $0x60] sm:$0xff] %v171
                %v173 = vld [vmem:[%s145 + $0x68] sm:$0xff]
                %174 = vst [vmem:[%s146 + $0x68] sm:$0xff] %v173
                %v175 = vld [vmem:[%s145 + $0x70] sm:$0xff]
                %176 = vst [vmem:[%s146 + $0x70] sm:$0xff] %v175
                %v177 = vld [vmem:[%s145 + $0x78] sm:$0xff]
                %178 = vst [vmem:[%s146 + $0x78] sm:$0xff] %v177
                %v179 = vld [vmem:[%s145 + $0x100] sm:$0xff]
                %180 = vst [vmem:[%s146 + $0x80] sm:$0xff] %v179
                %v181 = vld [vmem:[%s145 + $0x108] sm:$0xff]
                %182 = vst [vmem:[%s146 + $0x88] sm:$0xff] %v181
                %v183 = vld [vmem:[%s145 + $0x110] sm:$0xff]
                %184 = vst [vmem:[%s146 + $0x90] sm:$0xff] %v183
                %v185 = vld [vmem:[%s145 + $0x118] sm:$0xff]
                %186 = vst [vmem:[%s146 + $0x98] sm:$0xff] %v185
                %v187 = vld [vmem:[%s145 + $0x120] sm:$0xff]
                %188 = vst [vmem:[%s146 + $0xa0] sm:$0xff] %v187
                %v189 = vld [vmem:[%s145 + $0x128] sm:$0xff]
                %190 = vst [vmem:[%s146 + $0xa8] sm:$0xff] %v189
                %v191 = vld [vmem:[%s145 + $0x130] sm:$0xff]
                %192 = vst [vmem:[%s146 + $0xb0] sm:$0xff] %v191
                %v193 = vld [vmem:[%s145 + $0x138] sm:$0xff]
                %194 = vst [vmem:[%s146 + $0xb8] sm:$0xff] %v193
                %v195 = vld [vmem:[%s145 + $0x140] sm:$0xff]
                %196 = vst [vmem:[%s146 + $0xc0] sm:$0xff] %v195
                %v197 = vld [vmem:[%s145 + $0x148] sm:$0xff]
                %198 = vst [vmem:[%s146 + $0xc8] sm:$0xff] %v197
                %v199 = vld [vmem:[%s145 + $0x150] sm:$0xff]
                %200 = vst [vmem:[%s146 + $0xd0] sm:$0xff] %v199
                %v201 = vld [vmem:[%s145 + $0x158] sm:$0xff]
                %202 = vst [vmem:[%s146 + $0xd8] sm:$0xff] %v201
                %v203 = vld [vmem:[%s145 + $0x160] sm:$0xff]
                %204 = vst [vmem:[%s146 + $0xe0] sm:$0xff] %v203
                %v205 = vld [vmem:[%s145 + $0x168] sm:$0xff]
                %206 = vst [vmem:[%s146 + $0xe8] sm:$0xff] %v205
                %v207 = vld [vmem:[%s145 + $0x170] sm:$0xff]
                %208 = vst [vmem:[%s146 + $0xf0] sm:$0xff] %v207
                %v209 = vld [vmem:[%s145 + $0x178] sm:$0xff]
                %210 = vst [vmem:[%s146 + $0xf8] sm:$0xff] %v209
              $region37: #{group_spectral_conv2d.1} parent=31 // loop_footer
                %s144 = sadd.s32 1, %s140
              $region38: #{group_spectral_conv2d.1} parent=31 // loop_footer_branch
                %139 = sbr.rel target = $region34
              $region39: #{group_spectral_conv2d.1} parent=31 // loop_exit
                _
            $region32: #{group_spectral_conv2d.1} parent=23 // pred_fallthru
              _
          $region24: #{group_spectral_conv2d.1} parent=19 // pred_fallthru
            _
          %287 = vnop
        $region20: #{group_spectral_conv2d.1} parent=15 // pred_fallthru
          _
        // Predicated region
        $region55: #{group_spectral_conv2d.1} parent=15 // pred_check
          %p288 = pneg %p68
        $region56: #{group_spectral_conv2d.1} parent=15 // pred_check_branch
          %290 = sbr.rel (%p288) target = $region58
        $region57: #{group_spectral_conv2d.1} parent=15 // pred_region
          %s291 = sand.u32 %s58, 1
          %s292 = sand.u32 %s58, 1
          %s293 = smul.addr %s292, 256
          %s294 = scalar_lea.vmem [#allocation3], %s293
          %s295 = smul.addr %s15, 16
          %s296 = smul.addr %s295, 8
          %s297 = scalar_lea.vmem %s1, %s296
          // Predicated region
          $region59: #{group_spectral_conv2d.1} parent=57 // pred_check
            _
          $region60: #{group_spectral_conv2d.1} parent=57 // pred_check_branch
            %299 = sbr.rel (0) target = $region62
          $region61: #{group_spectral_conv2d.1} parent=57 // pred_region
            // Predicated region
            $region63: #{group_spectral_conv2d.1} parent=61 // pred_check
              _
            $region64: #{group_spectral_conv2d.1} parent=61 // pred_check_branch
              %301 = sbr.rel (0) target = $region66
            $region65: #{group_spectral_conv2d.1} parent=61 // pred_region
              // Predicated region
              $region78: #{group_spectral_conv2d.1} parent=65 // pred_check
                _
              $region79: #{group_spectral_conv2d.1} parent=65 // pred_check_branch
                %378 = sbr.rel (0) target = $region81
              $region80: #{group_spectral_conv2d.1} parent=65 // pred_region
                loop: start=0, step=1, limit=1
                $region82: #{group_spectral_conv2d.1} parent=80 // loop_pre_header
                  _
                $region83: #{group_spectral_conv2d.1} parent=80 // loop_header
                  %s380 = sphi 0, %s384
                  %p381 = scmp.ge.s32.totalorder %s380, 1
                  %s385 = sphi %s297, %s297
                  %s386 = sphi %s294, %s294
                $region84: #{group_spectral_conv2d.1} parent=80 // loop_header_branch
                  %383 = sbr.rel (%p381) target = $region88
                $region85: #{group_spectral_conv2d.1} parent=80 // loop_body
                  %v387 = vld [vmem:[%s385] sm:$0xff]
                  %388 = vst [vmem:[%s386] sm:$0xff] %v387
                  %v389 = vld [vmem:[%s385 + $0x8] sm:$0xff]
                  %390 = vst [vmem:[%s386 + $0x8] sm:$0xff] %v389
                  %v391 = vld [vmem:[%s385 + $0x10] sm:$0xff]
                  %392 = vst [vmem:[%s386 + $0x10] sm:$0xff] %v391
                  %v393 = vld [vmem:[%s385 + $0x18] sm:$0xff]
                  %394 = vst [vmem:[%s386 + $0x18] sm:$0xff] %v393
                  %v395 = vld [vmem:[%s385 + $0x20] sm:$0xff]
                  %396 = vst [vmem:[%s386 + $0x20] sm:$0xff] %v395
                  %v397 = vld [vmem:[%s385 + $0x28] sm:$0xff]
                  %398 = vst [vmem:[%s386 + $0x28] sm:$0xff] %v397
                  %v399 = vld [vmem:[%s385 + $0x30] sm:$0xff]
                  %400 = vst [vmem:[%s386 + $0x30] sm:$0xff] %v399
                  %v401 = vld [vmem:[%s385 + $0x38] sm:$0xff]
                  %402 = vst [vmem:[%s386 + $0x38] sm:$0xff] %v401
                  %v403 = vld [vmem:[%s385 + $0x40] sm:$0xff]
                  %404 = vst [vmem:[%s386 + $0x40] sm:$0xff] %v403
                  %v405 = vld [vmem:[%s385 + $0x48] sm:$0xff]
                  %406 = vst [vmem:[%s386 + $0x48] sm:$0xff] %v405
                  %v407 = vld [vmem:[%s385 + $0x50] sm:$0xff]
                  %408 = vst [vmem:[%s386 + $0x50] sm:$0xff] %v407
                  %v409 = vld [vmem:[%s385 + $0x58] sm:$0xff]
                  %410 = vst [vmem:[%s386 + $0x58] sm:$0xff] %v409
                  %v411 = vld [vmem:[%s385 + $0x60] sm:$0xff]
                  %412 = vst [vmem:[%s386 + $0x60] sm:$0xff] %v411
                  %v413 = vld [vmem:[%s385 + $0x68] sm:$0xff]
                  %414 = vst [vmem:[%s386 + $0x68] sm:$0xff] %v413
                  %v415 = vld [vmem:[%s385 + $0x70] sm:$0xff]
                  %416 = vst [vmem:[%s386 + $0x70] sm:$0xff] %v415
                  %v417 = vld [vmem:[%s385 + $0x78] sm:$0xff]
                  %418 = vst [vmem:[%s386 + $0x78] sm:$0xff] %v417
                  %v419 = vld [vmem:[%s385 + $0x100] sm:$0xff]
                  %420 = vst [vmem:[%s386 + $0x80] sm:$0xff] %v419
                  %v421 = vld [vmem:[%s385 + $0x108] sm:$0xff]
                  %422 = vst [vmem:[%s386 + $0x88] sm:$0xff] %v421
                  %v423 = vld [vmem:[%s385 + $0x110] sm:$0xff]
                  %424 = vst [vmem:[%s386 + $0x90] sm:$0xff] %v423
                  %v425 = vld [vmem:[%s385 + $0x118] sm:$0xff]
                  %426 = vst [vmem:[%s386 + $0x98] sm:$0xff] %v425
                  %v427 = vld [vmem:[%s385 + $0x120] sm:$0xff]
                  %428 = vst [vmem:[%s386 + $0xa0] sm:$0xff] %v427
                  %v429 = vld [vmem:[%s385 + $0x128] sm:$0xff]
                  %430 = vst [vmem:[%s386 + $0xa8] sm:$0xff] %v429
                  %v431 = vld [vmem:[%s385 + $0x130] sm:$0xff]
                  %432 = vst [vmem:[%s386 + $0xb0] sm:$0xff] %v431
                  %v433 = vld [vmem:[%s385 + $0x138] sm:$0xff]
                  %434 = vst [vmem:[%s386 + $0xb8] sm:$0xff] %v433
                  %v435 = vld [vmem:[%s385 + $0x140] sm:$0xff]
                  %436 = vst [vmem:[%s386 + $0xc0] sm:$0xff] %v435
                  %v437 = vld [vmem:[%s385 + $0x148] sm:$0xff]
                  %438 = vst [vmem:[%s386 + $0xc8] sm:$0xff] %v437
                  %v439 = vld [vmem:[%s385 + $0x150] sm:$0xff]
                  %440 = vst [vmem:[%s386 + $0xd0] sm:$0xff] %v439
                  %v441 = vld [vmem:[%s385 + $0x158] sm:$0xff]
                  %442 = vst [vmem:[%s386 + $0xd8] sm:$0xff] %v441
                  %v443 = vld [vmem:[%s385 + $0x160] sm:$0xff]
                  %444 = vst [vmem:[%s386 + $0xe0] sm:$0xff] %v443
                  %v445 = vld [vmem:[%s385 + $0x168] sm:$0xff]
                  %446 = vst [vmem:[%s386 + $0xe8] sm:$0xff] %v445
                  %v447 = vld [vmem:[%s385 + $0x170] sm:$0xff]
                  %448 = vst [vmem:[%s386 + $0xf0] sm:$0xff] %v447
                  %v449 = vld [vmem:[%s385 + $0x178] sm:$0xff]
                  %450 = vst [vmem:[%s386 + $0xf8] sm:$0xff] %v449
                $region86: #{group_spectral_conv2d.1} parent=80 // loop_footer
                  %s384 = sadd.s32 1, %s380
                $region87: #{group_spectral_conv2d.1} parent=80 // loop_footer_branch
                  %379 = sbr.rel target = $region83
                $region88: #{group_spectral_conv2d.1} parent=80 // loop_exit
                  _
              $region81: #{group_spectral_conv2d.1} parent=65 // pred_fallthru
                _
              // Predicated region
              $region89: #{group_spectral_conv2d.1} parent=65 // pred_check
                _
              $region90: #{group_spectral_conv2d.1} parent=65 // pred_check_branch
                %452 = sbr.rel target = $region92
              $region91: #{group_spectral_conv2d.1} parent=65 // pred_region
                _
              $region92: #{group_spectral_conv2d.1} parent=65 // pred_fallthru
                _
            $region66: #{group_spectral_conv2d.1} parent=61 // pred_fallthru
              _
            // Predicated region
            $region67: #{group_spectral_conv2d.1} parent=61 // pred_check
              _
            $region68: #{group_spectral_conv2d.1} parent=61 // pred_check_branch
              %303 = sbr.rel target = $region70
            $region69: #{group_spectral_conv2d.1} parent=61 // pred_region
              loop: start=0, step=1, limit=1
              $region71: #{group_spectral_conv2d.1} parent=69 // loop_pre_header
                _
              $region72: #{group_spectral_conv2d.1} parent=69 // loop_header
                %s306 = sphi 0, %s310
                %p307 = scmp.ge.s32.totalorder %s306, 1
                %s311 = sphi %s297, %s297
                %s312 = sphi %s294, %s294
              $region73: #{group_spectral_conv2d.1} parent=69 // loop_header_branch
                %309 = sbr.rel (%p307) target = $region77
              $region74: #{group_spectral_conv2d.1} parent=69 // loop_body
                %v313 = vld [vmem:[%s311] sm:$0xff]
                %314 = vst [vmem:[%s312] sm:$0xff] %v313
                %v315 = vld [vmem:[%s311 + $0x8] sm:$0xff]
                %316 = vst [vmem:[%s312 + $0x8] sm:$0xff] %v315
                %v317 = vld [vmem:[%s311 + $0x10] sm:$0xff]
                %318 = vst [vmem:[%s312 + $0x10] sm:$0xff] %v317
                %v319 = vld [vmem:[%s311 + $0x18] sm:$0xff]
                %320 = vst [vmem:[%s312 + $0x18] sm:$0xff] %v319
                %v321 = vld [vmem:[%s311 + $0x20] sm:$0xff]
                %322 = vst [vmem:[%s312 + $0x20] sm:$0xff] %v321
                %v323 = vld [vmem:[%s311 + $0x28] sm:$0xff]
                %324 = vst [vmem:[%s312 + $0x28] sm:$0xff] %v323
                %v325 = vld [vmem:[%s311 + $0x30] sm:$0xff]
                %326 = vst [vmem:[%s312 + $0x30] sm:$0xff] %v325
                %v327 = vld [vmem:[%s311 + $0x38] sm:$0xff]
                %328 = vst [vmem:[%s312 + $0x38] sm:$0xff] %v327
                %v329 = vld [vmem:[%s311 + $0x40] sm:$0xff]
                %330 = vst [vmem:[%s312 + $0x40] sm:$0xff] %v329
                %v331 = vld [vmem:[%s311 + $0x48] sm:$0xff]
                %332 = vst [vmem:[%s312 + $0x48] sm:$0xff] %v331
                %v333 = vld [vmem:[%s311 + $0x50] sm:$0xff]
                %334 = vst [vmem:[%s312 + $0x50] sm:$0xff] %v333
                %v335 = vld [vmem:[%s311 + $0x58] sm:$0xff]
                %336 = vst [vmem:[%s312 + $0x58] sm:$0xff] %v335
                %v337 = vld [vmem:[%s311 + $0x60] sm:$0xff]
                %338 = vst [vmem:[%s312 + $0x60] sm:$0xff] %v337
                %v339 = vld [vmem:[%s311 + $0x68] sm:$0xff]
                %340 = vst [vmem:[%s312 + $0x68] sm:$0xff] %v339
                %v341 = vld [vmem:[%s311 + $0x70] sm:$0xff]
                %342 = vst [vmem:[%s312 + $0x70] sm:$0xff] %v341
                %v343 = vld [vmem:[%s311 + $0x78] sm:$0xff]
                %344 = vst [vmem:[%s312 + $0x78] sm:$0xff] %v343
                %v345 = vld [vmem:[%s311 + $0x100] sm:$0xff]
                %346 = vst [vmem:[%s312 + $0x80] sm:$0xff] %v345
                %v347 = vld [vmem:[%s311 + $0x108] sm:$0xff]
                %348 = vst [vmem:[%s312 + $0x88] sm:$0xff] %v347
                %v349 = vld [vmem:[%s311 + $0x110] sm:$0xff]
                %350 = vst [vmem:[%s312 + $0x90] sm:$0xff] %v349
                %v351 = vld [vmem:[%s311 + $0x118] sm:$0xff]
                %352 = vst [vmem:[%s312 + $0x98] sm:$0xff] %v351
                %v353 = vld [vmem:[%s311 + $0x120] sm:$0xff]
                %354 = vst [vmem:[%s312 + $0xa0] sm:$0xff] %v353
                %v355 = vld [vmem:[%s311 + $0x128] sm:$0xff]
                %356 = vst [vmem:[%s312 + $0xa8] sm:$0xff] %v355
                %v357 = vld [vmem:[%s311 + $0x130] sm:$0xff]
                %358 = vst [vmem:[%s312 + $0xb0] sm:$0xff] %v357
                %v359 = vld [vmem:[%s311 + $0x138] sm:$0xff]
                %360 = vst [vmem:[%s312 + $0xb8] sm:$0xff] %v359
                %v361 = vld [vmem:[%s311 + $0x140] sm:$0xff]
                %362 = vst [vmem:[%s312 + $0xc0] sm:$0xff] %v361
                %v363 = vld [vmem:[%s311 + $0x148] sm:$0xff]
                %364 = vst [vmem:[%s312 + $0xc8] sm:$0xff] %v363
                %v365 = vld [vmem:[%s311 + $0x150] sm:$0xff]
                %366 = vst [vmem:[%s312 + $0xd0] sm:$0xff] %v365
                %v367 = vld [vmem:[%s311 + $0x158] sm:$0xff]
                %368 = vst [vmem:[%s312 + $0xd8] sm:$0xff] %v367
                %v369 = vld [vmem:[%s311 + $0x160] sm:$0xff]
                %370 = vst [vmem:[%s312 + $0xe0] sm:$0xff] %v369
                %v371 = vld [vmem:[%s311 + $0x168] sm:$0xff]
                %372 = vst [vmem:[%s312 + $0xe8] sm:$0xff] %v371
                %v373 = vld [vmem:[%s311 + $0x170] sm:$0xff]
                %374 = vst [vmem:[%s312 + $0xf0] sm:$0xff] %v373
                %v375 = vld [vmem:[%s311 + $0x178] sm:$0xff]
                %376 = vst [vmem:[%s312 + $0xf8] sm:$0xff] %v375
              $region75: #{group_spectral_conv2d.1} parent=69 // loop_footer
                %s310 = sadd.s32 1, %s306
              $region76: #{group_spectral_conv2d.1} parent=69 // loop_footer_branch
                %305 = sbr.rel target = $region72
              $region77: #{group_spectral_conv2d.1} parent=69 // loop_exit
                _
            $region70: #{group_spectral_conv2d.1} parent=61 // pred_fallthru
              _
          $region62: #{group_spectral_conv2d.1} parent=57 // pred_fallthru
            _
          %453 = vnop
        $region58: #{group_spectral_conv2d.1} parent=15 // pred_fallthru
          _
      $region16: #{group_spectral_conv2d.1} parent=5 // pred_fallthru
        _
      %p454 = scmp.le.s32.totalorder 1, %s8
      %p455 = scmp.lt.s32.totalorder %s8, 3
      %p456 = pnand %p454, %p455
      %p457 = pneg %p456
      // Predicated region
      $region93: #{group_spectral_conv2d.1} parent=5 // pred_check
        _
      $region94: #{group_spectral_conv2d.1} parent=5 // pred_check_branch
        %459 = sbr.rel (%p456) target = $region96
      $region95: #{group_spectral_conv2d.1} parent=5 // pred_region
        %s460 = ssub.s32 %s8, 1
        %s461 = sand.u32 %s35, 1
        %s462 = sand.u32 %s35, 1
        %s463 = smul.addr %s462, 256
        %s464 = scalar_lea.vmem [#allocation2], %s463
        // Predicated region
        $region97: #{group_spectral_conv2d.1} parent=95 // pred_check
          %p465 = pneg %p48
        $region98: #{group_spectral_conv2d.1} parent=95 // pred_check_branch
          %467 = sbr.rel (%p465) target = $region100
        $region99: #{group_spectral_conv2d.1} parent=95 // pred_region
          _
        $region100: #{group_spectral_conv2d.1} parent=95 // pred_fallthru
          _
        %s468 = sand.u32 %s61, 1
        %s469 = sand.u32 %s61, 1
        %s470 = smul.addr %s469, 256
        %s471 = scalar_lea.vmem [#allocation3], %s470
        // Predicated region
        $region101: #{group_spectral_conv2d.1} parent=95 // pred_check
          %p472 = pneg %p74
        $region102: #{group_spectral_conv2d.1} parent=95 // pred_check_branch
          %474 = sbr.rel (%p472) target = $region104
        $region103: #{group_spectral_conv2d.1} parent=95 // pred_region
          _
        $region104: #{group_spectral_conv2d.1} parent=95 // pred_fallthru
          _
        %s475 = sand.u32 %s35, 1
        %s476 = sand.u32 %s35, 1
        %s477 = smul.addr %s476, 256
        %s478 = scalar_lea.vmem [#allocation2], %s477
        %p479 = pneg %p48
        %p480 = pneg %p45
        %s481 = sand.u32 %s61, 1
        %s482 = sand.u32 %s61, 1
        %s483 = smul.addr %s482, 256
        %s484 = scalar_lea.vmem [#allocation3], %s483
        %p485 = pneg %p74
        %p486 = pneg %p71
        %p487 = pneg %p102
        %p488 = pneg %p99
        %s489 = sand.u32 %s89, 1
        %s490 = sand.u32 %s89, 1
        %s491 = smul.addr %s490, 256
        %s492 = scalar_lea.vmem [#allocation4], %s491
        %v493 = vld [vmem:[%s464] sm:$0xff]
        %v494 = vld [vmem:[%s464 + $0x8] sm:$0xff]
        %v495 = vld [vmem:[%s464 + $0x10] sm:$0xff]
        %v496 = vld [vmem:[%s464 + $0x18] sm:$0xff]
        %s497 = scalar_lea.vmem %s464, 128 [#allocation2]
        %v498 = vld [vmem:[%s497] sm:$0xff]
        %v499 = vld [vmem:[%s497 + $0x8] sm:$0xff]
        %v500 = vld [vmem:[%s497 + $0x10] sm:$0xff]
        %v501 = vld [vmem:[%s497 + $0x18] sm:$0xff]
        %v502 = vld [vmem:[%s471] sm:$0xff]
        %v503 = vld [vmem:[%s471 + $0x8] sm:$0xff]
        %v504 = vld [vmem:[%s471 + $0x10] sm:$0xff]
        %v505 = vld [vmem:[%s471 + $0x18] sm:$0xff]
        %s506 = scalar_lea.vmem %s471, 128 [#allocation3]
        %v507 = vld [vmem:[%s506] sm:$0xff]
        %v508 = vld [vmem:[%s506 + $0x8] sm:$0xff]
        %v509 = vld [vmem:[%s506 + $0x10] sm:$0xff]
        %v510 = vld [vmem:[%s506 + $0x18] sm:$0xff]
        %512 = vset.pattern.permute.xlu0 0
        %513 = vperm.xlu0 %512, %v502
        %v514 = vpop.permute.xlu0 %513
        %517 = vset.pattern.permute.xlu0 0
        %518 = vperm.xlu0 %517, %v503
        %v519 = vpop.permute.xlu0 %518
        %522 = vset.pattern.permute.xlu0 0
        %523 = vperm.xlu0 %522, %v504
        %v524 = vpop.permute.xlu0 %523
        %527 = vset.pattern.permute.xlu0 0
        %528 = vperm.xlu0 %527, %v505
        %v529 = vpop.permute.xlu0 %528
        %v531 = vmul.f32 %v493, %v514
        %v532 = vmul.f32 %v494, %v519
        %v533 = vmul.f32 %v495, %v524
        %v534 = vmul.f32 %v496, %v529
        %536 = vset.pattern.permute.xlu0 0
        %537 = vperm.xlu0 %536, %v507
        %v538 = vpop.permute.xlu0 %537
        %541 = vset.pattern.permute.xlu0 0
        %542 = vperm.xlu0 %541, %v508
        %v543 = vpop.permute.xlu0 %542
        %546 = vset.pattern.permute.xlu0 0
        %547 = vperm.xlu0 %546, %v509
        %v548 = vpop.permute.xlu0 %547
        %551 = vset.pattern.permute.xlu0 0
        %552 = vperm.xlu0 %551, %v510
        %v553 = vpop.permute.xlu0 %552
        %v555 = vmul.f32 %v498, %v538
        %v556 = vmul.f32 %v499, %v543
        %v557 = vmul.f32 %v500, %v548
        %v558 = vmul.f32 %v501, %v553
        %v559 = vsub.f32 %v531, %v555
        %v560 = vsub.f32 %v532, %v556
        %v561 = vsub.f32 %v533, %v557
        %v562 = vsub.f32 %v534, %v558
        %v563 = vadd.f32 %v559, 0.0
        %v564 = vadd.f32 %v560, 0.0
        %v565 = vadd.f32 %v561, 0.0
        %v566 = vadd.f32 %v562, 0.0
        %v567 = vmul.f32 %v493, %v538
        %v568 = vmul.f32 %v494, %v543
        %v569 = vmul.f32 %v495, %v548
        %v570 = vmul.f32 %v496, %v553
        %v571 = vmul.f32 %v498, %v514
        %v572 = vmul.f32 %v499, %v519
        %v573 = vmul.f32 %v500, %v524
        %v574 = vmul.f32 %v501, %v529
        %v575 = vadd.f32 %v567, %v571
        %v576 = vadd.f32 %v568, %v572
        %v577 = vadd.f32 %v569, %v573
        %v578 = vadd.f32 %v570, %v574
        %v579 = vadd.f32 %v575, 0.0
        %v580 = vadd.f32 %v576, 0.0
        %v581 = vadd.f32 %v577, 0.0
        %v582 = vadd.f32 %v578, 0.0
        %583 = vset.pattern.permute.xlu0 1
        %584 = vperm.xlu0 %583, %v502
        %v585 = vpop.permute.xlu0 %584
        %587 = vset.pattern.permute.xlu0 1
        %588 = vperm.xlu0 %587, %v503
        %v589 = vpop.permute.xlu0 %588
        %591 = vset.pattern.permute.xlu0 1
        %592 = vperm.xlu0 %591, %v504
        %v593 = vpop.permute.xlu0 %592
        %595 = vset.pattern.permute.xlu0 1
        %596 = vperm.xlu0 %595, %v505
        %v597 = vpop.permute.xlu0 %596
        %v599 = vmul.f32 %v493, %v585
        %v600 = vmul.f32 %v494, %v589
        %v601 = vmul.f32 %v495, %v593
        %v602 = vmul.f32 %v496, %v597
        %603 = vset.pattern.permute.xlu0 1
        %604 = vperm.xlu0 %603, %v507
        %v605 = vpop.permute.xlu0 %604
        %607 = vset.pattern.permute.xlu0 1
        %608 = vperm.xlu0 %607, %v508
        %v609 = vpop.permute.xlu0 %608
        %611 = vset.pattern.permute.xlu0 1
        %612 = vperm.xlu0 %611, %v509
        %v613 = vpop.permute.xlu0 %612
        %615 = vset.pattern.permute.xlu0 1
        %616 = vperm.xlu0 %615, %v510
        %v617 = vpop.permute.xlu0 %616
        %v619 = vmul.f32 %v498, %v605
        %v620 = vmul.f32 %v499, %v609
        %v621 = vmul.f32 %v500, %v613
        %v622 = vmul.f32 %v501, %v617
        %v623 = vsub.f32 %v599, %v619
        %v624 = vsub.f32 %v600, %v620
        %v625 = vsub.f32 %v601, %v621
        %v626 = vsub.f32 %v602, %v622
        %v627 = vadd.f32 %v623, 0.0
        %v628 = vadd.f32 %v624, 0.0
        %v629 = vadd.f32 %v625, 0.0
        %v630 = vadd.f32 %v626, 0.0
        %v631 = vmul.f32 %v493, %v605
        %v632 = vmul.f32 %v494, %v609
        %v633 = vmul.f32 %v495, %v613
        %v634 = vmul.f32 %v496, %v617
        %v635 = vmul.f32 %v498, %v585
        %v636 = vmul.f32 %v499, %v589
        %v637 = vmul.f32 %v500, %v593
        %v638 = vmul.f32 %v501, %v597
        %v639 = vadd.f32 %v631, %v635
        %v640 = vadd.f32 %v632, %v636
        %v641 = vadd.f32 %v633, %v637
        %v642 = vadd.f32 %v634, %v638
        %v643 = vadd.f32 %v639, 0.0
        %v644 = vadd.f32 %v640, 0.0
        %v645 = vadd.f32 %v641, 0.0
        %v646 = vadd.f32 %v642, 0.0
        %647 = vset.pattern.permute.xlu0 2
        %648 = vperm.xlu0 %647, %v502
        %v649 = vpop.permute.xlu0 %648
        %651 = vset.pattern.permute.xlu0 2
        %652 = vperm.xlu0 %651, %v503
        %v653 = vpop.permute.xlu0 %652
        %655 = vset.pattern.permute.xlu0 2
        %656 = vperm.xlu0 %655, %v504
        %v657 = vpop.permute.xlu0 %656
        %659 = vset.pattern.permute.xlu0 2
        %660 = vperm.xlu0 %659, %v505
        %v661 = vpop.permute.xlu0 %660
        %v663 = vmul.f32 %v493, %v649
        %v664 = vmul.f32 %v494, %v653
        %v665 = vmul.f32 %v495, %v657
        %v666 = vmul.f32 %v496, %v661
        %667 = vset.pattern.permute.xlu0 2
        %668 = vperm.xlu0 %667, %v507
        %v669 = vpop.permute.xlu0 %668
        %671 = vset.pattern.permute.xlu0 2
        %672 = vperm.xlu0 %671, %v508
        %v673 = vpop.permute.xlu0 %672
        %675 = vset.pattern.permute.xlu0 2
        %676 = vperm.xlu0 %675, %v509
        %v677 = vpop.permute.xlu0 %676
        %679 = vset.pattern.permute.xlu0 2
        %680 = vperm.xlu0 %679, %v510
        %v681 = vpop.permute.xlu0 %680
        %v683 = vmul.f32 %v498, %v669
        %v684 = vmul.f32 %v499, %v673
        %v685 = vmul.f32 %v500, %v677
        %v686 = vmul.f32 %v501, %v681
        %v687 = vsub.f32 %v663, %v683
        %v688 = vsub.f32 %v664, %v684
        %v689 = vsub.f32 %v665, %v685
        %v690 = vsub.f32 %v666, %v686
        %v691 = vadd.f32 %v687, 0.0
        %v692 = vadd.f32 %v688, 0.0
        %v693 = vadd.f32 %v689, 0.0
        %v694 = vadd.f32 %v690, 0.0
        %v695 = vmul.f32 %v493, %v669
        %v696 = vmul.f32 %v494, %v673
        %v697 = vmul.f32 %v495, %v677
        %v698 = vmul.f32 %v496, %v681
        %v699 = vmul.f32 %v498, %v649
        %v700 = vmul.f32 %v499, %v653
        %v701 = vmul.f32 %v500, %v657
        %v702 = vmul.f32 %v501, %v661
        %v703 = vadd.f32 %v695, %v699
        %v704 = vadd.f32 %v696, %v700
        %v705 = vadd.f32 %v697, %v701
        %v706 = vadd.f32 %v698, %v702
        %v707 = vadd.f32 %v703, 0.0
        %v708 = vadd.f32 %v704, 0.0
        %v709 = vadd.f32 %v705, 0.0
        %v710 = vadd.f32 %v706, 0.0
        %711 = vset.pattern.permute.xlu0 3
        %712 = vperm.xlu0 %711, %v502
        %v713 = vpop.permute.xlu0 %712
        %715 = vset.pattern.permute.xlu0 3
        %716 = vperm.xlu0 %715, %v503
        %v717 = vpop.permute.xlu0 %716
        %719 = vset.pattern.permute.xlu0 3
        %720 = vperm.xlu0 %719, %v504
        %v721 = vpop.permute.xlu0 %720
        %723 = vset.pattern.permute.xlu0 3
        %724 = vperm.xlu0 %723, %v505
        %v725 = vpop.permute.xlu0 %724
        %v727 = vmul.f32 %v493, %v713
        %v728 = vmul.f32 %v494, %v717
        %v729 = vmul.f32 %v495, %v721
        %v730 = vmul.f32 %v496, %v725
        %731 = vset.pattern.permute.xlu0 3
        %732 = vperm.xlu0 %731, %v507
        %v733 = vpop.permute.xlu0 %732
        %735 = vset.pattern.permute.xlu0 3
        %736 = vperm.xlu0 %735, %v508
        %v737 = vpop.permute.xlu0 %736
        %739 = vset.pattern.permute.xlu0 3
        %740 = vperm.xlu0 %739, %v509
        %v741 = vpop.permute.xlu0 %740
        %743 = vset.pattern.permute.xlu0 3
        %744 = vperm.xlu0 %743, %v510
        %v745 = vpop.permute.xlu0 %744
        %v747 = vmul.f32 %v498, %v733
        %v748 = vmul.f32 %v499, %v737
        %v749 = vmul.f32 %v500, %v741
        %v750 = vmul.f32 %v501, %v745
        %v751 = vsub.f32 %v727, %v747
        %v752 = vsub.f32 %v728, %v748
        %v753 = vsub.f32 %v729, %v749
        %v754 = vsub.f32 %v730, %v750
        %v755 = vadd.f32 %v751, 0.0
        %v756 = vadd.f32 %v752, 0.0
        %v757 = vadd.f32 %v753, 0.0
        %v758 = vadd.f32 %v754, 0.0
        %v759 = vmul.f32 %v493, %v733
        %v760 = vmul.f32 %v494, %v737
        %v761 = vmul.f32 %v495, %v741
        %v762 = vmul.f32 %v496, %v745
        %v763 = vmul.f32 %v498, %v713
        %v764 = vmul.f32 %v499, %v717
        %v765 = vmul.f32 %v500, %v721
        %v766 = vmul.f32 %v501, %v725
        %v767 = vadd.f32 %v759, %v763
        %v768 = vadd.f32 %v760, %v764
        %v769 = vadd.f32 %v761, %v765
        %v770 = vadd.f32 %v762, %v766
        %v771 = vadd.f32 %v767, 0.0
        %v772 = vadd.f32 %v768, 0.0
        %v773 = vadd.f32 %v769, 0.0
        %v774 = vadd.f32 %v770, 0.0
        %s775 = scalar_lea.vmem %s464, 32 [#allocation2]
        %v776 = vld [vmem:[%s775] sm:$0xff]
        %v777 = vld [vmem:[%s775 + $0x8] sm:$0xff]
        %v778 = vld [vmem:[%s775 + $0x10] sm:$0xff]
        %v779 = vld [vmem:[%s775 + $0x18] sm:$0xff]
        %s780 = scalar_lea.vmem %s464, 160 [#allocation2]
        %v781 = vld [vmem:[%s780] sm:$0xff]
        %v782 = vld [vmem:[%s780 + $0x8] sm:$0xff]
        %v783 = vld [vmem:[%s780 + $0x10] sm:$0xff]
        %v784 = vld [vmem:[%s780 + $0x18] sm:$0xff]
        %s785 = scalar_lea.vmem %s471, 32 [#allocation3]
        %v786 = vld [vmem:[%s785] sm:$0xff]
        %v787 = vld [vmem:[%s785 + $0x8] sm:$0xff]
        %v788 = vld [vmem:[%s785 + $0x10] sm:$0xff]
        %v789 = vld [vmem:[%s785 + $0x18] sm:$0xff]
        %s790 = scalar_lea.vmem %s471, 160 [#allocation3]
        %v791 = vld [vmem:[%s790] sm:$0xff]
        %v792 = vld [vmem:[%s790 + $0x8] sm:$0xff]
        %v793 = vld [vmem:[%s790 + $0x10] sm:$0xff]
        %v794 = vld [vmem:[%s790 + $0x18] sm:$0xff]
        %796 = vset.pattern.permute.xlu0 0
        %797 = vperm.xlu0 %796, %v786
        %v798 = vpop.permute.xlu0 %797
        %801 = vset.pattern.permute.xlu0 0
        %802 = vperm.xlu0 %801, %v787
        %v803 = vpop.permute.xlu0 %802
        %806 = vset.pattern.permute.xlu0 0
        %807 = vperm.xlu0 %806, %v788
        %v808 = vpop.permute.xlu0 %807
        %811 = vset.pattern.permute.xlu0 0
        %812 = vperm.xlu0 %811, %v789
        %v813 = vpop.permute.xlu0 %812
        %v815 = vmul.f32 %v776, %v798
        %v816 = vmul.f32 %v777, %v803
        %v817 = vmul.f32 %v778, %v808
        %v818 = vmul.f32 %v779, %v813
        %820 = vset.pattern.permute.xlu0 0
        %821 = vperm.xlu0 %820, %v791
        %v822 = vpop.permute.xlu0 %821
        %825 = vset.pattern.permute.xlu0 0
        %826 = vperm.xlu0 %825, %v792
        %v827 = vpop.permute.xlu0 %826
        %830 = vset.pattern.permute.xlu0 0
        %831 = vperm.xlu0 %830, %v793
        %v832 = vpop.permute.xlu0 %831
        %835 = vset.pattern.permute.xlu0 0
        %836 = vperm.xlu0 %835, %v794
        %v837 = vpop.permute.xlu0 %836
        %v839 = vmul.f32 %v781, %v822
        %v840 = vmul.f32 %v782, %v827
        %v841 = vmul.f32 %v783, %v832
        %v842 = vmul.f32 %v784, %v837
        %v843 = vsub.f32 %v815, %v839
        %v844 = vsub.f32 %v816, %v840
        %v845 = vsub.f32 %v817, %v841
        %v846 = vsub.f32 %v818, %v842
        %v847 = vadd.f32 %v563, %v843
        %v848 = vadd.f32 %v564, %v844
        %v849 = vadd.f32 %v565, %v845
        %v850 = vadd.f32 %v566, %v846
        %v851 = vmul.f32 %v776, %v822
        %v852 = vmul.f32 %v777, %v827
        %v853 = vmul.f32 %v778, %v832
        %v854 = vmul.f32 %v779, %v837
        %v855 = vmul.f32 %v781, %v798
        %v856 = vmul.f32 %v782, %v803
        %v857 = vmul.f32 %v783, %v808
        %v858 = vmul.f32 %v784, %v813
        %v859 = vadd.f32 %v851, %v855
        %v860 = vadd.f32 %v852, %v856
        %v861 = vadd.f32 %v853, %v857
        %v862 = vadd.f32 %v854, %v858
        %v863 = vadd.f32 %v579, %v859
        %v864 = vadd.f32 %v580, %v860
        %v865 = vadd.f32 %v581, %v861
        %v866 = vadd.f32 %v582, %v862
        %867 = vset.pattern.permute.xlu0 1
        %868 = vperm.xlu0 %867, %v786
        %v869 = vpop.permute.xlu0 %868
        %871 = vset.pattern.permute.xlu0 1
        %872 = vperm.xlu0 %871, %v787
        %v873 = vpop.permute.xlu0 %872
        %875 = vset.pattern.permute.xlu0 1
        %876 = vperm.xlu0 %875, %v788
        %v877 = vpop.permute.xlu0 %876
        %879 = vset.pattern.permute.xlu0 1
        %880 = vperm.xlu0 %879, %v789
        %v881 = vpop.permute.xlu0 %880
        %v883 = vmul.f32 %v776, %v869
        %v884 = vmul.f32 %v777, %v873
        %v885 = vmul.f32 %v778, %v877
        %v886 = vmul.f32 %v779, %v881
        %887 = vset.pattern.permute.xlu0 1
        %888 = vperm.xlu0 %887, %v791
        %v889 = vpop.permute.xlu0 %888
        %891 = vset.pattern.permute.xlu0 1
        %892 = vperm.xlu0 %891, %v792
        %v893 = vpop.permute.xlu0 %892
        %895 = vset.pattern.permute.xlu0 1
        %896 = vperm.xlu0 %895, %v793
        %v897 = vpop.permute.xlu0 %896
        %899 = vset.pattern.permute.xlu0 1
        %900 = vperm.xlu0 %899, %v794
        %v901 = vpop.permute.xlu0 %900
        %v903 = vmul.f32 %v781, %v889
        %v904 = vmul.f32 %v782, %v893
        %v905 = vmul.f32 %v783, %v897
        %v906 = vmul.f32 %v784, %v901
        %v907 = vsub.f32 %v883, %v903
        %v908 = vsub.f32 %v884, %v904
        %v909 = vsub.f32 %v885, %v905
        %v910 = vsub.f32 %v886, %v906
        %v911 = vadd.f32 %v627, %v907
        %v912 = vadd.f32 %v628, %v908
        %v913 = vadd.f32 %v629, %v909
        %v914 = vadd.f32 %v630, %v910
        %v915 = vmul.f32 %v776, %v889
        %v916 = vmul.f32 %v777, %v893
        %v917 = vmul.f32 %v778, %v897
        %v918 = vmul.f32 %v779, %v901
        %v919 = vmul.f32 %v781, %v869
        %v920 = vmul.f32 %v782, %v873
        %v921 = vmul.f32 %v783, %v877
        %v922 = vmul.f32 %v784, %v881
        %v923 = vadd.f32 %v915, %v919
        %v924 = vadd.f32 %v916, %v920
        %v925 = vadd.f32 %v917, %v921
        %v926 = vadd.f32 %v918, %v922
        %v927 = vadd.f32 %v643, %v923
        %v928 = vadd.f32 %v644, %v924
        %v929 = vadd.f32 %v645, %v925
        %v930 = vadd.f32 %v646, %v926
        %931 = vset.pattern.permute.xlu0 2
        %932 = vperm.xlu0 %931, %v786
        %v933 = vpop.permute.xlu0 %932
        %935 = vset.pattern.permute.xlu0 2
        %936 = vperm.xlu0 %935, %v787
        %v937 = vpop.permute.xlu0 %936
        %939 = vset.pattern.permute.xlu0 2
        %940 = vperm.xlu0 %939, %v788
        %v941 = vpop.permute.xlu0 %940
        %943 = vset.pattern.permute.xlu0 2
        %944 = vperm.xlu0 %943, %v789
        %v945 = vpop.permute.xlu0 %944
        %v947 = vmul.f32 %v776, %v933
        %v948 = vmul.f32 %v777, %v937
        %v949 = vmul.f32 %v778, %v941
        %v950 = vmul.f32 %v779, %v945
        %951 = vset.pattern.permute.xlu0 2
        %952 = vperm.xlu0 %951, %v791
        %v953 = vpop.permute.xlu0 %952
        %955 = vset.pattern.permute.xlu0 2
        %956 = vperm.xlu0 %955, %v792
        %v957 = vpop.permute.xlu0 %956
        %959 = vset.pattern.permute.xlu0 2
        %960 = vperm.xlu0 %959, %v793
        %v961 = vpop.permute.xlu0 %960
        %963 = vset.pattern.permute.xlu0 2
        %964 = vperm.xlu0 %963, %v794
        %v965 = vpop.permute.xlu0 %964
        %v967 = vmul.f32 %v781, %v953
        %v968 = vmul.f32 %v782, %v957
        %v969 = vmul.f32 %v783, %v961
        %v970 = vmul.f32 %v784, %v965
        %v971 = vsub.f32 %v947, %v967
        %v972 = vsub.f32 %v948, %v968
        %v973 = vsub.f32 %v949, %v969
        %v974 = vsub.f32 %v950, %v970
        %v975 = vadd.f32 %v691, %v971
        %v976 = vadd.f32 %v692, %v972
        %v977 = vadd.f32 %v693, %v973
        %v978 = vadd.f32 %v694, %v974
        %v979 = vmul.f32 %v776, %v953
        %v980 = vmul.f32 %v777, %v957
        %v981 = vmul.f32 %v778, %v961
        %v982 = vmul.f32 %v779, %v965
        %v983 = vmul.f32 %v781, %v933
        %v984 = vmul.f32 %v782, %v937
        %v985 = vmul.f32 %v783, %v941
        %v986 = vmul.f32 %v784, %v945
        %v987 = vadd.f32 %v979, %v983
        %v988 = vadd.f32 %v980, %v984
        %v989 = vadd.f32 %v981, %v985
        %v990 = vadd.f32 %v982, %v986
        %v991 = vadd.f32 %v707, %v987
        %v992 = vadd.f32 %v708, %v988
        %v993 = vadd.f32 %v709, %v989
        %v994 = vadd.f32 %v710, %v990
        %995 = vset.pattern.permute.xlu0 3
        %996 = vperm.xlu0 %995, %v786
        %v997 = vpop.permute.xlu0 %996
        %999 = vset.pattern.permute.xlu0 3
        %1000 = vperm.xlu0 %999, %v787
        %v1001 = vpop.permute.xlu0 %1000
        %1003 = vset.pattern.permute.xlu0 3
        %1004 = vperm.xlu0 %1003, %v788
        %v1005 = vpop.permute.xlu0 %1004
        %1007 = vset.pattern.permute.xlu0 3
        %1008 = vperm.xlu0 %1007, %v789
        %v1009 = vpop.permute.xlu0 %1008
        %v1011 = vmul.f32 %v776, %v997
        %v1012 = vmul.f32 %v777, %v1001
        %v1013 = vmul.f32 %v778, %v1005
        %v1014 = vmul.f32 %v779, %v1009
        %1015 = vset.pattern.permute.xlu0 3
        %1016 = vperm.xlu0 %1015, %v791
        %v1017 = vpop.permute.xlu0 %1016
        %1019 = vset.pattern.permute.xlu0 3
        %1020 = vperm.xlu0 %1019, %v792
        %v1021 = vpop.permute.xlu0 %1020
        %1023 = vset.pattern.permute.xlu0 3
        %1024 = vperm.xlu0 %1023, %v793
        %v1025 = vpop.permute.xlu0 %1024
        %1027 = vset.pattern.permute.xlu0 3
        %1028 = vperm.xlu0 %1027, %v794
        %v1029 = vpop.permute.xlu0 %1028
        %v1031 = vmul.f32 %v781, %v1017
        %v1032 = vmul.f32 %v782, %v1021
        %v1033 = vmul.f32 %v783, %v1025
        %v1034 = vmul.f32 %v784, %v1029
        %v1035 = vsub.f32 %v1011, %v1031
        %v1036 = vsub.f32 %v1012, %v1032
        %v1037 = vsub.f32 %v1013, %v1033
        %v1038 = vsub.f32 %v1014, %v1034
        %v1039 = vadd.f32 %v755, %v1035
        %v1040 = vadd.f32 %v756, %v1036
        %v1041 = vadd.f32 %v757, %v1037
        %v1042 = vadd.f32 %v758, %v1038
        %v1043 = vmul.f32 %v776, %v1017
        %v1044 = vmul.f32 %v777, %v1021
        %v1045 = vmul.f32 %v778, %v1025
        %v1046 = vmul.f32 %v779, %v1029
        %v1047 = vmul.f32 %v781, %v997
        %v1048 = vmul.f32 %v782, %v1001
        %v1049 = vmul.f32 %v783, %v1005
        %v1050 = vmul.f32 %v784, %v1009
        %v1051 = vadd.f32 %v1043, %v1047
        %v1052 = vadd.f32 %v1044, %v1048
        %v1053 = vadd.f32 %v1045, %v1049
        %v1054 = vadd.f32 %v1046, %v1050
        %v1055 = vadd.f32 %v771, %v1051
        %v1056 = vadd.f32 %v772, %v1052
        %v1057 = vadd.f32 %v773, %v1053
        %v1058 = vadd.f32 %v774, %v1054
        %s1059 = scalar_lea.vmem %s464, 64 [#allocation2]
        %v1060 = vld [vmem:[%s1059] sm:$0xff]
        %v1061 = vld [vmem:[%s1059 + $0x8] sm:$0xff]
        %v1062 = vld [vmem:[%s1059 + $0x10] sm:$0xff]
        %v1063 = vld [vmem:[%s1059 + $0x18] sm:$0xff]
        %s1064 = scalar_lea.vmem %s464, 192 [#allocation2]
        %v1065 = vld [vmem:[%s1064] sm:$0xff]
        %v1066 = vld [vmem:[%s1064 + $0x8] sm:$0xff]
        %v1067 = vld [vmem:[%s1064 + $0x10] sm:$0xff]
        %v1068 = vld [vmem:[%s1064 + $0x18] sm:$0xff]
        %s1069 = scalar_lea.vmem %s471, 64 [#allocation3]
        %v1070 = vld [vmem:[%s1069] sm:$0xff]
        %v1071 = vld [vmem:[%s1069 + $0x8] sm:$0xff]
        %v1072 = vld [vmem:[%s1069 + $0x10] sm:$0xff]
        %v1073 = vld [vmem:[%s1069 + $0x18] sm:$0xff]
        %s1074 = scalar_lea.vmem %s471, 192 [#allocation3]
        %v1075 = vld [vmem:[%s1074] sm:$0xff]
        %v1076 = vld [vmem:[%s1074 + $0x8] sm:$0xff]
        %v1077 = vld [vmem:[%s1074 + $0x10] sm:$0xff]
        %v1078 = vld [vmem:[%s1074 + $0x18] sm:$0xff]
        %1080 = vset.pattern.permute.xlu0 0
        %1081 = vperm.xlu0 %1080, %v1070
        %v1082 = vpop.permute.xlu0 %1081
        %1085 = vset.pattern.permute.xlu0 0
        %1086 = vperm.xlu0 %1085, %v1071
        %v1087 = vpop.permute.xlu0 %1086
        %1090 = vset.pattern.permute.xlu0 0
        %1091 = vperm.xlu0 %1090, %v1072
        %v1092 = vpop.permute.xlu0 %1091
        %1095 = vset.pattern.permute.xlu0 0
        %1096 = vperm.xlu0 %1095, %v1073
        %v1097 = vpop.permute.xlu0 %1096
        %v1099 = vmul.f32 %v1060, %v1082
        %v1100 = vmul.f32 %v1061, %v1087
        %v1101 = vmul.f32 %v1062, %v1092
        %v1102 = vmul.f32 %v1063, %v1097
        %1104 = vset.pattern.permute.xlu0 0
        %1105 = vperm.xlu0 %1104, %v1075
        %v1106 = vpop.permute.xlu0 %1105
        %1109 = vset.pattern.permute.xlu0 0
        %1110 = vperm.xlu0 %1109, %v1076
        %v1111 = vpop.permute.xlu0 %1110
        %1114 = vset.pattern.permute.xlu0 0
        %1115 = vperm.xlu0 %1114, %v1077
        %v1116 = vpop.permute.xlu0 %1115
        %1119 = vset.pattern.permute.xlu0 0
        %1120 = vperm.xlu0 %1119, %v1078
        %v1121 = vpop.permute.xlu0 %1120
        %v1123 = vmul.f32 %v1065, %v1106
        %v1124 = vmul.f32 %v1066, %v1111
        %v1125 = vmul.f32 %v1067, %v1116
        %v1126 = vmul.f32 %v1068, %v1121
        %v1127 = vsub.f32 %v1099, %v1123
        %v1128 = vsub.f32 %v1100, %v1124
        %v1129 = vsub.f32 %v1101, %v1125
        %v1130 = vsub.f32 %v1102, %v1126
        %v1131 = vadd.f32 %v847, %v1127
        %v1132 = vadd.f32 %v848, %v1128
        %v1133 = vadd.f32 %v849, %v1129
        %v1134 = vadd.f32 %v850, %v1130
        %v1135 = vmul.f32 %v1060, %v1106
        %v1136 = vmul.f32 %v1061, %v1111
        %v1137 = vmul.f32 %v1062, %v1116
        %v1138 = vmul.f32 %v1063, %v1121
        %v1139 = vmul.f32 %v1065, %v1082
        %v1140 = vmul.f32 %v1066, %v1087
        %v1141 = vmul.f32 %v1067, %v1092
        %v1142 = vmul.f32 %v1068, %v1097
        %v1143 = vadd.f32 %v1135, %v1139
        %v1144 = vadd.f32 %v1136, %v1140
        %v1145 = vadd.f32 %v1137, %v1141
        %v1146 = vadd.f32 %v1138, %v1142
        %v1147 = vadd.f32 %v863, %v1143
        %v1148 = vadd.f32 %v864, %v1144
        %v1149 = vadd.f32 %v865, %v1145
        %v1150 = vadd.f32 %v866, %v1146
        %1151 = vset.pattern.permute.xlu0 1
        %1152 = vperm.xlu0 %1151, %v1070
        %v1153 = vpop.permute.xlu0 %1152
        %1155 = vset.pattern.permute.xlu0 1
        %1156 = vperm.xlu0 %1155, %v1071
        %v1157 = vpop.permute.xlu0 %1156
        %1159 = vset.pattern.permute.xlu0 1
        %1160 = vperm.xlu0 %1159, %v1072
        %v1161 = vpop.permute.xlu0 %1160
        %1163 = vset.pattern.permute.xlu0 1
        %1164 = vperm.xlu0 %1163, %v1073
        %v1165 = vpop.permute.xlu0 %1164
        %v1167 = vmul.f32 %v1060, %v1153
        %v1168 = vmul.f32 %v1061, %v1157
        %v1169 = vmul.f32 %v1062, %v1161
        %v1170 = vmul.f32 %v1063, %v1165
        %1171 = vset.pattern.permute.xlu0 1
        %1172 = vperm.xlu0 %1171, %v1075
        %v1173 = vpop.permute.xlu0 %1172
        %1175 = vset.pattern.permute.xlu0 1
        %1176 = vperm.xlu0 %1175, %v1076
        %v1177 = vpop.permute.xlu0 %1176
        %1179 = vset.pattern.permute.xlu0 1
        %1180 = vperm.xlu0 %1179, %v1077
        %v1181 = vpop.permute.xlu0 %1180
        %1183 = vset.pattern.permute.xlu0 1
        %1184 = vperm.xlu0 %1183, %v1078
        %v1185 = vpop.permute.xlu0 %1184
        %v1187 = vmul.f32 %v1065, %v1173
        %v1188 = vmul.f32 %v1066, %v1177
        %v1189 = vmul.f32 %v1067, %v1181
        %v1190 = vmul.f32 %v1068, %v1185
        %v1191 = vsub.f32 %v1167, %v1187
        %v1192 = vsub.f32 %v1168, %v1188
        %v1193 = vsub.f32 %v1169, %v1189
        %v1194 = vsub.f32 %v1170, %v1190
        %v1195 = vadd.f32 %v911, %v1191
        %v1196 = vadd.f32 %v912, %v1192
        %v1197 = vadd.f32 %v913, %v1193
        %v1198 = vadd.f32 %v914, %v1194
        %v1199 = vmul.f32 %v1060, %v1173
        %v1200 = vmul.f32 %v1061, %v1177
        %v1201 = vmul.f32 %v1062, %v1181
        %v1202 = vmul.f32 %v1063, %v1185
        %v1203 = vmul.f32 %v1065, %v1153
        %v1204 = vmul.f32 %v1066, %v1157
        %v1205 = vmul.f32 %v1067, %v1161
        %v1206 = vmul.f32 %v1068, %v1165
        %v1207 = vadd.f32 %v1199, %v1203
        %v1208 = vadd.f32 %v1200, %v1204
        %v1209 = vadd.f32 %v1201, %v1205
        %v1210 = vadd.f32 %v1202, %v1206
        %v1211 = vadd.f32 %v927, %v1207
        %v1212 = vadd.f32 %v928, %v1208
        %v1213 = vadd.f32 %v929, %v1209
        %v1214 = vadd.f32 %v930, %v1210
        %1215 = vset.pattern.permute.xlu0 2
        %1216 = vperm.xlu0 %1215, %v1070
        %v1217 = vpop.permute.xlu0 %1216
        %1219 = vset.pattern.permute.xlu0 2
        %1220 = vperm.xlu0 %1219, %v1071
        %v1221 = vpop.permute.xlu0 %1220
        %1223 = vset.pattern.permute.xlu0 2
        %1224 = vperm.xlu0 %1223, %v1072
        %v1225 = vpop.permute.xlu0 %1224
        %1227 = vset.pattern.permute.xlu0 2
        %1228 = vperm.xlu0 %1227, %v1073
        %v1229 = vpop.permute.xlu0 %1228
        %v1231 = vmul.f32 %v1060, %v1217
        %v1232 = vmul.f32 %v1061, %v1221
        %v1233 = vmul.f32 %v1062, %v1225
        %v1234 = vmul.f32 %v1063, %v1229
        %1235 = vset.pattern.permute.xlu0 2
        %1236 = vperm.xlu0 %1235, %v1075
        %v1237 = vpop.permute.xlu0 %1236
        %1239 = vset.pattern.permute.xlu0 2
        %1240 = vperm.xlu0 %1239, %v1076
        %v1241 = vpop.permute.xlu0 %1240
        %1243 = vset.pattern.permute.xlu0 2
        %1244 = vperm.xlu0 %1243, %v1077
        %v1245 = vpop.permute.xlu0 %1244
        %1247 = vset.pattern.permute.xlu0 2
        %1248 = vperm.xlu0 %1247, %v1078
        %v1249 = vpop.permute.xlu0 %1248
        %v1251 = vmul.f32 %v1065, %v1237
        %v1252 = vmul.f32 %v1066, %v1241
        %v1253 = vmul.f32 %v1067, %v1245
        %v1254 = vmul.f32 %v1068, %v1249
        %v1255 = vsub.f32 %v1231, %v1251
        %v1256 = vsub.f32 %v1232, %v1252
        %v1257 = vsub.f32 %v1233, %v1253
        %v1258 = vsub.f32 %v1234, %v1254
        %v1259 = vadd.f32 %v975, %v1255
        %v1260 = vadd.f32 %v976, %v1256
        %v1261 = vadd.f32 %v977, %v1257
        %v1262 = vadd.f32 %v978, %v1258
        %v1263 = vmul.f32 %v1060, %v1237
        %v1264 = vmul.f32 %v1061, %v1241
        %v1265 = vmul.f32 %v1062, %v1245
        %v1266 = vmul.f32 %v1063, %v1249
        %v1267 = vmul.f32 %v1065, %v1217
        %v1268 = vmul.f32 %v1066, %v1221
        %v1269 = vmul.f32 %v1067, %v1225
        %v1270 = vmul.f32 %v1068, %v1229
        %v1271 = vadd.f32 %v1263, %v1267
        %v1272 = vadd.f32 %v1264, %v1268
        %v1273 = vadd.f32 %v1265, %v1269
        %v1274 = vadd.f32 %v1266, %v1270
        %v1275 = vadd.f32 %v991, %v1271
        %v1276 = vadd.f32 %v992, %v1272
        %v1277 = vadd.f32 %v993, %v1273
        %v1278 = vadd.f32 %v994, %v1274
        %1279 = vset.pattern.permute.xlu0 3
        %1280 = vperm.xlu0 %1279, %v1070
        %v1281 = vpop.permute.xlu0 %1280
        %1283 = vset.pattern.permute.xlu0 3
        %1284 = vperm.xlu0 %1283, %v1071
        %v1285 = vpop.permute.xlu0 %1284
        %1287 = vset.pattern.permute.xlu0 3
        %1288 = vperm.xlu0 %1287, %v1072
        %v1289 = vpop.permute.xlu0 %1288
        %1291 = vset.pattern.permute.xlu0 3
        %1292 = vperm.xlu0 %1291, %v1073
        %v1293 = vpop.permute.xlu0 %1292
        %v1295 = vmul.f32 %v1060, %v1281
        %v1296 = vmul.f32 %v1061, %v1285
        %v1297 = vmul.f32 %v1062, %v1289
        %v1298 = vmul.f32 %v1063, %v1293
        %1299 = vset.pattern.permute.xlu0 3
        %1300 = vperm.xlu0 %1299, %v1075
        %v1301 = vpop.permute.xlu0 %1300
        %1303 = vset.pattern.permute.xlu0 3
        %1304 = vperm.xlu0 %1303, %v1076
        %v1305 = vpop.permute.xlu0 %1304
        %1307 = vset.pattern.permute.xlu0 3
        %1308 = vperm.xlu0 %1307, %v1077
        %v1309 = vpop.permute.xlu0 %1308
        %1311 = vset.pattern.permute.xlu0 3
        %1312 = vperm.xlu0 %1311, %v1078
        %v1313 = vpop.permute.xlu0 %1312
        %v1315 = vmul.f32 %v1065, %v1301
        %v1316 = vmul.f32 %v1066, %v1305
        %v1317 = vmul.f32 %v1067, %v1309
        %v1318 = vmul.f32 %v1068, %v1313
        %v1319 = vsub.f32 %v1295, %v1315
        %v1320 = vsub.f32 %v1296, %v1316
        %v1321 = vsub.f32 %v1297, %v1317
        %v1322 = vsub.f32 %v1298, %v1318
        %v1323 = vadd.f32 %v1039, %v1319
        %v1324 = vadd.f32 %v1040, %v1320
        %v1325 = vadd.f32 %v1041, %v1321
        %v1326 = vadd.f32 %v1042, %v1322
        %v1327 = vmul.f32 %v1060, %v1301
        %v1328 = vmul.f32 %v1061, %v1305
        %v1329 = vmul.f32 %v1062, %v1309
        %v1330 = vmul.f32 %v1063, %v1313
        %v1331 = vmul.f32 %v1065, %v1281
        %v1332 = vmul.f32 %v1066, %v1285
        %v1333 = vmul.f32 %v1067, %v1289
        %v1334 = vmul.f32 %v1068, %v1293
        %v1335 = vadd.f32 %v1327, %v1331
        %v1336 = vadd.f32 %v1328, %v1332
        %v1337 = vadd.f32 %v1329, %v1333
        %v1338 = vadd.f32 %v1330, %v1334
        %v1339 = vadd.f32 %v1055, %v1335
        %v1340 = vadd.f32 %v1056, %v1336
        %v1341 = vadd.f32 %v1057, %v1337
        %v1342 = vadd.f32 %v1058, %v1338
        %s1343 = scalar_lea.vmem %s464, 96 [#allocation2]
        %v1344 = vld [vmem:[%s1343] sm:$0xff]
        %v1345 = vld [vmem:[%s1343 + $0x8] sm:$0xff]
        %v1346 = vld [vmem:[%s1343 + $0x10] sm:$0xff]
        %v1347 = vld [vmem:[%s1343 + $0x18] sm:$0xff]
        %s1348 = scalar_lea.vmem %s464, 224 [#allocation2]
        %v1349 = vld [vmem:[%s1348] sm:$0xff]
        %v1350 = vld [vmem:[%s1348 + $0x8] sm:$0xff]
        %v1351 = vld [vmem:[%s1348 + $0x10] sm:$0xff]
        %v1352 = vld [vmem:[%s1348 + $0x18] sm:$0xff]
        %s1353 = scalar_lea.vmem %s471, 96 [#allocation3]
        %v1354 = vld [vmem:[%s1353] sm:$0xff]
        %v1355 = vld [vmem:[%s1353 + $0x8] sm:$0xff]
        %v1356 = vld [vmem:[%s1353 + $0x10] sm:$0xff]
        %v1357 = vld [vmem:[%s1353 + $0x18] sm:$0xff]
        %s1358 = scalar_lea.vmem %s471, 224 [#allocation3]
        %v1359 = vld [vmem:[%s1358] sm:$0xff]
        %v1360 = vld [vmem:[%s1358 + $0x8] sm:$0xff]
        %v1361 = vld [vmem:[%s1358 + $0x10] sm:$0xff]
        %v1362 = vld [vmem:[%s1358 + $0x18] sm:$0xff]
        %1364 = vset.pattern.permute.xlu0 0
        %1365 = vperm.xlu0 %1364, %v1354
        %v1366 = vpop.permute.xlu0 %1365
        %1369 = vset.pattern.permute.xlu0 0
        %1370 = vperm.xlu0 %1369, %v1355
        %v1371 = vpop.permute.xlu0 %1370
        %1374 = vset.pattern.permute.xlu0 0
        %1375 = vperm.xlu0 %1374, %v1356
        %v1376 = vpop.permute.xlu0 %1375
        %1379 = vset.pattern.permute.xlu0 0
        %1380 = vperm.xlu0 %1379, %v1357
        %v1381 = vpop.permute.xlu0 %1380
        %v1383 = vmul.f32 %v1344, %v1366
        %v1384 = vmul.f32 %v1345, %v1371
        %v1385 = vmul.f32 %v1346, %v1376
        %v1386 = vmul.f32 %v1347, %v1381
        %1388 = vset.pattern.permute.xlu0 0
        %1389 = vperm.xlu0 %1388, %v1359
        %v1390 = vpop.permute.xlu0 %1389
        %1393 = vset.pattern.permute.xlu0 0
        %1394 = vperm.xlu0 %1393, %v1360
        %v1395 = vpop.permute.xlu0 %1394
        %1398 = vset.pattern.permute.xlu0 0
        %1399 = vperm.xlu0 %1398, %v1361
        %v1400 = vpop.permute.xlu0 %1399
        %1403 = vset.pattern.permute.xlu0 0
        %1404 = vperm.xlu0 %1403, %v1362
        %v1405 = vpop.permute.xlu0 %1404
        %v1407 = vmul.f32 %v1349, %v1390
        %v1408 = vmul.f32 %v1350, %v1395
        %v1409 = vmul.f32 %v1351, %v1400
        %v1410 = vmul.f32 %v1352, %v1405
        %v1411 = vsub.f32 %v1383, %v1407
        %v1412 = vsub.f32 %v1384, %v1408
        %v1413 = vsub.f32 %v1385, %v1409
        %v1414 = vsub.f32 %v1386, %v1410
        %v1415 = vadd.f32 %v1131, %v1411
        %v1416 = vadd.f32 %v1132, %v1412
        %v1417 = vadd.f32 %v1133, %v1413
        %v1418 = vadd.f32 %v1134, %v1414
        %v1419 = vmul.f32 %v1344, %v1390
        %v1420 = vmul.f32 %v1345, %v1395
        %v1421 = vmul.f32 %v1346, %v1400
        %v1422 = vmul.f32 %v1347, %v1405
        %v1423 = vmul.f32 %v1349, %v1366
        %v1424 = vmul.f32 %v1350, %v1371
        %v1425 = vmul.f32 %v1351, %v1376
        %v1426 = vmul.f32 %v1352, %v1381
        %v1427 = vadd.f32 %v1419, %v1423
        %v1428 = vadd.f32 %v1420, %v1424
        %v1429 = vadd.f32 %v1421, %v1425
        %v1430 = vadd.f32 %v1422, %v1426
        %v1431 = vadd.f32 %v1147, %v1427
        %v1432 = vadd.f32 %v1148, %v1428
        %v1433 = vadd.f32 %v1149, %v1429
        %v1434 = vadd.f32 %v1150, %v1430
        %1435 = vset.pattern.permute.xlu0 1
        %1436 = vperm.xlu0 %1435, %v1354
        %v1437 = vpop.permute.xlu0 %1436
        %1439 = vset.pattern.permute.xlu0 1
        %1440 = vperm.xlu0 %1439, %v1355
        %v1441 = vpop.permute.xlu0 %1440
        %1443 = vset.pattern.permute.xlu0 1
        %1444 = vperm.xlu0 %1443, %v1356
        %v1445 = vpop.permute.xlu0 %1444
        %1447 = vset.pattern.permute.xlu0 1
        %1448 = vperm.xlu0 %1447, %v1357
        %v1449 = vpop.permute.xlu0 %1448
        %v1451 = vmul.f32 %v1344, %v1437
        %v1452 = vmul.f32 %v1345, %v1441
        %v1453 = vmul.f32 %v1346, %v1445
        %v1454 = vmul.f32 %v1347, %v1449
        %1455 = vset.pattern.permute.xlu0 1
        %1456 = vperm.xlu0 %1455, %v1359
        %v1457 = vpop.permute.xlu0 %1456
        %1459 = vset.pattern.permute.xlu0 1
        %1460 = vperm.xlu0 %1459, %v1360
        %v1461 = vpop.permute.xlu0 %1460
        %1463 = vset.pattern.permute.xlu0 1
        %1464 = vperm.xlu0 %1463, %v1361
        %v1465 = vpop.permute.xlu0 %1464
        %1467 = vset.pattern.permute.xlu0 1
        %1468 = vperm.xlu0 %1467, %v1362
        %v1469 = vpop.permute.xlu0 %1468
        %v1471 = vmul.f32 %v1349, %v1457
        %v1472 = vmul.f32 %v1350, %v1461
        %v1473 = vmul.f32 %v1351, %v1465
        %v1474 = vmul.f32 %v1352, %v1469
        %v1475 = vsub.f32 %v1451, %v1471
        %v1476 = vsub.f32 %v1452, %v1472
        %v1477 = vsub.f32 %v1453, %v1473
        %v1478 = vsub.f32 %v1454, %v1474
        %v1479 = vadd.f32 %v1195, %v1475
        %v1480 = vadd.f32 %v1196, %v1476
        %v1481 = vadd.f32 %v1197, %v1477
        %v1482 = vadd.f32 %v1198, %v1478
        %v1483 = vmul.f32 %v1344, %v1457
        %v1484 = vmul.f32 %v1345, %v1461
        %v1485 = vmul.f32 %v1346, %v1465
        %v1486 = vmul.f32 %v1347, %v1469
        %v1487 = vmul.f32 %v1349, %v1437
        %v1488 = vmul.f32 %v1350, %v1441
        %v1489 = vmul.f32 %v1351, %v1445
        %v1490 = vmul.f32 %v1352, %v1449
        %v1491 = vadd.f32 %v1483, %v1487
        %v1492 = vadd.f32 %v1484, %v1488
        %v1493 = vadd.f32 %v1485, %v1489
        %v1494 = vadd.f32 %v1486, %v1490
        %v1495 = vadd.f32 %v1211, %v1491
        %v1496 = vadd.f32 %v1212, %v1492
        %v1497 = vadd.f32 %v1213, %v1493
        %v1498 = vadd.f32 %v1214, %v1494
        %1499 = vset.pattern.permute.xlu0 2
        %1500 = vperm.xlu0 %1499, %v1354
        %v1501 = vpop.permute.xlu0 %1500
        %1503 = vset.pattern.permute.xlu0 2
        %1504 = vperm.xlu0 %1503, %v1355
        %v1505 = vpop.permute.xlu0 %1504
        %1507 = vset.pattern.permute.xlu0 2
        %1508 = vperm.xlu0 %1507, %v1356
        %v1509 = vpop.permute.xlu0 %1508
        %1511 = vset.pattern.permute.xlu0 2
        %1512 = vperm.xlu0 %1511, %v1357
        %v1513 = vpop.permute.xlu0 %1512
        %v1515 = vmul.f32 %v1344, %v1501
        %v1516 = vmul.f32 %v1345, %v1505
        %v1517 = vmul.f32 %v1346, %v1509
        %v1518 = vmul.f32 %v1347, %v1513
        %1519 = vset.pattern.permute.xlu0 2
        %1520 = vperm.xlu0 %1519, %v1359
        %v1521 = vpop.permute.xlu0 %1520
        %1523 = vset.pattern.permute.xlu0 2
        %1524 = vperm.xlu0 %1523, %v1360
        %v1525 = vpop.permute.xlu0 %1524
        %1527 = vset.pattern.permute.xlu0 2
        %1528 = vperm.xlu0 %1527, %v1361
        %v1529 = vpop.permute.xlu0 %1528
        %1531 = vset.pattern.permute.xlu0 2
        %1532 = vperm.xlu0 %1531, %v1362
        %v1533 = vpop.permute.xlu0 %1532
        %v1535 = vmul.f32 %v1349, %v1521
        %v1536 = vmul.f32 %v1350, %v1525
        %v1537 = vmul.f32 %v1351, %v1529
        %v1538 = vmul.f32 %v1352, %v1533
        %v1539 = vsub.f32 %v1515, %v1535
        %v1540 = vsub.f32 %v1516, %v1536
        %v1541 = vsub.f32 %v1517, %v1537
        %v1542 = vsub.f32 %v1518, %v1538
        %v1543 = vadd.f32 %v1259, %v1539
        %v1544 = vadd.f32 %v1260, %v1540
        %v1545 = vadd.f32 %v1261, %v1541
        %v1546 = vadd.f32 %v1262, %v1542
        %v1547 = vmul.f32 %v1344, %v1521
        %v1548 = vmul.f32 %v1345, %v1525
        %v1549 = vmul.f32 %v1346, %v1529
        %v1550 = vmul.f32 %v1347, %v1533
        %v1551 = vmul.f32 %v1349, %v1501
        %v1552 = vmul.f32 %v1350, %v1505
        %v1553 = vmul.f32 %v1351, %v1509
        %v1554 = vmul.f32 %v1352, %v1513
        %v1555 = vadd.f32 %v1547, %v1551
        %v1556 = vadd.f32 %v1548, %v1552
        %v1557 = vadd.f32 %v1549, %v1553
        %v1558 = vadd.f32 %v1550, %v1554
        %v1559 = vadd.f32 %v1275, %v1555
        %v1560 = vadd.f32 %v1276, %v1556
        %v1561 = vadd.f32 %v1277, %v1557
        %v1562 = vadd.f32 %v1278, %v1558
        %1563 = vset.pattern.permute.xlu0 3
        %1564 = vperm.xlu0 %1563, %v1354
        %v1565 = vpop.permute.xlu0 %1564
        %1567 = vset.pattern.permute.xlu0 3
        %1568 = vperm.xlu0 %1567, %v1355
        %v1569 = vpop.permute.xlu0 %1568
        %1571 = vset.pattern.permute.xlu0 3
        %1572 = vperm.xlu0 %1571, %v1356
        %v1573 = vpop.permute.xlu0 %1572
        %1575 = vset.pattern.permute.xlu0 3
        %1576 = vperm.xlu0 %1575, %v1357
        %v1577 = vpop.permute.xlu0 %1576
        %v1579 = vmul.f32 %v1344, %v1565
        %v1580 = vmul.f32 %v1345, %v1569
        %v1581 = vmul.f32 %v1346, %v1573
        %v1582 = vmul.f32 %v1347, %v1577
        %1583 = vset.pattern.permute.xlu0 3
        %1584 = vperm.xlu0 %1583, %v1359
        %v1585 = vpop.permute.xlu0 %1584
        %1587 = vset.pattern.permute.xlu0 3
        %1588 = vperm.xlu0 %1587, %v1360
        %v1589 = vpop.permute.xlu0 %1588
        %1591 = vset.pattern.permute.xlu0 3
        %1592 = vperm.xlu0 %1591, %v1361
        %v1593 = vpop.permute.xlu0 %1592
        %1595 = vset.pattern.permute.xlu0 3
        %1596 = vperm.xlu0 %1595, %v1362
        %v1597 = vpop.permute.xlu0 %1596
        %v1599 = vmul.f32 %v1349, %v1585
        %v1600 = vmul.f32 %v1350, %v1589
        %v1601 = vmul.f32 %v1351, %v1593
        %v1602 = vmul.f32 %v1352, %v1597
        %v1603 = vsub.f32 %v1579, %v1599
        %v1604 = vsub.f32 %v1580, %v1600
        %v1605 = vsub.f32 %v1581, %v1601
        %v1606 = vsub.f32 %v1582, %v1602
        %v1607 = vadd.f32 %v1323, %v1603
        %v1608 = vadd.f32 %v1324, %v1604
        %v1609 = vadd.f32 %v1325, %v1605
        %v1610 = vadd.f32 %v1326, %v1606
        %v1611 = vmul.f32 %v1344, %v1585
        %v1612 = vmul.f32 %v1345, %v1589
        %v1613 = vmul.f32 %v1346, %v1593
        %v1614 = vmul.f32 %v1347, %v1597
        %v1615 = vmul.f32 %v1349, %v1565
        %v1616 = vmul.f32 %v1350, %v1569
        %v1617 = vmul.f32 %v1351, %v1573
        %v1618 = vmul.f32 %v1352, %v1577
        %v1619 = vadd.f32 %v1611, %v1615
        %v1620 = vadd.f32 %v1612, %v1616
        %v1621 = vadd.f32 %v1613, %v1617
        %v1622 = vadd.f32 %v1614, %v1618
        %v1623 = vadd.f32 %v1339, %v1619
        %v1624 = vadd.f32 %v1340, %v1620
        %v1625 = vadd.f32 %v1341, %v1621
        %v1626 = vadd.f32 %v1342, %v1622
        %1627 = vst [vmem:[%s492] sm:$0xff] %v1415
        %1628 = vst [vmem:[%s492 + $0x8] sm:$0xff] %v1416
        %1629 = vst [vmem:[%s492 + $0x10] sm:$0xff] %v1417
        %1630 = vst [vmem:[%s492 + $0x18] sm:$0xff] %v1418
        %s1631 = scalar_lea.vmem %s492, 128 [#allocation4]
        %1632 = vst [vmem:[%s1631] sm:$0xff] %v1431
        %1633 = vst [vmem:[%s1631 + $0x8] sm:$0xff] %v1432
        %1634 = vst [vmem:[%s1631 + $0x10] sm:$0xff] %v1433
        %1635 = vst [vmem:[%s1631 + $0x18] sm:$0xff] %v1434
        %s1636 = scalar_lea.vmem %s492, 32 [#allocation4]
        %1637 = vst [vmem:[%s1636] sm:$0xff] %v1479
        %1638 = vst [vmem:[%s1636 + $0x8] sm:$0xff] %v1480
        %1639 = vst [vmem:[%s1636 + $0x10] sm:$0xff] %v1481
        %1640 = vst [vmem:[%s1636 + $0x18] sm:$0xff] %v1482
        %s1641 = scalar_lea.vmem %s492, 160 [#allocation4]
        %1642 = vst [vmem:[%s1641] sm:$0xff] %v1495
        %1643 = vst [vmem:[%s1641 + $0x8] sm:$0xff] %v1496
        %1644 = vst [vmem:[%s1641 + $0x10] sm:$0xff] %v1497
        %1645 = vst [vmem:[%s1641 + $0x18] sm:$0xff] %v1498
        %s1646 = scalar_lea.vmem %s492, 64 [#allocation4]
        %1647 = vst [vmem:[%s1646] sm:$0xff] %v1543
        %1648 = vst [vmem:[%s1646 + $0x8] sm:$0xff] %v1544
        %1649 = vst [vmem:[%s1646 + $0x10] sm:$0xff] %v1545
        %1650 = vst [vmem:[%s1646 + $0x18] sm:$0xff] %v1546
        %s1651 = scalar_lea.vmem %s492, 192 [#allocation4]
        %1652 = vst [vmem:[%s1651] sm:$0xff] %v1559
        %1653 = vst [vmem:[%s1651 + $0x8] sm:$0xff] %v1560
        %1654 = vst [vmem:[%s1651 + $0x10] sm:$0xff] %v1561
        %1655 = vst [vmem:[%s1651 + $0x18] sm:$0xff] %v1562
        %s1656 = scalar_lea.vmem %s492, 96 [#allocation4]
        %1657 = vst [vmem:[%s1656] sm:$0xff] %v1607
        %1658 = vst [vmem:[%s1656 + $0x8] sm:$0xff] %v1608
        %1659 = vst [vmem:[%s1656 + $0x10] sm:$0xff] %v1609
        %1660 = vst [vmem:[%s1656 + $0x18] sm:$0xff] %v1610
        %s1661 = scalar_lea.vmem %s492, 224 [#allocation4]
        %1662 = vst [vmem:[%s1661] sm:$0xff] %v1623
        %1663 = vst [vmem:[%s1661 + $0x8] sm:$0xff] %v1624
        %1664 = vst [vmem:[%s1661 + $0x10] sm:$0xff] %v1625
        %1665 = vst [vmem:[%s1661 + $0x18] sm:$0xff] %v1626
        %s1666 = sand.u32 %s89, 1
        %s1667 = sand.u32 %s89, 1
        %s1668 = smul.addr %s1667, 256
        %s1669 = scalar_lea.vmem [#allocation4], %s1668
        // Predicated region
        $region105: #{group_spectral_conv2d.1} parent=95 // pred_check
          %p1670 = pneg %p99
        $region106: #{group_spectral_conv2d.1} parent=95 // pred_check_branch
          %1672 = sbr.rel (%p1670) target = $region108
        $region107: #{group_spectral_conv2d.1} parent=95 // pred_region
          %s1673 = smul.addr %s17, 16
          %s1674 = sadd.s32 %s18, %s1673
          %s1675 = smul.addr %s1674, 8
          %s1676 = scalar_lea.vmem %s2, %s1675
          // Predicated region
          $region109: #{group_spectral_conv2d.1} parent=107 // pred_check
            _
          $region110: #{group_spectral_conv2d.1} parent=107 // pred_check_branch
            %1678 = sbr.rel (0) target = $region112
          $region111: #{group_spectral_conv2d.1} parent=107 // pred_region
            // Predicated region
            $region113: #{group_spectral_conv2d.1} parent=111 // pred_check
              _
            $region114: #{group_spectral_conv2d.1} parent=111 // pred_check_branch
              %1680 = sbr.rel (0) target = $region116
            $region115: #{group_spectral_conv2d.1} parent=111 // pred_region
              // Predicated region
              $region128: #{group_spectral_conv2d.1} parent=115 // pred_check
                _
              $region129: #{group_spectral_conv2d.1} parent=115 // pred_check_branch
                %1757 = sbr.rel (0) target = $region131
              $region130: #{group_spectral_conv2d.1} parent=115 // pred_region
                loop: start=0, step=1, limit=1
                $region132: #{group_spectral_conv2d.1} parent=130 // loop_pre_header
                  _
                $region133: #{group_spectral_conv2d.1} parent=130 // loop_header
                  %s1759 = sphi 0, %s1763
                  %p1760 = scmp.ge.s32.totalorder %s1759, 1
                  %s1764 = sphi %s1669, %s1669
                  %s1765 = sphi %s1676, %s1676
                $region134: #{group_spectral_conv2d.1} parent=130 // loop_header_branch
                  %1762 = sbr.rel (%p1760) target = $region138
                $region135: #{group_spectral_conv2d.1} parent=130 // loop_body
                  %v1766 = vld [vmem:[%s1764] sm:$0xff]
                  %1767 = vst [vmem:[%s1765] sm:$0xff] %v1766
                  %v1768 = vld [vmem:[%s1764 + $0x8] sm:$0xff]
                  %1769 = vst [vmem:[%s1765 + $0x8] sm:$0xff] %v1768
                  %v1770 = vld [vmem:[%s1764 + $0x10] sm:$0xff]
                  %1771 = vst [vmem:[%s1765 + $0x10] sm:$0xff] %v1770
                  %v1772 = vld [vmem:[%s1764 + $0x18] sm:$0xff]
                  %1773 = vst [vmem:[%s1765 + $0x18] sm:$0xff] %v1772
                  %v1774 = vld [vmem:[%s1764 + $0x20] sm:$0xff]
                  %1775 = vst [vmem:[%s1765 + $0x20] sm:$0xff] %v1774
                  %v1776 = vld [vmem:[%s1764 + $0x28] sm:$0xff]
                  %1777 = vst [vmem:[%s1765 + $0x28] sm:$0xff] %v1776
                  %v1778 = vld [vmem:[%s1764 + $0x30] sm:$0xff]
                  %1779 = vst [vmem:[%s1765 + $0x30] sm:$0xff] %v1778
                  %v1780 = vld [vmem:[%s1764 + $0x38] sm:$0xff]
                  %1781 = vst [vmem:[%s1765 + $0x38] sm:$0xff] %v1780
                  %v1782 = vld [vmem:[%s1764 + $0x40] sm:$0xff]
                  %1783 = vst [vmem:[%s1765 + $0x40] sm:$0xff] %v1782
                  %v1784 = vld [vmem:[%s1764 + $0x48] sm:$0xff]
                  %1785 = vst [vmem:[%s1765 + $0x48] sm:$0xff] %v1784
                  %v1786 = vld [vmem:[%s1764 + $0x50] sm:$0xff]
                  %1787 = vst [vmem:[%s1765 + $0x50] sm:$0xff] %v1786
                  %v1788 = vld [vmem:[%s1764 + $0x58] sm:$0xff]
                  %1789 = vst [vmem:[%s1765 + $0x58] sm:$0xff] %v1788
                  %v1790 = vld [vmem:[%s1764 + $0x60] sm:$0xff]
                  %1791 = vst [vmem:[%s1765 + $0x60] sm:$0xff] %v1790
                  %v1792 = vld [vmem:[%s1764 + $0x68] sm:$0xff]
                  %1793 = vst [vmem:[%s1765 + $0x68] sm:$0xff] %v1792
                  %v1794 = vld [vmem:[%s1764 + $0x70] sm:$0xff]
                  %1795 = vst [vmem:[%s1765 + $0x70] sm:$0xff] %v1794
                  %v1796 = vld [vmem:[%s1764 + $0x78] sm:$0xff]
                  %1797 = vst [vmem:[%s1765 + $0x78] sm:$0xff] %v1796
                  %v1798 = vld [vmem:[%s1764 + $0x80] sm:$0xff]
                  %1799 = vst [vmem:[%s1765 + $0x100] sm:$0xff] %v1798
                  %v1800 = vld [vmem:[%s1764 + $0x88] sm:$0xff]
                  %1801 = vst [vmem:[%s1765 + $0x108] sm:$0xff] %v1800
                  %v1802 = vld [vmem:[%s1764 + $0x90] sm:$0xff]
                  %1803 = vst [vmem:[%s1765 + $0x110] sm:$0xff] %v1802
                  %v1804 = vld [vmem:[%s1764 + $0x98] sm:$0xff]
                  %1805 = vst [vmem:[%s1765 + $0x118] sm:$0xff] %v1804
                  %v1806 = vld [vmem:[%s1764 + $0xa0] sm:$0xff]
                  %1807 = vst [vmem:[%s1765 + $0x120] sm:$0xff] %v1806
                  %v1808 = vld [vmem:[%s1764 + $0xa8] sm:$0xff]
                  %1809 = vst [vmem:[%s1765 + $0x128] sm:$0xff] %v1808
                  %v1810 = vld [vmem:[%s1764 + $0xb0] sm:$0xff]
                  %1811 = vst [vmem:[%s1765 + $0x130] sm:$0xff] %v1810
                  %v1812 = vld [vmem:[%s1764 + $0xb8] sm:$0xff]
                  %1813 = vst [vmem:[%s1765 + $0x138] sm:$0xff] %v1812
                  %v1814 = vld [vmem:[%s1764 + $0xc0] sm:$0xff]
                  %1815 = vst [vmem:[%s1765 + $0x140] sm:$0xff] %v1814
                  %v1816 = vld [vmem:[%s1764 + $0xc8] sm:$0xff]
                  %1817 = vst [vmem:[%s1765 + $0x148] sm:$0xff] %v1816
                  %v1818 = vld [vmem:[%s1764 + $0xd0] sm:$0xff]
                  %1819 = vst [vmem:[%s1765 + $0x150] sm:$0xff] %v1818
                  %v1820 = vld [vmem:[%s1764 + $0xd8] sm:$0xff]
                  %1821 = vst [vmem:[%s1765 + $0x158] sm:$0xff] %v1820
                  %v1822 = vld [vmem:[%s1764 + $0xe0] sm:$0xff]
                  %1823 = vst [vmem:[%s1765 + $0x160] sm:$0xff] %v1822
                  %v1824 = vld [vmem:[%s1764 + $0xe8] sm:$0xff]
                  %1825 = vst [vmem:[%s1765 + $0x168] sm:$0xff] %v1824
                  %v1826 = vld [vmem:[%s1764 + $0xf0] sm:$0xff]
                  %1827 = vst [vmem:[%s1765 + $0x170] sm:$0xff] %v1826
                  %v1828 = vld [vmem:[%s1764 + $0xf8] sm:$0xff]
                  %1829 = vst [vmem:[%s1765 + $0x178] sm:$0xff] %v1828
                $region136: #{group_spectral_conv2d.1} parent=130 // loop_footer
                  %s1763 = sadd.s32 1, %s1759
                $region137: #{group_spectral_conv2d.1} parent=130 // loop_footer_branch
                  %1758 = sbr.rel target = $region133
                $region138: #{group_spectral_conv2d.1} parent=130 // loop_exit
                  _
              $region131: #{group_spectral_conv2d.1} parent=115 // pred_fallthru
                _
              // Predicated region
              $region139: #{group_spectral_conv2d.1} parent=115 // pred_check
                _
              $region140: #{group_spectral_conv2d.1} parent=115 // pred_check_branch
                %1831 = sbr.rel target = $region142
              $region141: #{group_spectral_conv2d.1} parent=115 // pred_region
                _
              $region142: #{group_spectral_conv2d.1} parent=115 // pred_fallthru
                _
            $region116: #{group_spectral_conv2d.1} parent=111 // pred_fallthru
              _
            // Predicated region
            $region117: #{group_spectral_conv2d.1} parent=111 // pred_check
              _
            $region118: #{group_spectral_conv2d.1} parent=111 // pred_check_branch
              %1682 = sbr.rel target = $region120
            $region119: #{group_spectral_conv2d.1} parent=111 // pred_region
              loop: start=0, step=1, limit=1
              $region121: #{group_spectral_conv2d.1} parent=119 // loop_pre_header
                _
              $region122: #{group_spectral_conv2d.1} parent=119 // loop_header
                %s1685 = sphi 0, %s1689
                %p1686 = scmp.ge.s32.totalorder %s1685, 1
                %s1690 = sphi %s1669, %s1669
                %s1691 = sphi %s1676, %s1676
              $region123: #{group_spectral_conv2d.1} parent=119 // loop_header_branch
                %1688 = sbr.rel (%p1686) target = $region127
              $region124: #{group_spectral_conv2d.1} parent=119 // loop_body
                %v1692 = vld [vmem:[%s1690] sm:$0xff]
                %1693 = vst [vmem:[%s1691] sm:$0xff] %v1692
                %v1694 = vld [vmem:[%s1690 + $0x8] sm:$0xff]
                %1695 = vst [vmem:[%s1691 + $0x8] sm:$0xff] %v1694
                %v1696 = vld [vmem:[%s1690 + $0x10] sm:$0xff]
                %1697 = vst [vmem:[%s1691 + $0x10] sm:$0xff] %v1696
                %v1698 = vld [vmem:[%s1690 + $0x18] sm:$0xff]
                %1699 = vst [vmem:[%s1691 + $0x18] sm:$0xff] %v1698
                %v1700 = vld [vmem:[%s1690 + $0x20] sm:$0xff]
                %1701 = vst [vmem:[%s1691 + $0x20] sm:$0xff] %v1700
                %v1702 = vld [vmem:[%s1690 + $0x28] sm:$0xff]
                %1703 = vst [vmem:[%s1691 + $0x28] sm:$0xff] %v1702
                %v1704 = vld [vmem:[%s1690 + $0x30] sm:$0xff]
                %1705 = vst [vmem:[%s1691 + $0x30] sm:$0xff] %v1704
                %v1706 = vld [vmem:[%s1690 + $0x38] sm:$0xff]
                %1707 = vst [vmem:[%s1691 + $0x38] sm:$0xff] %v1706
                %v1708 = vld [vmem:[%s1690 + $0x40] sm:$0xff]
                %1709 = vst [vmem:[%s1691 + $0x40] sm:$0xff] %v1708
                %v1710 = vld [vmem:[%s1690 + $0x48] sm:$0xff]
                %1711 = vst [vmem:[%s1691 + $0x48] sm:$0xff] %v1710
                %v1712 = vld [vmem:[%s1690 + $0x50] sm:$0xff]
                %1713 = vst [vmem:[%s1691 + $0x50] sm:$0xff] %v1712
                %v1714 = vld [vmem:[%s1690 + $0x58] sm:$0xff]
                %1715 = vst [vmem:[%s1691 + $0x58] sm:$0xff] %v1714
                %v1716 = vld [vmem:[%s1690 + $0x60] sm:$0xff]
                %1717 = vst [vmem:[%s1691 + $0x60] sm:$0xff] %v1716
                %v1718 = vld [vmem:[%s1690 + $0x68] sm:$0xff]
                %1719 = vst [vmem:[%s1691 + $0x68] sm:$0xff] %v1718
                %v1720 = vld [vmem:[%s1690 + $0x70] sm:$0xff]
                %1721 = vst [vmem:[%s1691 + $0x70] sm:$0xff] %v1720
                %v1722 = vld [vmem:[%s1690 + $0x78] sm:$0xff]
                %1723 = vst [vmem:[%s1691 + $0x78] sm:$0xff] %v1722
                %v1724 = vld [vmem:[%s1690 + $0x80] sm:$0xff]
                %1725 = vst [vmem:[%s1691 + $0x100] sm:$0xff] %v1724
                %v1726 = vld [vmem:[%s1690 + $0x88] sm:$0xff]
                %1727 = vst [vmem:[%s1691 + $0x108] sm:$0xff] %v1726
                %v1728 = vld [vmem:[%s1690 + $0x90] sm:$0xff]
                %1729 = vst [vmem:[%s1691 + $0x110] sm:$0xff] %v1728
                %v1730 = vld [vmem:[%s1690 + $0x98] sm:$0xff]
                %1731 = vst [vmem:[%s1691 + $0x118] sm:$0xff] %v1730
                %v1732 = vld [vmem:[%s1690 + $0xa0] sm:$0xff]
                %1733 = vst [vmem:[%s1691 + $0x120] sm:$0xff] %v1732
                %v1734 = vld [vmem:[%s1690 + $0xa8] sm:$0xff]
                %1735 = vst [vmem:[%s1691 + $0x128] sm:$0xff] %v1734
                %v1736 = vld [vmem:[%s1690 + $0xb0] sm:$0xff]
                %1737 = vst [vmem:[%s1691 + $0x130] sm:$0xff] %v1736
                %v1738 = vld [vmem:[%s1690 + $0xb8] sm:$0xff]
                %1739 = vst [vmem:[%s1691 + $0x138] sm:$0xff] %v1738
                %v1740 = vld [vmem:[%s1690 + $0xc0] sm:$0xff]
                %1741 = vst [vmem:[%s1691 + $0x140] sm:$0xff] %v1740
                %v1742 = vld [vmem:[%s1690 + $0xc8] sm:$0xff]
                %1743 = vst [vmem:[%s1691 + $0x148] sm:$0xff] %v1742
                %v1744 = vld [vmem:[%s1690 + $0xd0] sm:$0xff]
                %1745 = vst [vmem:[%s1691 + $0x150] sm:$0xff] %v1744
                %v1746 = vld [vmem:[%s1690 + $0xd8] sm:$0xff]
                %1747 = vst [vmem:[%s1691 + $0x158] sm:$0xff] %v1746
                %v1748 = vld [vmem:[%s1690 + $0xe0] sm:$0xff]
                %1749 = vst [vmem:[%s1691 + $0x160] sm:$0xff] %v1748
                %v1750 = vld [vmem:[%s1690 + $0xe8] sm:$0xff]
                %1751 = vst [vmem:[%s1691 + $0x168] sm:$0xff] %v1750
                %v1752 = vld [vmem:[%s1690 + $0xf0] sm:$0xff]
                %1753 = vst [vmem:[%s1691 + $0x170] sm:$0xff] %v1752
                %v1754 = vld [vmem:[%s1690 + $0xf8] sm:$0xff]
                %1755 = vst [vmem:[%s1691 + $0x178] sm:$0xff] %v1754
              $region125: #{group_spectral_conv2d.1} parent=119 // loop_footer
                %s1689 = sadd.s32 1, %s1685
              $region126: #{group_spectral_conv2d.1} parent=119 // loop_footer_branch
                %1684 = sbr.rel target = $region122
              $region127: #{group_spectral_conv2d.1} parent=119 // loop_exit
                _
            $region120: #{group_spectral_conv2d.1} parent=111 // pred_fallthru
              _
          $region112: #{group_spectral_conv2d.1} parent=107 // pred_fallthru
            _
          %1832 = vnop
        $region108: #{group_spectral_conv2d.1} parent=95 // pred_fallthru
          _
      $region96: #{group_spectral_conv2d.1} parent=5 // pred_fallthru
        _
      %p1833 = scmp.le.s32.totalorder 2, %s8
      // Predicated region
      $region143: #{group_spectral_conv2d.1} parent=5 // pred_check
        %p1834 = pneg %p1833
      $region144: #{group_spectral_conv2d.1} parent=5 // pred_check_branch
        %1836 = sbr.rel (%p1834) target = $region146
      $region145: #{group_spectral_conv2d.1} parent=5 // pred_region
        %s1837 = ssub.s32 %s8, 2
        // Predicated region
        $region147: #{group_spectral_conv2d.1} parent=145 // pred_check
          %p1838 = pneg %p105
        $region148: #{group_spectral_conv2d.1} parent=145 // pred_check_branch
          %1840 = sbr.rel (%p1838) target = $region150
        $region149: #{group_spectral_conv2d.1} parent=145 // pred_region
          %s1841 = sand.u32 %s90, 1
          %s1842 = sand.u32 %s90, 1
          %s1843 = smul.addr %s1842, 256
          %s1844 = scalar_lea.vmem [#allocation4], %s1843
        $region150: #{group_spectral_conv2d.1} parent=145 // pred_fallthru
          _
      $region146: #{group_spectral_conv2d.1} parent=5 // pred_fallthru
        _
    $region6: #{group_spectral_conv2d.1} parent=1 // loop_footer
      %s12 = sadd.s32 1, %s8
    $region7: #{group_spectral_conv2d.1} parent=1 // loop_footer_branch
      %7 = sbr.rel target = $region3
    $region8: #{group_spectral_conv2d.1} parent=1 // loop_exit
      _

</llo_original>
